<compile_context>
chip_gen: v6e
topology: v6e:2x2x1
jax: 0.10.0
libtpu: 0.0.40
codegen_flags: <defaults>
</compile_context>

<pallas_src>
import jax
import jax.numpy as jnp
from jax.experimental import pallas as pl
from jax.experimental.pallas import tpu as pltpu

HIDDEN = 64
SEQ = 28
IN = 28
NUM_CLASSES = 10
NC_PAD = 128  # lane-dense padded class dim (multiple of 128)


# ---------------------------------------------------------------------------
# Fused kernel: recurrence over T steps + fc + softmax, for one batch tile.
# xw_ref holds the precomputed input projection (gate order [i, f, o, g],
# sigmoid-gate columns pre-scaled by 0.5, bias already folded in).
# ---------------------------------------------------------------------------
def lstm_fc_softmax_kernel(xw_ref, w_hh_ref, w_fc_ref, b_fc_ref, out_ref):
    T, bt, G = xw_ref.shape          # (28, bt, 4H)
    H = w_hh_ref.shape[0]            # 64

    w_hh = w_hh_ref[...]             # (H, 4H), loop-invariant, hoisted

    def step(t, carry):
        h, c = carry
        # one MXU issue per step; xw[t] is a dynamic index on the leading axis
        g = xw_ref[t] + jnp.dot(h, w_hh, preferred_element_type=jnp.float32)
        a = jnp.tanh(g)                              # single EUP op over (bt, 4H)
        sig = 0.5 * a[:, :3 * H] + 0.5               # sigmoid gates: i, f, o
        i_g = sig[:, 0 * H:1 * H]
        f_g = sig[:, 1 * H:2 * H]
        o_g = sig[:, 2 * H:3 * H]
        g_g = a[:, 3 * H:4 * H]                      # cell candidate (plain tanh)
        c_new = f_g * c + i_g * g_g
        h_new = o_g * jnp.tanh(c_new)
        return h_new, c_new

    h0 = jnp.zeros((bt, H), jnp.float32)
    c0 = jnp.zeros((bt, H), jnp.float32)
    # T=28 is static -> full unroll (removes loop overhead, exposes ILP to LLO)
    h_last, _ = jax.lax.fori_loop(0, T, step, (h0, c0), unroll=True)

    # fc (class dim padded to 128: padded weight cols 0, padded biases -1e30)
    logits = (jnp.dot(h_last, w_fc_ref[...], preferred_element_type=jnp.float32)
              + b_fc_ref[...])                       # (bt, 128), f32
    m = jnp.max(logits, axis=1, keepdims=True)
    e = jnp.exp(logits - m)                          # padded cols underflow to 0
    s = jnp.sum(e, axis=1, keepdims=True)
    inv = pl.reciprocal(s, approx=True)
    inv = inv * (2.0 - s * inv)                      # one Newton step -> f32 accuracy
    out_ref[...] = e * inv                           # unmasked lane-dense store


# ---------------------------------------------------------------------------
# Wrapper: gate reorder / prescale, input-projection precompute, tiling, call.
# ---------------------------------------------------------------------------
def lstm_forward(x, params, *, max_batch_tile=128):
    B = x.shape[0]
    x = x.reshape(B, SEQ, -1).astype(jnp.float32)      # matches torch x.view(B, 28, -1)
    D = x.shape[-1]
    H = HIDDEN
    G = 4 * H

    # Gate-column permutation: torch order [i, f, g, o] -> [i, f, o, g];
    # pre-scale the sigmoid gates (first 3H cols) by 0.5 (sigmoid via tanh).
    perm = jnp.concatenate([jnp.arange(0, 2 * H),
                            jnp.arange(3 * H, 4 * H),
                            jnp.arange(2 * H, 3 * H)])
    scale = jnp.concatenate([jnp.full((3 * H,), 0.5, jnp.float32),
                             jnp.ones((H,), jnp.float32)])

    w_ih_r = params["w_ih"].astype(jnp.float32).T[:, perm] * scale          # (D, 4H)
    w_hh_r = params["w_hh"].astype(jnp.float32).T[:, perm] * scale          # (H, 4H)
    b_r = (params["b_ih"] + params["b_hh"]).astype(jnp.float32)[perm] * scale  # (4H,)

    w_fc_t = jnp.zeros((H, NC_PAD), jnp.float32).at[:, :NUM_CLASSES].set(
        params["fc_w"].T.astype(jnp.float32))                                # (H, 128)
    b_fc = jnp.full((1, NC_PAD), -1e30, jnp.float32).at[0, :NUM_CLASSES].set(
        params["fc_b"].astype(jnp.float32))                                  # (1, 128)

    # Batch tiling: 8-aligned; when the batch permits, use >= 2 tiles so both
    # v7x TensorCores get work (no-op cost on single-TC v5e/v6e: per-tile
    # overhead is hidden under the 28-step recurrence).
    B8 = ((B + 7) // 8) * 8
    if B8 > 8:
        half = (((B8 + 1) // 2) + 7) // 8 * 8          # 8-aligned ceil(B8/2)
        bt = max(8, min(max_batch_tile, half))
    else:
        bt = B8
    Bp = ((B + bt - 1) // bt) * bt

    # Precompute input projection (hoisted out of the recurrence): time-major,
    # lane-dense (T, Bp, 4H) pre-gate tensor with bias folded in.
    xt = jnp.transpose(x, (1, 0, 2))                   # (T, B, D)
    if Bp != B:
        xt = jnp.pad(xt, ((0, 0), (0, Bp - B), (0, 0)))
    xw = jnp.einsum("tbd,dg->tbg", xt, w_ih_r) + b_r   # (T, Bp, 4H)

    flops = 2 * Bp * SEQ * H * G + 2 * Bp * H * NC_PAD
    transcendentals = Bp * SEQ * (G + H) + Bp * NC_PAD
    bytes_accessed = 4 * (Bp * SEQ * G + H * G + (H + 1) * NC_PAD + Bp * NC_PAD)

    out = pl.pallas_call(
        lstm_fc_softmax_kernel,
        out_shape=jax.ShapeDtypeStruct((Bp, NC_PAD), jnp.float32),
        grid=(Bp // bt,),
        in_specs=[
            pl.BlockSpec((SEQ, bt, G), lambda i: (0, i, 0)),   # pre-gates, pipelined over batch
            pl.BlockSpec((H, G), lambda i: (0, 0)),            # w_hh: VMEM-resident
            pl.BlockSpec((H, NC_PAD), lambda i: (0, 0)),       # fc weight
            pl.BlockSpec((1, NC_PAD), lambda i: (0, 0)),       # fc bias (padded)
        ],
        out_specs=pl.BlockSpec((bt, NC_PAD), lambda i: (i, 0)),
        compiler_params=pltpu.CompilerParams(
            dimension_semantics=("parallel",)),
        cost_estimate=pl.CostEstimate(
            flops=flops, transcendentals=transcendentals,
            bytes_accessed=bytes_accessed),
    )(xw, w_hh_r, w_fc_t, b_fc)

    return out[:B, :NUM_CLASSES]


# ---------------------------------------------------------------------------
# Pure-JAX reference (torch gate order / math, via lax.scan) for correctness.
# ---------------------------------------------------------------------------
def lstm_reference(x, params):
    B = x.shape[0]
    x = x.reshape(B, SEQ, -1).astype(jnp.float32)
    H = HIDDEN
    w_ih = params["w_ih"].astype(jnp.float32)
    w_hh = params["w_hh"].astype(jnp.float32)
    b = (params["b_ih"] + params["b_hh"]).astype(jnp.float32)

    def step(carry, x_t):
        h, c = carry
        g = x_t @ w_ih.T + h @ w_hh.T + b
        i = jax.nn.sigmoid(g[:, :H])
        f = jax.nn.sigmoid(g[:, H:2 * H])
        gg = jnp.tanh(g[:, 2 * H:3 * H])
        o = jax.nn.sigmoid(g[:, 3 * H:])
        c = f * c + i * gg
        h = o * jnp.tanh(c)
        return (h, c), None

    h0 = jnp.zeros((B, H), jnp.float32)
    c0 = jnp.zeros((B, H), jnp.float32)
    (h, _), _ = jax.lax.scan(step, (h0, c0), jnp.swapaxes(x, 0, 1))
    logits = h @ params["fc_w"].T + params["fc_b"]
    return jax.nn.softmax(logits, axis=1)


if __name__ == "__main__":
    key = jax.random.PRNGKey(0)
    ks = jax.random.split(key, 8)
    H = HIDDEN
    params = {
        "w_ih": 0.10 * jax.random.normal(ks[1], (4 * H, IN), jnp.float32),   # weight_ih_l0
        "w_hh": 0.10 * jax.random.normal(ks[2], (4 * H, H), jnp.float32),    # weight_hh_l0
        "b_ih": 0.10 * jax.random.normal(ks[3], (4 * H,), jnp.float32),
        "b_hh": 0.10 * jax.random.normal(ks[4], (4 * H,), jnp.float32),
        "fc_w": 0.10 * jax.random.normal(ks[5], (NUM_CLASSES, H), jnp.float32),
        "fc_b": 0.10 * jax.random.normal(ks[6], (NUM_CLASSES,), jnp.float32),
    }

    # MNIST-style inputs; forward views them as (B, 28, 28) like the torch module.
    x_small = jax.random.normal(ks[0], (2, 1, 28, 28), dtype=jnp.float32)   # single tile
    x_multi = jax.random.normal(ks[7], (20, 1, 28, 28), dtype=jnp.float32)  # multi-tile + padding

    fwd = jax.jit(lstm_forward)
    ref = jax.jit(lstm_reference)

    for x in (x_small, x_multi):
        out = jax.block_until_ready(fwd(x, params))
        expect = jax.block_until_ready(ref(x, params))
        assert out.shape == (x.shape[0], NUM_CLASSES)
        assert bool(jnp.all(jnp.isfinite(out)))
        assert jnp.allclose(jnp.sum(out, axis=1), 1.0, atol=1e-4)
        # Both paths are f32; slack covers MXU/XLA f32 matmul pass-count
        # differences accumulated over the 28-step recurrence.
        assert jnp.allclose(out, expect, atol=5e-3, rtol=5e-3)

    print("KERNEL_OK")
</pallas_src>

<mosaic_0001>
module attributes {stable_mosaic.version = 11 : i64} {
  func.func @lstm_fc_softmax_kernel(%arg0: i32, %arg1: memref<28x8x256xf32, #tpu.memory_space<vmem>>, %arg2: memref<64x256xf32, #tpu.memory_space<vmem>>, %arg3: memref<64x128xf32, #tpu.memory_space<vmem>>, %arg4: memref<1x128xf32, #tpu.memory_space<vmem>>, %arg5: memref<8x128xf32, #tpu.memory_space<vmem>>) attributes {dimension_semantics = [#tpu.dimension_semantics<parallel>], iteration_bounds = array<i64: 1>, scalar_prefetch = 0 : i64, scratch_operands = 0 : i64, tpu.core_type = #tpu.core_type<tc>, window_params = [{transform_indices = @transform_0, window_bounds = array<i64: 28, 8, 256>}, {pipeline_mode = #tpu.pipeline_mode<synchronous>, transform_indices = @transform_1, window_bounds = array<i64: 64, 256>}, {pipeline_mode = #tpu.pipeline_mode<synchronous>, transform_indices = @transform_2, window_bounds = array<i64: 64, 128>}, {pipeline_mode = #tpu.pipeline_mode<synchronous>, transform_indices = @transform_3, window_bounds = array<i64: 1, 128>}, {transform_indices = @transform_4, window_bounds = array<i64: 8, 128>}]} {
    %c0 = arith.constant 0 : index
    %c0_0 = arith.constant 0 : index
    %0 = vector.load %arg2[%c0, %c0_0] : memref<64x256xf32, #tpu.memory_space<vmem>>, vector<64x256xf32>
    %cst = arith.constant 0.000000e+00 : f32
    %1 = vector.broadcast %cst : f32 to vector<8x64xf32>
    %cst_1 = arith.constant 0.000000e+00 : f32
    %2 = vector.broadcast %cst_1 : f32 to vector<8x64xf32>
    %c0_i32 = arith.constant 0 : i32
    %3 = arith.index_cast %c0_i32 : i32 to index
    %c0_2 = arith.constant 0 : index
    %c0_3 = arith.constant 0 : index
    %4 = vector.load %arg1[%3, %c0_2, %c0_3] : memref<28x8x256xf32, #tpu.memory_space<vmem>>, vector<1x8x256xf32>
    %5 = vector.shape_cast %4 : vector<1x8x256xf32> to vector<8x256xf32>
    %cst_4 = arith.constant dense<0.000000e+00> : vector<8x256xf32>
    %6 = tpu.matmul %1, %0, %cst_4 {dimension_numbers = #tpu.dot_dimension_numbers<[1], [0], [0], [1], [0, 0, 1, 1], [], []>} : vector<8x64xf32>, vector<64x256xf32>, vector<8x256xf32> -> vector<8x256xf32>
    %7 = arith.addf %5, %6 : vector<8x256xf32>
    %8 = math.tanh %7 : vector<8x256xf32>
    %9 = vector.extract_strided_slice %8 {offsets = [0, 0], sizes = [8, 192], strides = [1, 1]} : vector<8x256xf32> to vector<8x192xf32>
    %cst_5 = arith.constant 5.000000e-01 : f32
    %10 = vector.broadcast %cst_5 : f32 to vector<8x192xf32>
    %11 = arith.mulf %10, %9 : vector<8x192xf32>
    %cst_6 = arith.constant 5.000000e-01 : f32
    %12 = vector.broadcast %cst_6 : f32 to vector<8x192xf32>
    %13 = arith.addf %11, %12 : vector<8x192xf32>
    %14 = vector.extract_strided_slice %13 {offsets = [0, 0], sizes = [8, 64], strides = [1, 1]} : vector<8x192xf32> to vector<8x64xf32>
    %15 = vector.extract_strided_slice %13 {offsets = [0, 64], sizes = [8, 64], strides = [1, 1]} : vector<8x192xf32> to vector<8x64xf32>
    %16 = vector.extract_strided_slice %13 {offsets = [0, 128], sizes = [8, 64], strides = [1, 1]} : vector<8x192xf32> to vector<8x64xf32>
    %17 = vector.extract_strided_slice %8 {offsets = [0, 192], sizes = [8, 64], strides = [1, 1]} : vector<8x256xf32> to vector<8x64xf32>
    %18 = arith.mulf %15, %2 : vector<8x64xf32>
    %19 = arith.mulf %14, %17 : vector<8x64xf32>
    %20 = arith.addf %18, %19 : vector<8x64xf32>
    %21 = math.tanh %20 : vector<8x64xf32>
    %22 = arith.mulf %16, %21 : vector<8x64xf32>
    %c1_i32 = arith.constant 1 : i32
    %23 = arith.index_cast %c1_i32 : i32 to index
    %c0_7 = arith.constant 0 : index
    %c0_8 = arith.constant 0 : index
    %24 = vector.load %arg1[%23, %c0_7, %c0_8] : memref<28x8x256xf32, #tpu.memory_space<vmem>>, vector<1x8x256xf32>
    %25 = vector.shape_cast %24 : vector<1x8x256xf32> to vector<8x256xf32>
    %cst_9 = arith.constant dense<0.000000e+00> : vector<8x256xf32>
    %26 = tpu.matmul %22, %0, %cst_9 {dimension_numbers = #tpu.dot_dimension_numbers<[1], [0], [0], [1], [0, 0, 1, 1], [], []>} : vector<8x64xf32>, vector<64x256xf32>, vector<8x256xf32> -> vector<8x256xf32>
    %27 = arith.addf %25, %26 : vector<8x256xf32>
    %28 = math.tanh %27 : vector<8x256xf32>
    %29 = vector.extract_strided_slice %28 {offsets = [0, 0], sizes = [8, 192], strides = [1, 1]} : vector<8x256xf32> to vector<8x192xf32>
    %cst_10 = arith.constant 5.000000e-01 : f32
    %30 = vector.broadcast %cst_10 : f32 to vector<8x192xf32>
    %31 = arith.mulf %30, %29 : vector<8x192xf32>
    %cst_11 = arith.constant 5.000000e-01 : f32
    %32 = vector.broadcast %cst_11 : f32 to vector<8x192xf32>
    %33 = arith.addf %31, %32 : vector<8x192xf32>
    %34 = vector.extract_strided_slice %33 {offsets = [0, 0], sizes = [8, 64], strides = [1, 1]} : vector<8x192xf32> to vector<8x64xf32>
    %35 = vector.extract_strided_slice %33 {offsets = [0, 64], sizes = [8, 64], strides = [1, 1]} : vector<8x192xf32> to vector<8x64xf32>
    %36 = vector.extract_strided_slice %33 {offsets = [0, 128], sizes = [8, 64], strides = [1, 1]} : vector<8x192xf32> to vector<8x64xf32>
    %37 = vector.extract_strided_slice %28 {offsets = [0, 192], sizes = [8, 64], strides = [1, 1]} : vector<8x256xf32> to vector<8x64xf32>
    %38 = arith.mulf %35, %20 : vector<8x64xf32>
    %39 = arith.mulf %34, %37 : vector<8x64xf32>
    %40 = arith.addf %38, %39 : vector<8x64xf32>
    %41 = math.tanh %40 : vector<8x64xf32>
    %42 = arith.mulf %36, %41 : vector<8x64xf32>
    %c2_i32 = arith.constant 2 : i32
    %43 = arith.index_cast %c2_i32 : i32 to index
    %c0_12 = arith.constant 0 : index
    %c0_13 = arith.constant 0 : index
    %44 = vector.load %arg1[%43, %c0_12, %c0_13] : memref<28x8x256xf32, #tpu.memory_space<vmem>>, vector<1x8x256xf32>
    %45 = vector.shape_cast %44 : vector<1x8x256xf32> to vector<8x256xf32>
    %cst_14 = arith.constant dense<0.000000e+00> : vector<8x256xf32>
    %46 = tpu.matmul %42, %0, %cst_14 {dimension_numbers = #tpu.dot_dimension_numbers<[1], [0], [0], [1], [0, 0, 1, 1], [], []>} : vector<8x64xf32>, vector<64x256xf32>, vector<8x256xf32> -> vector<8x256xf32>
    %47 = arith.addf %45, %46 : vector<8x256xf32>
    %48 = math.tanh %47 : vector<8x256xf32>
    %49 = vector.extract_strided_slice %48 {offsets = [0, 0], sizes = [8, 192], strides = [1, 1]} : vector<8x256xf32> to vector<8x192xf32>
    %cst_15 = arith.constant 5.000000e-01 : f32
    %50 = vector.broadcast %cst_15 : f32 to vector<8x192xf32>
    %51 = arith.mulf %50, %49 : vector<8x192xf32>
    %cst_16 = arith.constant 5.000000e-01 : f32
    %52 = vector.broadcast %cst_16 : f32 to vector<8x192xf32>
    %53 = arith.addf %51, %52 : vector<8x192xf32>
    %54 = vector.extract_strided_slice %53 {offsets = [0, 0], sizes = [8, 64], strides = [1, 1]} : vector<8x192xf32> to vector<8x64xf32>
    %55 = vector.extract_strided_slice %53 {offsets = [0, 64], sizes = [8, 64], strides = [1, 1]} : vector<8x192xf32> to vector<8x64xf32>
    %56 = vector.extract_strided_slice %53 {offsets = [0, 128], sizes = [8, 64], strides = [1, 1]} : vector<8x192xf32> to vector<8x64xf32>
    %57 = vector.extract_strided_slice %48 {offsets = [0, 192], sizes = [8, 64], strides = [1, 1]} : vector<8x256xf32> to vector<8x64xf32>
    %58 = arith.mulf %55, %40 : vector<8x64xf32>
    %59 = arith.mulf %54, %57 : vector<8x64xf32>
    %60 = arith.addf %58, %59 : vector<8x64xf32>
    %61 = math.tanh %60 : vector<8x64xf32>
    %62 = arith.mulf %56, %61 : vector<8x64xf32>
    %c3_i32 = arith.constant 3 : i32
    %63 = arith.index_cast %c3_i32 : i32 to index
    %c0_17 = arith.constant 0 : index
    %c0_18 = arith.constant 0 : index
    %64 = vector.load %arg1[%63, %c0_17, %c0_18] : memref<28x8x256xf32, #tpu.memory_space<vmem>>, vector<1x8x256xf32>
    %65 = vector.shape_cast %64 : vector<1x8x256xf32> to vector<8x256xf32>
    %cst_19 = arith.constant dense<0.000000e+00> : vector<8x256xf32>
    %66 = tpu.matmul %62, %0, %cst_19 {dimension_numbers = #tpu.dot_dimension_numbers<[1], [0], [0], [1], [0, 0, 1, 1], [], []>} : vector<8x64xf32>, vector<64x256xf32>, vector<8x256xf32> -> vector<8x256xf32>
    %67 = arith.addf %65, %66 : vector<8x256xf32>
    %68 = math.tanh %67 : vector<8x256xf32>
    %69 = vector.extract_strided_slice %68 {offsets = [0, 0], sizes = [8, 192], strides = [1, 1]} : vector<8x256xf32> to vector<8x192xf32>
    %cst_20 = arith.constant 5.000000e-01 : f32
    %70 = vector.broadcast %cst_20 : f32 to vector<8x192xf32>
    %71 = arith.mulf %70, %69 : vector<8x192xf32>
    %cst_21 = arith.constant 5.000000e-01 : f32
    %72 = vector.broadcast %cst_21 : f32 to vector<8x192xf32>
    %73 = arith.addf %71, %72 : vector<8x192xf32>
    %74 = vector.extract_strided_slice %73 {offsets = [0, 0], sizes = [8, 64], strides = [1, 1]} : vector<8x192xf32> to vector<8x64xf32>
    %75 = vector.extract_strided_slice %73 {offsets = [0, 64], sizes = [8, 64], strides = [1, 1]} : vector<8x192xf32> to vector<8x64xf32>
    %76 = vector.extract_strided_slice %73 {offsets = [0, 128], sizes = [8, 64], strides = [1, 1]} : vector<8x192xf32> to vector<8x64xf32>
    %77 = vector.extract_strided_slice %68 {offsets = [0, 192], sizes = [8, 64], strides = [1, 1]} : vector<8x256xf32> to vector<8x64xf32>
    %78 = arith.mulf %75, %60 : vector<8x64xf32>
    %79 = arith.mulf %74, %77 : vector<8x64xf32>
    %80 = arith.addf %78, %79 : vector<8x64xf32>
    %81 = math.tanh %80 : vector<8x64xf32>
    %82 = arith.mulf %76, %81 : vector<8x64xf32>
    %c4_i32 = arith.constant 4 : i32
    %83 = arith.index_cast %c4_i32 : i32 to index
    %c0_22 = arith.constant 0 : index
    %c0_23 = arith.constant 0 : index
    %84 = vector.load %arg1[%83, %c0_22, %c0_23] : memref<28x8x256xf32, #tpu.memory_space<vmem>>, vector<1x8x256xf32>
    %85 = vector.shape_cast %84 : vector<1x8x256xf32> to vector<8x256xf32>
    %cst_24 = arith.constant dense<0.000000e+00> : vector<8x256xf32>
    %86 = tpu.matmul %82, %0, %cst_24 {dimension_numbers = #tpu.dot_dimension_numbers<[1], [0], [0], [1], [0, 0, 1, 1], [], []>} : vector<8x64xf32>, vector<64x256xf32>, vector<8x256xf32> -> vector<8x256xf32>
    %87 = arith.addf %85, %86 : vector<8x256xf32>
    %88 = math.tanh %87 : vector<8x256xf32>
    %89 = vector.extract_strided_slice %88 {offsets = [0, 0], sizes = [8, 192], strides = [1, 1]} : vector<8x256xf32> to vector<8x192xf32>
    %cst_25 = arith.constant 5.000000e-01 : f32
    %90 = vector.broadcast %cst_25 : f32 to vector<8x192xf32>
    %91 = arith.mulf %90, %89 : vector<8x192xf32>
    %cst_26 = arith.constant 5.000000e-01 : f32
    %92 = vector.broadcast %cst_26 : f32 to vector<8x192xf32>
    %93 = arith.addf %91, %92 : vector<8x192xf32>
    %94 = vector.extract_strided_slice %93 {offsets = [0, 0], sizes = [8, 64], strides = [1, 1]} : vector<8x192xf32> to vector<8x64xf32>
    %95 = vector.extract_strided_slice %93 {offsets = [0, 64], sizes = [8, 64], strides = [1, 1]} : vector<8x192xf32> to vector<8x64xf32>
    %96 = vector.extract_strided_slice %93 {offsets = [0, 128], sizes = [8, 64], strides = [1, 1]} : vector<8x192xf32> to vector<8x64xf32>
    %97 = vector.extract_strided_slice %88 {offsets = [0, 192], sizes = [8, 64], strides = [1, 1]} : vector<8x256xf32> to vector<8x64xf32>
    %98 = arith.mulf %95, %80 : vector<8x64xf32>
    %99 = arith.mulf %94, %97 : vector<8x64xf32>
    %100 = arith.addf %98, %99 : vector<8x64xf32>
    %101 = math.tanh %100 : vector<8x64xf32>
    %102 = arith.mulf %96, %101 : vector<8x64xf32>
    %c5_i32 = arith.constant 5 : i32
    %103 = arith.index_cast %c5_i32 : i32 to index
    %c0_27 = arith.constant 0 : index
    %c0_28 = arith.constant 0 : index
    %104 = vector.load %arg1[%103, %c0_27, %c0_28] : memref<28x8x256xf32, #tpu.memory_space<vmem>>, vector<1x8x256xf32>
    %105 = vector.shape_cast %104 : vector<1x8x256xf32> to vector<8x256xf32>
    %cst_29 = arith.constant dense<0.000000e+00> : vector<8x256xf32>
    %106 = tpu.matmul %102, %0, %cst_29 {dimension_numbers = #tpu.dot_dimension_numbers<[1], [0], [0], [1], [0, 0, 1, 1], [], []>} : vector<8x64xf32>, vector<64x256xf32>, vector<8x256xf32> -> vector<8x256xf32>
    %107 = arith.addf %105, %106 : vector<8x256xf32>
    %108 = math.tanh %107 : vector<8x256xf32>
    %109 = vector.extract_strided_slice %108 {offsets = [0, 0], sizes = [8, 192], strides = [1, 1]} : vector<8x256xf32> to vector<8x192xf32>
    %cst_30 = arith.constant 5.000000e-01 : f32
    %110 = vector.broadcast %cst_30 : f32 to vector<8x192xf32>
    %111 = arith.mulf %110, %109 : vector<8x192xf32>
    %cst_31 = arith.constant 5.000000e-01 : f32
    %112 = vector.broadcast %cst_31 : f32 to vector<8x192xf32>
    %113 = arith.addf %111, %112 : vector<8x192xf32>
    %114 = vector.extract_strided_slice %113 {offsets = [0, 0], sizes = [8, 64], strides = [1, 1]} : vector<8x192xf32> to vector<8x64xf32>
    %115 = vector.extract_strided_slice %113 {offsets = [0, 64], sizes = [8, 64], strides = [1, 1]} : vector<8x192xf32> to vector<8x64xf32>
    %116 = vector.extract_strided_slice %113 {offsets = [0, 128], sizes = [8, 64], strides = [1, 1]} : vector<8x192xf32> to vector<8x64xf32>
    %117 = vector.extract_strided_slice %108 {offsets = [0, 192], sizes = [8, 64], strides = [1, 1]} : vector<8x256xf32> to vector<8x64xf32>
    %118 = arith.mulf %115, %100 : vector<8x64xf32>
    %119 = arith.mulf %114, %117 : vector<8x64xf32>
    %120 = arith.addf %118, %119 : vector<8x64xf32>
    %121 = math.tanh %120 : vector<8x64xf32>
    %122 = arith.mulf %116, %121 : vector<8x64xf32>
    %c6_i32 = arith.constant 6 : i32
    %123 = arith.index_cast %c6_i32 : i32 to index
    %c0_32 = arith.constant 0 : index
    %c0_33 = arith.constant 0 : index
    %124 = vector.load %arg1[%123, %c0_32, %c0_33] : memref<28x8x256xf32, #tpu.memory_space<vmem>>, vector<1x8x256xf32>
    %125 = vector.shape_cast %124 : vector<1x8x256xf32> to vector<8x256xf32>
    %cst_34 = arith.constant dense<0.000000e+00> : vector<8x256xf32>
    %126 = tpu.matmul %122, %0, %cst_34 {dimension_numbers = #tpu.dot_dimension_numbers<[1], [0], [0], [1], [0, 0, 1, 1], [], []>} : vector<8x64xf32>, vector<64x256xf32>, vector<8x256xf32> -> vector<8x256xf32>
    %127 = arith.addf %125, %126 : vector<8x256xf32>
    %128 = math.tanh %127 : vector<8x256xf32>
    %129 = vector.extract_strided_slice %128 {offsets = [0, 0], sizes = [8, 192], strides = [1, 1]} : vector<8x256xf32> to vector<8x192xf32>
    %cst_35 = arith.constant 5.000000e-01 : f32
    %130 = vector.broadcast %cst_35 : f32 to vector<8x192xf32>
    %131 = arith.mulf %130, %129 : vector<8x192xf32>
    %cst_36 = arith.constant 5.000000e-01 : f32
    %132 = vector.broadcast %cst_36 : f32 to vector<8x192xf32>
    %133 = arith.addf %131, %132 : vector<8x192xf32>
    %134 = vector.extract_strided_slice %133 {offsets = [0, 0], sizes = [8, 64], strides = [1, 1]} : vector<8x192xf32> to vector<8x64xf32>
    %135 = vector.extract_strided_slice %133 {offsets = [0, 64], sizes = [8, 64], strides = [1, 1]} : vector<8x192xf32> to vector<8x64xf32>
    %136 = vector.extract_strided_slice %133 {offsets = [0, 128], sizes = [8, 64], strides = [1, 1]} : vector<8x192xf32> to vector<8x64xf32>
    %137 = vector.extract_strided_slice %128 {offsets = [0, 192], sizes = [8, 64], strides = [1, 1]} : vector<8x256xf32> to vector<8x64xf32>
    %138 = arith.mulf %135, %120 : vector<8x64xf32>
    %139 = arith.mulf %134, %137 : vector<8x64xf32>
    %140 = arith.addf %138, %139 : vector<8x64xf32>
    %141 = math.tanh %140 : vector<8x64xf32>
    %142 = arith.mulf %136, %141 : vector<8x64xf32>
    %c7_i32 = arith.constant 7 : i32
    %143 = arith.index_cast %c7_i32 : i32 to index
    %c0_37 = arith.constant 0 : index
    %c0_38 = arith.constant 0 : index
    %144 = vector.load %arg1[%143, %c0_37, %c0_38] : memref<28x8x256xf32, #tpu.memory_space<vmem>>, vector<1x8x256xf32>
    %145 = vector.shape_cast %144 : vector<1x8x256xf32> to vector<8x256xf32>
    %cst_39 = arith.constant dense<0.000000e+00> : vector<8x256xf32>
    %146 = tpu.matmul %142, %0, %cst_39 {dimension_numbers = #tpu.dot_dimension_numbers<[1], [0], [0], [1], [0, 0, 1, 1], [], []>} : vector<8x64xf32>, vector<64x256xf32>, vector<8x256xf32> -> vector<8x256xf32>
    %147 = arith.addf %145, %146 : vector<8x256xf32>
    %148 = math.tanh %147 : vector<8x256xf32>
    %149 = vector.extract_strided_slice %148 {offsets = [0, 0], sizes = [8, 192], strides = [1, 1]} : vector<8x256xf32> to vector<8x192xf32>
    %cst_40 = arith.constant 5.000000e-01 : f32
    %150 = vector.broadcast %cst_40 : f32 to vector<8x192xf32>
    %151 = arith.mulf %150, %149 : vector<8x192xf32>
    %cst_41 = arith.constant 5.000000e-01 : f32
    %152 = vector.broadcast %cst_41 : f32 to vector<8x192xf32>
    %153 = arith.addf %151, %152 : vector<8x192xf32>
    %154 = vector.extract_strided_slice %153 {offsets = [0, 0], sizes = [8, 64], strides = [1, 1]} : vector<8x192xf32> to vector<8x64xf32>
    %155 = vector.extract_strided_slice %153 {offsets = [0, 64], sizes = [8, 64], strides = [1, 1]} : vector<8x192xf32> to vector<8x64xf32>
    %156 = vector.extract_strided_slice %153 {offsets = [0, 128], sizes = [8, 64], strides = [1, 1]} : vector<8x192xf32> to vector<8x64xf32>
    %157 = vector.extract_strided_slice %148 {offsets = [0, 192], sizes = [8, 64], strides = [1, 1]} : vector<8x256xf32> to vector<8x64xf32>
    %158 = arith.mulf %155, %140 : vector<8x64xf32>
    %159 = arith.mulf %154, %157 : vector<8x64xf32>
    %160 = arith.addf %158, %159 : vector<8x64xf32>
    %161 = math.tanh %160 : vector<8x64xf32>
    %162 = arith.mulf %156, %161 : vector<8x64xf32>
    %c8_i32 = arith.constant 8 : i32
    %163 = arith.index_cast %c8_i32 : i32 to index
    %c0_42 = arith.constant 0 : index
    %c0_43 = arith.constant 0 : index
    %164 = vector.load %arg1[%163, %c0_42, %c0_43] : memref<28x8x256xf32, #tpu.memory_space<vmem>>, vector<1x8x256xf32>
    %165 = vector.shape_cast %164 : vector<1x8x256xf32> to vector<8x256xf32>
    %cst_44 = arith.constant dense<0.000000e+00> : vector<8x256xf32>
    %166 = tpu.matmul %162, %0, %cst_44 {dimension_numbers = #tpu.dot_dimension_numbers<[1], [0], [0], [1], [0, 0, 1, 1], [], []>} : vector<8x64xf32>, vector<64x256xf32>, vector<8x256xf32> -> vector<8x256xf32>
    %167 = arith.addf %165, %166 : vector<8x256xf32>
    %168 = math.tanh %167 : vector<8x256xf32>
    %169 = vector.extract_strided_slice %168 {offsets = [0, 0], sizes = [8, 192], strides = [1, 1]} : vector<8x256xf32> to vector<8x192xf32>
    %cst_45 = arith.constant 5.000000e-01 : f32
    %170 = vector.broadcast %cst_45 : f32 to vector<8x192xf32>
    %171 = arith.mulf %170, %169 : vector<8x192xf32>
    %cst_46 = arith.constant 5.000000e-01 : f32
    %172 = vector.broadcast %cst_46 : f32 to vector<8x192xf32>
    %173 = arith.addf %171, %172 : vector<8x192xf32>
    %174 = vector.extract_strided_slice %173 {offsets = [0, 0], sizes = [8, 64], strides = [1, 1]} : vector<8x192xf32> to vector<8x64xf32>
    %175 = vector.extract_strided_slice %173 {offsets = [0, 64], sizes = [8, 64], strides = [1, 1]} : vector<8x192xf32> to vector<8x64xf32>
    %176 = vector.extract_strided_slice %173 {offsets = [0, 128], sizes = [8, 64], strides = [1, 1]} : vector<8x192xf32> to vector<8x64xf32>
    %177 = vector.extract_strided_slice %168 {offsets = [0, 192], sizes = [8, 64], strides = [1, 1]} : vector<8x256xf32> to vector<8x64xf32>
    %178 = arith.mulf %175, %160 : vector<8x64xf32>
    %179 = arith.mulf %174, %177 : vector<8x64xf32>
    %180 = arith.addf %178, %179 : vector<8x64xf32>
    %181 = math.tanh %180 : vector<8x64xf32>
    %182 = arith.mulf %176, %181 : vector<8x64xf32>
    %c9_i32 = arith.constant 9 : i32
    %183 = arith.index_cast %c9_i32 : i32 to index
    %c0_47 = arith.constant 0 : index
    %c0_48 = arith.constant 0 : index
    %184 = vector.load %arg1[%183, %c0_47, %c0_48] : memref<28x8x256xf32, #tpu.memory_space<vmem>>, vector<1x8x256xf32>
    %185 = vector.shape_cast %184 : vector<1x8x256xf32> to vector<8x256xf32>
    %cst_49 = arith.constant dense<0.000000e+00> : vector<8x256xf32>
    %186 = tpu.matmul %182, %0, %cst_49 {dimension_numbers = #tpu.dot_dimension_numbers<[1], [0], [0], [1], [0, 0, 1, 1], [], []>} : vector<8x64xf32>, vector<64x256xf32>, vector<8x256xf32> -> vector<8x256xf32>
    %187 = arith.addf %185, %186 : vector<8x256xf32>
    %188 = math.tanh %187 : vector<8x256xf32>
    %189 = vector.extract_strided_slice %188 {offsets = [0, 0], sizes = [8, 192], strides = [1, 1]} : vector<8x256xf32> to vector<8x192xf32>
    %cst_50 = arith.constant 5.000000e-01 : f32
    %190 = vector.broadcast %cst_50 : f32 to vector<8x192xf32>
    %191 = arith.mulf %190, %189 : vector<8x192xf32>
    %cst_51 = arith.constant 5.000000e-01 : f32
    %192 = vector.broadcast %cst_51 : f32 to vector<8x192xf32>
    %193 = arith.addf %191, %192 : vector<8x192xf32>
    %194 = vector.extract_strided_slice %193 {offsets = [0, 0], sizes = [8, 64], strides = [1, 1]} : vector<8x192xf32> to vector<8x64xf32>
    %195 = vector.extract_strided_slice %193 {offsets = [0, 64], sizes = [8, 64], strides = [1, 1]} : vector<8x192xf32> to vector<8x64xf32>
    %196 = vector.extract_strided_slice %193 {offsets = [0, 128], sizes = [8, 64], strides = [1, 1]} : vector<8x192xf32> to vector<8x64xf32>
    %197 = vector.extract_strided_slice %188 {offsets = [0, 192], sizes = [8, 64], strides = [1, 1]} : vector<8x256xf32> to vector<8x64xf32>
    %198 = arith.mulf %195, %180 : vector<8x64xf32>
    %199 = arith.mulf %194, %197 : vector<8x64xf32>
    %200 = arith.addf %198, %199 : vector<8x64xf32>
    %201 = math.tanh %200 : vector<8x64xf32>
    %202 = arith.mulf %196, %201 : vector<8x64xf32>
    %c10_i32 = arith.constant 10 : i32
    %203 = arith.index_cast %c10_i32 : i32 to index
    %c0_52 = arith.constant 0 : index
    %c0_53 = arith.constant 0 : index
    %204 = vector.load %arg1[%203, %c0_52, %c0_53] : memref<28x8x256xf32, #tpu.memory_space<vmem>>, vector<1x8x256xf32>
    %205 = vector.shape_cast %204 : vector<1x8x256xf32> to vector<8x256xf32>
    %cst_54 = arith.constant dense<0.000000e+00> : vector<8x256xf32>
    %206 = tpu.matmul %202, %0, %cst_54 {dimension_numbers = #tpu.dot_dimension_numbers<[1], [0], [0], [1], [0, 0, 1, 1], [], []>} : vector<8x64xf32>, vector<64x256xf32>, vector<8x256xf32> -> vector<8x256xf32>
    %207 = arith.addf %205, %206 : vector<8x256xf32>
    %208 = math.tanh %207 : vector<8x256xf32>
    %209 = vector.extract_strided_slice %208 {offsets = [0, 0], sizes = [8, 192], strides = [1, 1]} : vector<8x256xf32> to vector<8x192xf32>
    %cst_55 = arith.constant 5.000000e-01 : f32
    %210 = vector.broadcast %cst_55 : f32 to vector<8x192xf32>
    %211 = arith.mulf %210, %209 : vector<8x192xf32>
    %cst_56 = arith.constant 5.000000e-01 : f32
    %212 = vector.broadcast %cst_56 : f32 to vector<8x192xf32>
    %213 = arith.addf %211, %212 : vector<8x192xf32>
    %214 = vector.extract_strided_slice %213 {offsets = [0, 0], sizes = [8, 64], strides = [1, 1]} : vector<8x192xf32> to vector<8x64xf32>
    %215 = vector.extract_strided_slice %213 {offsets = [0, 64], sizes = [8, 64], strides = [1, 1]} : vector<8x192xf32> to vector<8x64xf32>
    %216 = vector.extract_strided_slice %213 {offsets = [0, 128], sizes = [8, 64], strides = [1, 1]} : vector<8x192xf32> to vector<8x64xf32>
    %217 = vector.extract_strided_slice %208 {offsets = [0, 192], sizes = [8, 64], strides = [1, 1]} : vector<8x256xf32> to vector<8x64xf32>
    %218 = arith.mulf %215, %200 : vector<8x64xf32>
    %219 = arith.mulf %214, %217 : vector<8x64xf32>
    %220 = arith.addf %218, %219 : vector<8x64xf32>
    %221 = math.tanh %220 : vector<8x64xf32>
    %222 = arith.mulf %216, %221 : vector<8x64xf32>
    %c11_i32 = arith.constant 11 : i32
    %223 = arith.index_cast %c11_i32 : i32 to index
    %c0_57 = arith.constant 0 : index
    %c0_58 = arith.constant 0 : index
    %224 = vector.load %arg1[%223, %c0_57, %c0_58] : memref<28x8x256xf32, #tpu.memory_space<vmem>>, vector<1x8x256xf32>
    %225 = vector.shape_cast %224 : vector<1x8x256xf32> to vector<8x256xf32>
    %cst_59 = arith.constant dense<0.000000e+00> : vector<8x256xf32>
    %226 = tpu.matmul %222, %0, %cst_59 {dimension_numbers = #tpu.dot_dimension_numbers<[1], [0], [0], [1], [0, 0, 1, 1], [], []>} : vector<8x64xf32>, vector<64x256xf32>, vector<8x256xf32> -> vector<8x256xf32>
    %227 = arith.addf %225, %226 : vector<8x256xf32>
    %228 = math.tanh %227 : vector<8x256xf32>
    %229 = vector.extract_strided_slice %228 {offsets = [0, 0], sizes = [8, 192], strides = [1, 1]} : vector<8x256xf32> to vector<8x192xf32>
    %cst_60 = arith.constant 5.000000e-01 : f32
    %230 = vector.broadcast %cst_60 : f32 to vector<8x192xf32>
    %231 = arith.mulf %230, %229 : vector<8x192xf32>
    %cst_61 = arith.constant 5.000000e-01 : f32
    %232 = vector.broadcast %cst_61 : f32 to vector<8x192xf32>
    %233 = arith.addf %231, %232 : vector<8x192xf32>
    %234 = vector.extract_strided_slice %233 {offsets = [0, 0], sizes = [8, 64], strides = [1, 1]} : vector<8x192xf32> to vector<8x64xf32>
    %235 = vector.extract_strided_slice %233 {offsets = [0, 64], sizes = [8, 64], strides = [1, 1]} : vector<8x192xf32> to vector<8x64xf32>
    %236 = vector.extract_strided_slice %233 {offsets = [0, 128], sizes = [8, 64], strides = [1, 1]} : vector<8x192xf32> to vector<8x64xf32>
    %237 = vector.extract_strided_slice %228 {offsets = [0, 192], sizes = [8, 64], strides = [1, 1]} : vector<8x256xf32> to vector<8x64xf32>
    %238 = arith.mulf %235, %220 : vector<8x64xf32>
    %239 = arith.mulf %234, %237 : vector<8x64xf32>
    %240 = arith.addf %238, %239 : vector<8x64xf32>
    %241 = math.tanh %240 : vector<8x64xf32>
    %242 = arith.mulf %236, %241 : vector<8x64xf32>
    %c12_i32 = arith.constant 12 : i32
    %243 = arith.index_cast %c12_i32 : i32 to index
    %c0_62 = arith.constant 0 : index
    %c0_63 = arith.constant 0 : index
    %244 = vector.load %arg1[%243, %c0_62, %c0_63] : memref<28x8x256xf32, #tpu.memory_space<vmem>>, vector<1x8x256xf32>
    %245 = vector.shape_cast %244 : vector<1x8x256xf32> to vector<8x256xf32>
    %cst_64 = arith.constant dense<0.000000e+00> : vector<8x256xf32>
    %246 = tpu.matmul %242, %0, %cst_64 {dimension_numbers = #tpu.dot_dimension_numbers<[1], [0], [0], [1], [0, 0, 1, 1], [], []>} : vector<8x64xf32>, vector<64x256xf32>, vector<8x256xf32> -> vector<8x256xf32>
    %247 = arith.addf %245, %246 : vector<8x256xf32>
    %248 = math.tanh %247 : vector<8x256xf32>
    %249 = vector.extract_strided_slice %248 {offsets = [0, 0], sizes = [8, 192], strides = [1, 1]} : vector<8x256xf32> to vector<8x192xf32>
    %cst_65 = arith.constant 5.000000e-01 : f32
    %250 = vector.broadcast %cst_65 : f32 to vector<8x192xf32>
    %251 = arith.mulf %250, %249 : vector<8x192xf32>
    %cst_66 = arith.constant 5.000000e-01 : f32
    %252 = vector.broadcast %cst_66 : f32 to vector<8x192xf32>
    %253 = arith.addf %251, %252 : vector<8x192xf32>
    %254 = vector.extract_strided_slice %253 {offsets = [0, 0], sizes = [8, 64], strides = [1, 1]} : vector<8x192xf32> to vector<8x64xf32>
    %255 = vector.extract_strided_slice %253 {offsets = [0, 64], sizes = [8, 64], strides = [1, 1]} : vector<8x192xf32> to vector<8x64xf32>
    %256 = vector.extract_strided_slice %253 {offsets = [0, 128], sizes = [8, 64], strides = [1, 1]} : vector<8x192xf32> to vector<8x64xf32>
    %257 = vector.extract_strided_slice %248 {offsets = [0, 192], sizes = [8, 64], strides = [1, 1]} : vector<8x256xf32> to vector<8x64xf32>
    %258 = arith.mulf %255, %240 : vector<8x64xf32>
    %259 = arith.mulf %254, %257 : vector<8x64xf32>
    %260 = arith.addf %258, %259 : vector<8x64xf32>
    %261 = math.tanh %260 : vector<8x64xf32>
    %262 = arith.mulf %256, %261 : vector<8x64xf32>
    %c13_i32 = arith.constant 13 : i32
    %263 = arith.index_cast %c13_i32 : i32 to index
    %c0_67 = arith.constant 0 : index
    %c0_68 = arith.constant 0 : index
    %264 = vector.load %arg1[%263, %c0_67, %c0_68] : memref<28x8x256xf32, #tpu.memory_space<vmem>>, vector<1x8x256xf32>
    %265 = vector.shape_cast %264 : vector<1x8x256xf32> to vector<8x256xf32>
    %cst_69 = arith.constant dense<0.000000e+00> : vector<8x256xf32>
    %266 = tpu.matmul %262, %0, %cst_69 {dimension_numbers = #tpu.dot_dimension_numbers<[1], [0], [0], [1], [0, 0, 1, 1], [], []>} : vector<8x64xf32>, vector<64x256xf32>, vector<8x256xf32> -> vector<8x256xf32>
    %267 = arith.addf %265, %266 : vector<8x256xf32>
    %268 = math.tanh %267 : vector<8x256xf32>
    %269 = vector.extract_strided_slice %268 {offsets = [0, 0], sizes = [8, 192], strides = [1, 1]} : vector<8x256xf32> to vector<8x192xf32>
    %cst_70 = arith.constant 5.000000e-01 : f32
    %270 = vector.broadcast %cst_70 : f32 to vector<8x192xf32>
    %271 = arith.mulf %270, %269 : vector<8x192xf32>
    %cst_71 = arith.constant 5.000000e-01 : f32
    %272 = vector.broadcast %cst_71 : f32 to vector<8x192xf32>
    %273 = arith.addf %271, %272 : vector<8x192xf32>
    %274 = vector.extract_strided_slice %273 {offsets = [0, 0], sizes = [8, 64], strides = [1, 1]} : vector<8x192xf32> to vector<8x64xf32>
    %275 = vector.extract_strided_slice %273 {offsets = [0, 64], sizes = [8, 64], strides = [1, 1]} : vector<8x192xf32> to vector<8x64xf32>
    %276 = vector.extract_strided_slice %273 {offsets = [0, 128], sizes = [8, 64], strides = [1, 1]} : vector<8x192xf32> to vector<8x64xf32>
    %277 = vector.extract_strided_slice %268 {offsets = [0, 192], sizes = [8, 64], strides = [1, 1]} : vector<8x256xf32> to vector<8x64xf32>
    %278 = arith.mulf %275, %260 : vector<8x64xf32>
    %279 = arith.mulf %274, %277 : vector<8x64xf32>
    %280 = arith.addf %278, %279 : vector<8x64xf32>
    %281 = math.tanh %280 : vector<8x64xf32>
    %282 = arith.mulf %276, %281 : vector<8x64xf32>
    %c14_i32 = arith.constant 14 : i32
    %283 = arith.index_cast %c14_i32 : i32 to index
    %c0_72 = arith.constant 0 : index
    %c0_73 = arith.constant 0 : index
    %284 = vector.load %arg1[%283, %c0_72, %c0_73] : memref<28x8x256xf32, #tpu.memory_space<vmem>>, vector<1x8x256xf32>
    %285 = vector.shape_cast %284 : vector<1x8x256xf32> to vector<8x256xf32>
    %cst_74 = arith.constant dense<0.000000e+00> : vector<8x256xf32>
    %286 = tpu.matmul %282, %0, %cst_74 {dimension_numbers = #tpu.dot_dimension_numbers<[1], [0], [0], [1], [0, 0, 1, 1], [], []>} : vector<8x64xf32>, vector<64x256xf32>, vector<8x256xf32> -> vector<8x256xf32>
    %287 = arith.addf %285, %286 : vector<8x256xf32>
    %288 = math.tanh %287 : vector<8x256xf32>
    %289 = vector.extract_strided_slice %288 {offsets = [0, 0], sizes = [8, 192], strides = [1, 1]} : vector<8x256xf32> to vector<8x192xf32>
    %cst_75 = arith.constant 5.000000e-01 : f32
    %290 = vector.broadcast %cst_75 : f32 to vector<8x192xf32>
    %291 = arith.mulf %290, %289 : vector<8x192xf32>
    %cst_76 = arith.constant 5.000000e-01 : f32
    %292 = vector.broadcast %cst_76 : f32 to vector<8x192xf32>
    %293 = arith.addf %291, %292 : vector<8x192xf32>
    %294 = vector.extract_strided_slice %293 {offsets = [0, 0], sizes = [8, 64], strides = [1, 1]} : vector<8x192xf32> to vector<8x64xf32>
    %295 = vector.extract_strided_slice %293 {offsets = [0, 64], sizes = [8, 64], strides = [1, 1]} : vector<8x192xf32> to vector<8x64xf32>
    %296 = vector.extract_strided_slice %293 {offsets = [0, 128], sizes = [8, 64], strides = [1, 1]} : vector<8x192xf32> to vector<8x64xf32>
    %297 = vector.extract_strided_slice %288 {offsets = [0, 192], sizes = [8, 64], strides = [1, 1]} : vector<8x256xf32> to vector<8x64xf32>
    %298 = arith.mulf %295, %280 : vector<8x64xf32>
    %299 = arith.mulf %294, %297 : vector<8x64xf32>
    %300 = arith.addf %298, %299 : vector<8x64xf32>
    %301 = math.tanh %300 : vector<8x64xf32>
    %302 = arith.mulf %296, %301 : vector<8x64xf32>
    %c15_i32 = arith.constant 15 : i32
    %303 = arith.index_cast %c15_i32 : i32 to index
    %c0_77 = arith.constant 0 : index
    %c0_78 = arith.constant 0 : index
    %304 = vector.load %arg1[%303, %c0_77, %c0_78] : memref<28x8x256xf32, #tpu.memory_space<vmem>>, vector<1x8x256xf32>
    %305 = vector.shape_cast %304 : vector<1x8x256xf32> to vector<8x256xf32>
    %cst_79 = arith.constant dense<0.000000e+00> : vector<8x256xf32>
    %306 = tpu.matmul %302, %0, %cst_79 {dimension_numbers = #tpu.dot_dimension_numbers<[1], [0], [0], [1], [0, 0, 1, 1], [], []>} : vector<8x64xf32>, vector<64x256xf32>, vector<8x256xf32> -> vector<8x256xf32>
    %307 = arith.addf %305, %306 : vector<8x256xf32>
    %308 = math.tanh %307 : vector<8x256xf32>
    %309 = vector.extract_strided_slice %308 {offsets = [0, 0], sizes = [8, 192], strides = [1, 1]} : vector<8x256xf32> to vector<8x192xf32>
    %cst_80 = arith.constant 5.000000e-01 : f32
    %310 = vector.broadcast %cst_80 : f32 to vector<8x192xf32>
    %311 = arith.mulf %310, %309 : vector<8x192xf32>
    %cst_81 = arith.constant 5.000000e-01 : f32
    %312 = vector.broadcast %cst_81 : f32 to vector<8x192xf32>
    %313 = arith.addf %311, %312 : vector<8x192xf32>
    %314 = vector.extract_strided_slice %313 {offsets = [0, 0], sizes = [8, 64], strides = [1, 1]} : vector<8x192xf32> to vector<8x64xf32>
    %315 = vector.extract_strided_slice %313 {offsets = [0, 64], sizes = [8, 64], strides = [1, 1]} : vector<8x192xf32> to vector<8x64xf32>
    %316 = vector.extract_strided_slice %313 {offsets = [0, 128], sizes = [8, 64], strides = [1, 1]} : vector<8x192xf32> to vector<8x64xf32>
    %317 = vector.extract_strided_slice %308 {offsets = [0, 192], sizes = [8, 64], strides = [1, 1]} : vector<8x256xf32> to vector<8x64xf32>
    %318 = arith.mulf %315, %300 : vector<8x64xf32>
    %319 = arith.mulf %314, %317 : vector<8x64xf32>
    %320 = arith.addf %318, %319 : vector<8x64xf32>
    %321 = math.tanh %320 : vector<8x64xf32>
    %322 = arith.mulf %316, %321 : vector<8x64xf32>
    %c16_i32 = arith.constant 16 : i32
    %323 = arith.index_cast %c16_i32 : i32 to index
    %c0_82 = arith.constant 0 : index
    %c0_83 = arith.constant 0 : index
    %324 = vector.load %arg1[%323, %c0_82, %c0_83] : memref<28x8x256xf32, #tpu.memory_space<vmem>>, vector<1x8x256xf32>
    %325 = vector.shape_cast %324 : vector<1x8x256xf32> to vector<8x256xf32>
    %cst_84 = arith.constant dense<0.000000e+00> : vector<8x256xf32>
    %326 = tpu.matmul %322, %0, %cst_84 {dimension_numbers = #tpu.dot_dimension_numbers<[1], [0], [0], [1], [0, 0, 1, 1], [], []>} : vector<8x64xf32>, vector<64x256xf32>, vector<8x256xf32> -> vector<8x256xf32>
    %327 = arith.addf %325, %326 : vector<8x256xf32>
    %328 = math.tanh %327 : vector<8x256xf32>
    %329 = vector.extract_strided_slice %328 {offsets = [0, 0], sizes = [8, 192], strides = [1, 1]} : vector<8x256xf32> to vector<8x192xf32>
    %cst_85 = arith.constant 5.000000e-01 : f32
    %330 = vector.broadcast %cst_85 : f32 to vector<8x192xf32>
    %331 = arith.mulf %330, %329 : vector<8x192xf32>
    %cst_86 = arith.constant 5.000000e-01 : f32
    %332 = vector.broadcast %cst_86 : f32 to vector<8x192xf32>
    %333 = arith.addf %331, %332 : vector<8x192xf32>
    %334 = vector.extract_strided_slice %333 {offsets = [0, 0], sizes = [8, 64], strides = [1, 1]} : vector<8x192xf32> to vector<8x64xf32>
    %335 = vector.extract_strided_slice %333 {offsets = [0, 64], sizes = [8, 64], strides = [1, 1]} : vector<8x192xf32> to vector<8x64xf32>
    %336 = vector.extract_strided_slice %333 {offsets = [0, 128], sizes = [8, 64], strides = [1, 1]} : vector<8x192xf32> to vector<8x64xf32>
    %337 = vector.extract_strided_slice %328 {offsets = [0, 192], sizes = [8, 64], strides = [1, 1]} : vector<8x256xf32> to vector<8x64xf32>
    %338 = arith.mulf %335, %320 : vector<8x64xf32>
    %339 = arith.mulf %334, %337 : vector<8x64xf32>
    %340 = arith.addf %338, %339 : vector<8x64xf32>
    %341 = math.tanh %340 : vector<8x64xf32>
    %342 = arith.mulf %336, %341 : vector<8x64xf32>
    %c17_i32 = arith.constant 17 : i32
    %343 = arith.index_cast %c17_i32 : i32 to index
    %c0_87 = arith.constant 0 : index
    %c0_88 = arith.constant 0 : index
    %344 = vector.load %arg1[%343, %c0_87, %c0_88] : memref<28x8x256xf32, #tpu.memory_space<vmem>>, vector<1x8x256xf32>
    %345 = vector.shape_cast %344 : vector<1x8x256xf32> to vector<8x256xf32>
    %cst_89 = arith.constant dense<0.000000e+00> : vector<8x256xf32>
    %346 = tpu.matmul %342, %0, %cst_89 {dimension_numbers = #tpu.dot_dimension_numbers<[1], [0], [0], [1], [0, 0, 1, 1], [], []>} : vector<8x64xf32>, vector<64x256xf32>, vector<8x256xf32> -> vector<8x256xf32>
    %347 = arith.addf %345, %346 : vector<8x256xf32>
    %348 = math.tanh %347 : vector<8x256xf32>
    %349 = vector.extract_strided_slice %348 {offsets = [0, 0], sizes = [8, 192], strides = [1, 1]} : vector<8x256xf32> to vector<8x192xf32>
    %cst_90 = arith.constant 5.000000e-01 : f32
    %350 = vector.broadcast %cst_90 : f32 to vector<8x192xf32>
    %351 = arith.mulf %350, %349 : vector<8x192xf32>
    %cst_91 = arith.constant 5.000000e-01 : f32
    %352 = vector.broadcast %cst_91 : f32 to vector<8x192xf32>
    %353 = arith.addf %351, %352 : vector<8x192xf32>
    %354 = vector.extract_strided_slice %353 {offsets = [0, 0], sizes = [8, 64], strides = [1, 1]} : vector<8x192xf32> to vector<8x64xf32>
    %355 = vector.extract_strided_slice %353 {offsets = [0, 64], sizes = [8, 64], strides = [1, 1]} : vector<8x192xf32> to vector<8x64xf32>
    %356 = vector.extract_strided_slice %353 {offsets = [0, 128], sizes = [8, 64], strides = [1, 1]} : vector<8x192xf32> to vector<8x64xf32>
    %357 = vector.extract_strided_slice %348 {offsets = [0, 192], sizes = [8, 64], strides = [1, 1]} : vector<8x256xf32> to vector<8x64xf32>
    %358 = arith.mulf %355, %340 : vector<8x64xf32>
    %359 = arith.mulf %354, %357 : vector<8x64xf32>
    %360 = arith.addf %358, %359 : vector<8x64xf32>
    %361 = math.tanh %360 : vector<8x64xf32>
    %362 = arith.mulf %356, %361 : vector<8x64xf32>
    %c18_i32 = arith.constant 18 : i32
    %363 = arith.index_cast %c18_i32 : i32 to index
    %c0_92 = arith.constant 0 : index
    %c0_93 = arith.constant 0 : index
    %364 = vector.load %arg1[%363, %c0_92, %c0_93] : memref<28x8x256xf32, #tpu.memory_space<vmem>>, vector<1x8x256xf32>
    %365 = vector.shape_cast %364 : vector<1x8x256xf32> to vector<8x256xf32>
    %cst_94 = arith.constant dense<0.000000e+00> : vector<8x256xf32>
    %366 = tpu.matmul %362, %0, %cst_94 {dimension_numbers = #tpu.dot_dimension_numbers<[1], [0], [0], [1], [0, 0, 1, 1], [], []>} : vector<8x64xf32>, vector<64x256xf32>, vector<8x256xf32> -> vector<8x256xf32>
    %367 = arith.addf %365, %366 : vector<8x256xf32>
    %368 = math.tanh %367 : vector<8x256xf32>
    %369 = vector.extract_strided_slice %368 {offsets = [0, 0], sizes = [8, 192], strides = [1, 1]} : vector<8x256xf32> to vector<8x192xf32>
    %cst_95 = arith.constant 5.000000e-01 : f32
    %370 = vector.broadcast %cst_95 : f32 to vector<8x192xf32>
    %371 = arith.mulf %370, %369 : vector<8x192xf32>
    %cst_96 = arith.constant 5.000000e-01 : f32
    %372 = vector.broadcast %cst_96 : f32 to vector<8x192xf32>
    %373 = arith.addf %371, %372 : vector<8x192xf32>
    %374 = vector.extract_strided_slice %373 {offsets = [0, 0], sizes = [8, 64], strides = [1, 1]} : vector<8x192xf32> to vector<8x64xf32>
    %375 = vector.extract_strided_slice %373 {offsets = [0, 64], sizes = [8, 64], strides = [1, 1]} : vector<8x192xf32> to vector<8x64xf32>
    %376 = vector.extract_strided_slice %373 {offsets = [0, 128], sizes = [8, 64], strides = [1, 1]} : vector<8x192xf32> to vector<8x64xf32>
    %377 = vector.extract_strided_slice %368 {offsets = [0, 192], sizes = [8, 64], strides = [1, 1]} : vector<8x256xf32> to vector<8x64xf32>
    %378 = arith.mulf %375, %360 : vector<8x64xf32>
    %379 = arith.mulf %374, %377 : vector<8x64xf32>
    %380 = arith.addf %378, %379 : vector<8x64xf32>
    %381 = math.tanh %380 : vector<8x64xf32>
    %382 = arith.mulf %376, %381 : vector<8x64xf32>
    %c19_i32 = arith.constant 19 : i32
    %383 = arith.index_cast %c19_i32 : i32 to index
    %c0_97 = arith.constant 0 : index
    %c0_98 = arith.constant 0 : index
    %384 = vector.load %arg1[%383, %c0_97, %c0_98] : memref<28x8x256xf32, #tpu.memory_space<vmem>>, vector<1x8x256xf32>
    %385 = vector.shape_cast %384 : vector<1x8x256xf32> to vector<8x256xf32>
    %cst_99 = arith.constant dense<0.000000e+00> : vector<8x256xf32>
    %386 = tpu.matmul %382, %0, %cst_99 {dimension_numbers = #tpu.dot_dimension_numbers<[1], [0], [0], [1], [0, 0, 1, 1], [], []>} : vector<8x64xf32>, vector<64x256xf32>, vector<8x256xf32> -> vector<8x256xf32>
    %387 = arith.addf %385, %386 : vector<8x256xf32>
    %388 = math.tanh %387 : vector<8x256xf32>
    %389 = vector.extract_strided_slice %388 {offsets = [0, 0], sizes = [8, 192], strides = [1, 1]} : vector<8x256xf32> to vector<8x192xf32>
    %cst_100 = arith.constant 5.000000e-01 : f32
    %390 = vector.broadcast %cst_100 : f32 to vector<8x192xf32>
    %391 = arith.mulf %390, %389 : vector<8x192xf32>
    %cst_101 = arith.constant 5.000000e-01 : f32
    %392 = vector.broadcast %cst_101 : f32 to vector<8x192xf32>
    %393 = arith.addf %391, %392 : vector<8x192xf32>
    %394 = vector.extract_strided_slice %393 {offsets = [0, 0], sizes = [8, 64], strides = [1, 1]} : vector<8x192xf32> to vector<8x64xf32>
    %395 = vector.extract_strided_slice %393 {offsets = [0, 64], sizes = [8, 64], strides = [1, 1]} : vector<8x192xf32> to vector<8x64xf32>
    %396 = vector.extract_strided_slice %393 {offsets = [0, 128], sizes = [8, 64], strides = [1, 1]} : vector<8x192xf32> to vector<8x64xf32>
    %397 = vector.extract_strided_slice %388 {offsets = [0, 192], sizes = [8, 64], strides = [1, 1]} : vector<8x256xf32> to vector<8x64xf32>
    %398 = arith.mulf %395, %380 : vector<8x64xf32>
    %399 = arith.mulf %394, %397 : vector<8x64xf32>
    %400 = arith.addf %398, %399 : vector<8x64xf32>
    %401 = math.tanh %400 : vector<8x64xf32>
    %402 = arith.mulf %396, %401 : vector<8x64xf32>
    %c20_i32 = arith.constant 20 : i32
    %403 = arith.index_cast %c20_i32 : i32 to index
    %c0_102 = arith.constant 0 : index
    %c0_103 = arith.constant 0 : index
    %404 = vector.load %arg1[%403, %c0_102, %c0_103] : memref<28x8x256xf32, #tpu.memory_space<vmem>>, vector<1x8x256xf32>
    %405 = vector.shape_cast %404 : vector<1x8x256xf32> to vector<8x256xf32>
    %cst_104 = arith.constant dense<0.000000e+00> : vector<8x256xf32>
    %406 = tpu.matmul %402, %0, %cst_104 {dimension_numbers = #tpu.dot_dimension_numbers<[1], [0], [0], [1], [0, 0, 1, 1], [], []>} : vector<8x64xf32>, vector<64x256xf32>, vector<8x256xf32> -> vector<8x256xf32>
    %407 = arith.addf %405, %406 : vector<8x256xf32>
    %408 = math.tanh %407 : vector<8x256xf32>
    %409 = vector.extract_strided_slice %408 {offsets = [0, 0], sizes = [8, 192], strides = [1, 1]} : vector<8x256xf32> to vector<8x192xf32>
    %cst_105 = arith.constant 5.000000e-01 : f32
    %410 = vector.broadcast %cst_105 : f32 to vector<8x192xf32>
    %411 = arith.mulf %410, %409 : vector<8x192xf32>
    %cst_106 = arith.constant 5.000000e-01 : f32
    %412 = vector.broadcast %cst_106 : f32 to vector<8x192xf32>
    %413 = arith.addf %411, %412 : vector<8x192xf32>
    %414 = vector.extract_strided_slice %413 {offsets = [0, 0], sizes = [8, 64], strides = [1, 1]} : vector<8x192xf32> to vector<8x64xf32>
    %415 = vector.extract_strided_slice %413 {offsets = [0, 64], sizes = [8, 64], strides = [1, 1]} : vector<8x192xf32> to vector<8x64xf32>
    %416 = vector.extract_strided_slice %413 {offsets = [0, 128], sizes = [8, 64], strides = [1, 1]} : vector<8x192xf32> to vector<8x64xf32>
    %417 = vector.extract_strided_slice %408 {offsets = [0, 192], sizes = [8, 64], strides = [1, 1]} : vector<8x256xf32> to vector<8x64xf32>
    %418 = arith.mulf %415, %400 : vector<8x64xf32>
    %419 = arith.mulf %414, %417 : vector<8x64xf32>
    %420 = arith.addf %418, %419 : vector<8x64xf32>
    %421 = math.tanh %420 : vector<8x64xf32>
    %422 = arith.mulf %416, %421 : vector<8x64xf32>
    %c21_i32 = arith.constant 21 : i32
    %423 = arith.index_cast %c21_i32 : i32 to index
    %c0_107 = arith.constant 0 : index
    %c0_108 = arith.constant 0 : index
    %424 = vector.load %arg1[%423, %c0_107, %c0_108] : memref<28x8x256xf32, #tpu.memory_space<vmem>>, vector<1x8x256xf32>
    %425 = vector.shape_cast %424 : vector<1x8x256xf32> to vector<8x256xf32>
    %cst_109 = arith.constant dense<0.000000e+00> : vector<8x256xf32>
    %426 = tpu.matmul %422, %0, %cst_109 {dimension_numbers = #tpu.dot_dimension_numbers<[1], [0], [0], [1], [0, 0, 1, 1], [], []>} : vector<8x64xf32>, vector<64x256xf32>, vector<8x256xf32> -> vector<8x256xf32>
    %427 = arith.addf %425, %426 : vector<8x256xf32>
    %428 = math.tanh %427 : vector<8x256xf32>
    %429 = vector.extract_strided_slice %428 {offsets = [0, 0], sizes = [8, 192], strides = [1, 1]} : vector<8x256xf32> to vector<8x192xf32>
    %cst_110 = arith.constant 5.000000e-01 : f32
    %430 = vector.broadcast %cst_110 : f32 to vector<8x192xf32>
    %431 = arith.mulf %430, %429 : vector<8x192xf32>
    %cst_111 = arith.constant 5.000000e-01 : f32
    %432 = vector.broadcast %cst_111 : f32 to vector<8x192xf32>
    %433 = arith.addf %431, %432 : vector<8x192xf32>
    %434 = vector.extract_strided_slice %433 {offsets = [0, 0], sizes = [8, 64], strides = [1, 1]} : vector<8x192xf32> to vector<8x64xf32>
    %435 = vector.extract_strided_slice %433 {offsets = [0, 64], sizes = [8, 64], strides = [1, 1]} : vector<8x192xf32> to vector<8x64xf32>
    %436 = vector.extract_strided_slice %433 {offsets = [0, 128], sizes = [8, 64], strides = [1, 1]} : vector<8x192xf32> to vector<8x64xf32>
    %437 = vector.extract_strided_slice %428 {offsets = [0, 192], sizes = [8, 64], strides = [1, 1]} : vector<8x256xf32> to vector<8x64xf32>
    %438 = arith.mulf %435, %420 : vector<8x64xf32>
    %439 = arith.mulf %434, %437 : vector<8x64xf32>
    %440 = arith.addf %438, %439 : vector<8x64xf32>
    %441 = math.tanh %440 : vector<8x64xf32>
    %442 = arith.mulf %436, %441 : vector<8x64xf32>
    %c22_i32 = arith.constant 22 : i32
    %443 = arith.index_cast %c22_i32 : i32 to index
    %c0_112 = arith.constant 0 : index
    %c0_113 = arith.constant 0 : index
    %444 = vector.load %arg1[%443, %c0_112, %c0_113] : memref<28x8x256xf32, #tpu.memory_space<vmem>>, vector<1x8x256xf32>
    %445 = vector.shape_cast %444 : vector<1x8x256xf32> to vector<8x256xf32>
    %cst_114 = arith.constant dense<0.000000e+00> : vector<8x256xf32>
    %446 = tpu.matmul %442, %0, %cst_114 {dimension_numbers = #tpu.dot_dimension_numbers<[1], [0], [0], [1], [0, 0, 1, 1], [], []>} : vector<8x64xf32>, vector<64x256xf32>, vector<8x256xf32> -> vector<8x256xf32>
    %447 = arith.addf %445, %446 : vector<8x256xf32>
    %448 = math.tanh %447 : vector<8x256xf32>
    %449 = vector.extract_strided_slice %448 {offsets = [0, 0], sizes = [8, 192], strides = [1, 1]} : vector<8x256xf32> to vector<8x192xf32>
    %cst_115 = arith.constant 5.000000e-01 : f32
    %450 = vector.broadcast %cst_115 : f32 to vector<8x192xf32>
    %451 = arith.mulf %450, %449 : vector<8x192xf32>
    %cst_116 = arith.constant 5.000000e-01 : f32
    %452 = vector.broadcast %cst_116 : f32 to vector<8x192xf32>
    %453 = arith.addf %451, %452 : vector<8x192xf32>
    %454 = vector.extract_strided_slice %453 {offsets = [0, 0], sizes = [8, 64], strides = [1, 1]} : vector<8x192xf32> to vector<8x64xf32>
    %455 = vector.extract_strided_slice %453 {offsets = [0, 64], sizes = [8, 64], strides = [1, 1]} : vector<8x192xf32> to vector<8x64xf32>
    %456 = vector.extract_strided_slice %453 {offsets = [0, 128], sizes = [8, 64], strides = [1, 1]} : vector<8x192xf32> to vector<8x64xf32>
    %457 = vector.extract_strided_slice %448 {offsets = [0, 192], sizes = [8, 64], strides = [1, 1]} : vector<8x256xf32> to vector<8x64xf32>
    %458 = arith.mulf %455, %440 : vector<8x64xf32>
    %459 = arith.mulf %454, %457 : vector<8x64xf32>
    %460 = arith.addf %458, %459 : vector<8x64xf32>
    %461 = math.tanh %460 : vector<8x64xf32>
    %462 = arith.mulf %456, %461 : vector<8x64xf32>
    %c23_i32 = arith.constant 23 : i32
    %463 = arith.index_cast %c23_i32 : i32 to index
    %c0_117 = arith.constant 0 : index
    %c0_118 = arith.constant 0 : index
    %464 = vector.load %arg1[%463, %c0_117, %c0_118] : memref<28x8x256xf32, #tpu.memory_space<vmem>>, vector<1x8x256xf32>
    %465 = vector.shape_cast %464 : vector<1x8x256xf32> to vector<8x256xf32>
    %cst_119 = arith.constant dense<0.000000e+00> : vector<8x256xf32>
    %466 = tpu.matmul %462, %0, %cst_119 {dimension_numbers = #tpu.dot_dimension_numbers<[1], [0], [0], [1], [0, 0, 1, 1], [], []>} : vector<8x64xf32>, vector<64x256xf32>, vector<8x256xf32> -> vector<8x256xf32>
    %467 = arith.addf %465, %466 : vector<8x256xf32>
    %468 = math.tanh %467 : vector<8x256xf32>
    %469 = vector.extract_strided_slice %468 {offsets = [0, 0], sizes = [8, 192], strides = [1, 1]} : vector<8x256xf32> to vector<8x192xf32>
    %cst_120 = arith.constant 5.000000e-01 : f32
    %470 = vector.broadcast %cst_120 : f32 to vector<8x192xf32>
    %471 = arith.mulf %470, %469 : vector<8x192xf32>
    %cst_121 = arith.constant 5.000000e-01 : f32
    %472 = vector.broadcast %cst_121 : f32 to vector<8x192xf32>
    %473 = arith.addf %471, %472 : vector<8x192xf32>
    %474 = vector.extract_strided_slice %473 {offsets = [0, 0], sizes = [8, 64], strides = [1, 1]} : vector<8x192xf32> to vector<8x64xf32>
    %475 = vector.extract_strided_slice %473 {offsets = [0, 64], sizes = [8, 64], strides = [1, 1]} : vector<8x192xf32> to vector<8x64xf32>
    %476 = vector.extract_strided_slice %473 {offsets = [0, 128], sizes = [8, 64], strides = [1, 1]} : vector<8x192xf32> to vector<8x64xf32>
    %477 = vector.extract_strided_slice %468 {offsets = [0, 192], sizes = [8, 64], strides = [1, 1]} : vector<8x256xf32> to vector<8x64xf32>
    %478 = arith.mulf %475, %460 : vector<8x64xf32>
    %479 = arith.mulf %474, %477 : vector<8x64xf32>
    %480 = arith.addf %478, %479 : vector<8x64xf32>
    %481 = math.tanh %480 : vector<8x64xf32>
    %482 = arith.mulf %476, %481 : vector<8x64xf32>
    %c24_i32 = arith.constant 24 : i32
    %483 = arith.index_cast %c24_i32 : i32 to index
    %c0_122 = arith.constant 0 : index
    %c0_123 = arith.constant 0 : index
    %484 = vector.load %arg1[%483, %c0_122, %c0_123] : memref<28x8x256xf32, #tpu.memory_space<vmem>>, vector<1x8x256xf32>
    %485 = vector.shape_cast %484 : vector<1x8x256xf32> to vector<8x256xf32>
    %cst_124 = arith.constant dense<0.000000e+00> : vector<8x256xf32>
    %486 = tpu.matmul %482, %0, %cst_124 {dimension_numbers = #tpu.dot_dimension_numbers<[1], [0], [0], [1], [0, 0, 1, 1], [], []>} : vector<8x64xf32>, vector<64x256xf32>, vector<8x256xf32> -> vector<8x256xf32>
    %487 = arith.addf %485, %486 : vector<8x256xf32>
    %488 = math.tanh %487 : vector<8x256xf32>
    %489 = vector.extract_strided_slice %488 {offsets = [0, 0], sizes = [8, 192], strides = [1, 1]} : vector<8x256xf32> to vector<8x192xf32>
    %cst_125 = arith.constant 5.000000e-01 : f32
    %490 = vector.broadcast %cst_125 : f32 to vector<8x192xf32>
    %491 = arith.mulf %490, %489 : vector<8x192xf32>
    %cst_126 = arith.constant 5.000000e-01 : f32
    %492 = vector.broadcast %cst_126 : f32 to vector<8x192xf32>
    %493 = arith.addf %491, %492 : vector<8x192xf32>
    %494 = vector.extract_strided_slice %493 {offsets = [0, 0], sizes = [8, 64], strides = [1, 1]} : vector<8x192xf32> to vector<8x64xf32>
    %495 = vector.extract_strided_slice %493 {offsets = [0, 64], sizes = [8, 64], strides = [1, 1]} : vector<8x192xf32> to vector<8x64xf32>
    %496 = vector.extract_strided_slice %493 {offsets = [0, 128], sizes = [8, 64], strides = [1, 1]} : vector<8x192xf32> to vector<8x64xf32>
    %497 = vector.extract_strided_slice %488 {offsets = [0, 192], sizes = [8, 64], strides = [1, 1]} : vector<8x256xf32> to vector<8x64xf32>
    %498 = arith.mulf %495, %480 : vector<8x64xf32>
    %499 = arith.mulf %494, %497 : vector<8x64xf32>
    %500 = arith.addf %498, %499 : vector<8x64xf32>
    %501 = math.tanh %500 : vector<8x64xf32>
    %502 = arith.mulf %496, %501 : vector<8x64xf32>
    %c25_i32 = arith.constant 25 : i32
    %503 = arith.index_cast %c25_i32 : i32 to index
    %c0_127 = arith.constant 0 : index
    %c0_128 = arith.constant 0 : index
    %504 = vector.load %arg1[%503, %c0_127, %c0_128] : memref<28x8x256xf32, #tpu.memory_space<vmem>>, vector<1x8x256xf32>
    %505 = vector.shape_cast %504 : vector<1x8x256xf32> to vector<8x256xf32>
    %cst_129 = arith.constant dense<0.000000e+00> : vector<8x256xf32>
    %506 = tpu.matmul %502, %0, %cst_129 {dimension_numbers = #tpu.dot_dimension_numbers<[1], [0], [0], [1], [0, 0, 1, 1], [], []>} : vector<8x64xf32>, vector<64x256xf32>, vector<8x256xf32> -> vector<8x256xf32>
    %507 = arith.addf %505, %506 : vector<8x256xf32>
    %508 = math.tanh %507 : vector<8x256xf32>
    %509 = vector.extract_strided_slice %508 {offsets = [0, 0], sizes = [8, 192], strides = [1, 1]} : vector<8x256xf32> to vector<8x192xf32>
    %cst_130 = arith.constant 5.000000e-01 : f32
    %510 = vector.broadcast %cst_130 : f32 to vector<8x192xf32>
    %511 = arith.mulf %510, %509 : vector<8x192xf32>
    %cst_131 = arith.constant 5.000000e-01 : f32
    %512 = vector.broadcast %cst_131 : f32 to vector<8x192xf32>
    %513 = arith.addf %511, %512 : vector<8x192xf32>
    %514 = vector.extract_strided_slice %513 {offsets = [0, 0], sizes = [8, 64], strides = [1, 1]} : vector<8x192xf32> to vector<8x64xf32>
    %515 = vector.extract_strided_slice %513 {offsets = [0, 64], sizes = [8, 64], strides = [1, 1]} : vector<8x192xf32> to vector<8x64xf32>
    %516 = vector.extract_strided_slice %513 {offsets = [0, 128], sizes = [8, 64], strides = [1, 1]} : vector<8x192xf32> to vector<8x64xf32>
    %517 = vector.extract_strided_slice %508 {offsets = [0, 192], sizes = [8, 64], strides = [1, 1]} : vector<8x256xf32> to vector<8x64xf32>
    %518 = arith.mulf %515, %500 : vector<8x64xf32>
    %519 = arith.mulf %514, %517 : vector<8x64xf32>
    %520 = arith.addf %518, %519 : vector<8x64xf32>
    %521 = math.tanh %520 : vector<8x64xf32>
    %522 = arith.mulf %516, %521 : vector<8x64xf32>
    %c26_i32 = arith.constant 26 : i32
    %523 = arith.index_cast %c26_i32 : i32 to index
    %c0_132 = arith.constant 0 : index
    %c0_133 = arith.constant 0 : index
    %524 = vector.load %arg1[%523, %c0_132, %c0_133] : memref<28x8x256xf32, #tpu.memory_space<vmem>>, vector<1x8x256xf32>
    %525 = vector.shape_cast %524 : vector<1x8x256xf32> to vector<8x256xf32>
    %cst_134 = arith.constant dense<0.000000e+00> : vector<8x256xf32>
    %526 = tpu.matmul %522, %0, %cst_134 {dimension_numbers = #tpu.dot_dimension_numbers<[1], [0], [0], [1], [0, 0, 1, 1], [], []>} : vector<8x64xf32>, vector<64x256xf32>, vector<8x256xf32> -> vector<8x256xf32>
    %527 = arith.addf %525, %526 : vector<8x256xf32>
    %528 = math.tanh %527 : vector<8x256xf32>
    %529 = vector.extract_strided_slice %528 {offsets = [0, 0], sizes = [8, 192], strides = [1, 1]} : vector<8x256xf32> to vector<8x192xf32>
    %cst_135 = arith.constant 5.000000e-01 : f32
    %530 = vector.broadcast %cst_135 : f32 to vector<8x192xf32>
    %531 = arith.mulf %530, %529 : vector<8x192xf32>
    %cst_136 = arith.constant 5.000000e-01 : f32
    %532 = vector.broadcast %cst_136 : f32 to vector<8x192xf32>
    %533 = arith.addf %531, %532 : vector<8x192xf32>
    %534 = vector.extract_strided_slice %533 {offsets = [0, 0], sizes = [8, 64], strides = [1, 1]} : vector<8x192xf32> to vector<8x64xf32>
    %535 = vector.extract_strided_slice %533 {offsets = [0, 64], sizes = [8, 64], strides = [1, 1]} : vector<8x192xf32> to vector<8x64xf32>
    %536 = vector.extract_strided_slice %533 {offsets = [0, 128], sizes = [8, 64], strides = [1, 1]} : vector<8x192xf32> to vector<8x64xf32>
    %537 = vector.extract_strided_slice %528 {offsets = [0, 192], sizes = [8, 64], strides = [1, 1]} : vector<8x256xf32> to vector<8x64xf32>
    %538 = arith.mulf %535, %520 : vector<8x64xf32>
    %539 = arith.mulf %534, %537 : vector<8x64xf32>
    %540 = arith.addf %538, %539 : vector<8x64xf32>
    %541 = math.tanh %540 : vector<8x64xf32>
    %542 = arith.mulf %536, %541 : vector<8x64xf32>
    %c27_i32 = arith.constant 27 : i32
    %543 = arith.index_cast %c27_i32 : i32 to index
    %c0_137 = arith.constant 0 : index
    %c0_138 = arith.constant 0 : index
    %544 = vector.load %arg1[%543, %c0_137, %c0_138] : memref<28x8x256xf32, #tpu.memory_space<vmem>>, vector<1x8x256xf32>
    %545 = vector.shape_cast %544 : vector<1x8x256xf32> to vector<8x256xf32>
    %cst_139 = arith.constant dense<0.000000e+00> : vector<8x256xf32>
    %546 = tpu.matmul %542, %0, %cst_139 {dimension_numbers = #tpu.dot_dimension_numbers<[1], [0], [0], [1], [0, 0, 1, 1], [], []>} : vector<8x64xf32>, vector<64x256xf32>, vector<8x256xf32> -> vector<8x256xf32>
    %547 = arith.addf %545, %546 : vector<8x256xf32>
    %548 = math.tanh %547 : vector<8x256xf32>
    %549 = vector.extract_strided_slice %548 {offsets = [0, 0], sizes = [8, 192], strides = [1, 1]} : vector<8x256xf32> to vector<8x192xf32>
    %cst_140 = arith.constant 5.000000e-01 : f32
    %550 = vector.broadcast %cst_140 : f32 to vector<8x192xf32>
    %551 = arith.mulf %550, %549 : vector<8x192xf32>
    %cst_141 = arith.constant 5.000000e-01 : f32
    %552 = vector.broadcast %cst_141 : f32 to vector<8x192xf32>
    %553 = arith.addf %551, %552 : vector<8x192xf32>
    %554 = vector.extract_strided_slice %553 {offsets = [0, 0], sizes = [8, 64], strides = [1, 1]} : vector<8x192xf32> to vector<8x64xf32>
    %555 = vector.extract_strided_slice %553 {offsets = [0, 64], sizes = [8, 64], strides = [1, 1]} : vector<8x192xf32> to vector<8x64xf32>
    %556 = vector.extract_strided_slice %553 {offsets = [0, 128], sizes = [8, 64], strides = [1, 1]} : vector<8x192xf32> to vector<8x64xf32>
    %557 = vector.extract_strided_slice %548 {offsets = [0, 192], sizes = [8, 64], strides = [1, 1]} : vector<8x256xf32> to vector<8x64xf32>
    %558 = arith.mulf %555, %540 : vector<8x64xf32>
    %559 = arith.mulf %554, %557 : vector<8x64xf32>
    %560 = arith.addf %558, %559 : vector<8x64xf32>
    %561 = math.tanh %560 : vector<8x64xf32>
    %562 = arith.mulf %556, %561 : vector<8x64xf32>
    %c28_i32 = arith.constant 28 : i32
    %c0_142 = arith.constant 0 : index
    %c0_143 = arith.constant 0 : index
    %563 = vector.load %arg3[%c0_142, %c0_143] : memref<64x128xf32, #tpu.memory_space<vmem>>, vector<64x128xf32>
    %cst_144 = arith.constant dense<0.000000e+00> : vector<8x128xf32>
    %564 = tpu.matmul %562, %563, %cst_144 {dimension_numbers = #tpu.dot_dimension_numbers<[1], [0], [0], [1], [0, 0, 1, 1], [], []>} : vector<8x64xf32>, vector<64x128xf32>, vector<8x128xf32> -> vector<8x128xf32>
    %c0_145 = arith.constant 0 : index
    %c0_146 = arith.constant 0 : index
    %565 = vector.load %arg4[%c0_145, %c0_146] : memref<1x128xf32, #tpu.memory_space<vmem>>, vector<1x128xf32>
    %566 = vector.broadcast %565 : vector<1x128xf32> to vector<8x128xf32>
    %567 = arith.addf %564, %566 : vector<8x128xf32>
    %cst_147 = arith.constant dense<0xFF800000> : vector<8xf32>
    %568 = vector.multi_reduction <maximumf>, %567, %cst_147 [1] : vector<8x128xf32> to vector<8xf32>
    %569 = vector.shape_cast %568 : vector<8xf32> to vector<8x1xf32>
    %570 = vector.broadcast %569 : vector<8x1xf32> to vector<8x128xf32>
    %571 = arith.subf %567, %570 : vector<8x128xf32>
    %572 = math.exp %571 : vector<8x128xf32>
    %cst_148 = arith.constant dense<0.000000e+00> : vector<8xf32>
    %573 = vector.multi_reduction <add>, %572, %cst_148 [1] : vector<8x128xf32> to vector<8xf32>
    %574 = vector.shape_cast %573 : vector<8xf32> to vector<8x1xf32>
    %575 = tpu.reciprocal %574 {approx = true} : vector<8x1xf32> -> vector<8x1xf32>
    %576 = arith.mulf %574, %575 : vector<8x1xf32>
    %cst_149 = arith.constant 2.000000e+00 : f32
    %577 = vector.broadcast %cst_149 : f32 to vector<8x1xf32>
    %578 = arith.subf %577, %576 : vector<8x1xf32>
    %579 = arith.mulf %575, %578 : vector<8x1xf32>
    %580 = vector.broadcast %579 : vector<8x1xf32> to vector<8x128xf32>
    %581 = arith.mulf %572, %580 : vector<8x128xf32>
    %c0_150 = arith.constant 0 : index
    %c0_151 = arith.constant 0 : index
    %582 = vector.load %arg5[%c0_150, %c0_151] : memref<8x128xf32, #tpu.memory_space<vmem>>, vector<8x128xf32>
    tpu.vector_store %arg5[%c0_150, %c0_151], %581 {strides = array<i32>} : memref<8x128xf32, #tpu.memory_space<vmem>>, vector<8x128xf32>,
    return
  }
  func.func @transform_0(%arg0: i32) -> (i32, i32, i32) {
    %c0_i32 = arith.constant 0 : i32
    %c0_i32_0 = arith.constant 0 : i32
    %c0_i32_1 = arith.constant 0 : i32
    return %c0_i32, %arg0, %c0_i32_0 : i32, i32, i32
  }
  func.func @transform_1(%arg0: i32) -> (i32, i32) {
    %c0_i32 = arith.constant 0 : i32
    %c0_i32_0 = arith.constant 0 : i32
    %c0_i32_1 = arith.constant 0 : i32
    return %c0_i32, %c0_i32_0 : i32, i32
  }
  func.func @transform_2(%arg0: i32) -> (i32, i32) {
    %c0_i32 = arith.constant 0 : i32
    %c0_i32_0 = arith.constant 0 : i32
    %c0_i32_1 = arith.constant 0 : i32
    return %c0_i32, %c0_i32_0 : i32, i32
  }
  func.func @transform_3(%arg0: i32) -> (i32, i32) {
    %c0_i32 = arith.constant 0 : i32
    %c0_i32_0 = arith.constant 0 : i32
    %c0_i32_1 = arith.constant 0 : i32
    return %c0_i32, %c0_i32_0 : i32, i32
  }
  func.func @transform_4(%arg0: i32) -> (i32, i32) {
    %c0_i32 = arith.constant 0 : i32
    %c0_i32_0 = arith.constant 0 : i32
    return %arg0, %c0_i32 : i32, i32
  }
}

</mosaic_0001>

<llo_original>
// kernel: mul.3
$region0: #{mul.3}
  #allocation0 [shape = 's32[1]{0}', space=sflag, size = 0x4, scoped, tag = 'scoped memory for mul.3']
  %s0 = inlined_call_operand.vmem [shape: f32[256], index: 0, kind: input, shape index: {}]
  %s1 = inlined_call_operand.vmem [shape: f32[256], index: 1, kind: input, shape index: {}]
  %s2 = inlined_call_operand.vmem [shape: f32[256], index: 2, kind: output, shape index: {}]
  %v3 = vld [vmem:[%s0] sm:$0x3]
  %v4 = vld [vmem:[%s1] sm:$0x3]
  %5 = xla_tuple %v3, %v4
  %6 = xla_tuple %5
  %v7 = vmul.f32 %v3, %v4
  %8 = xla_tuple %v7
  %9 = vst [vmem:[%s2] sm:$0x3] %v7

// kernel: lstm_forward.1
$region0: #{lstm_forward.1}
  #allocation0 [shape = 'u32[]', space=smem, size = 0x4, offset = 0x4, fixed_abs, tag = 'smem constant byte address 0x4 - core index']
  #allocation1 [shape = 'u32[144,128]{1,0:T(1,128)}', space=vmem, size = 0x12000, scoped, tag = 'internal scratch']
  %s0 = inlined_call_operand.vmem [shape: f32[28,8,256], index: 0, kind: input, shape index: {}]
  %s1 = inlined_call_operand.vmem [shape: f32[64,256], index: 1, kind: input, shape index: {}]
  %s2 = inlined_call_operand.vmem [shape: f32[64,128], index: 2, kind: input, shape index: {}]
  %s3 = inlined_call_operand.vmem [shape: f32[1,128], index: 3, kind: input, shape index: {}]
  %s4 = inlined_call_operand.vmem [shape: f32[8,128], index: 4, kind: output, shape index: {}]
  %s5 = sld [smem:[#allocation0]]
  $region26: #{lstm_forward.1} parent=0
    _
  %s7 = ssub.s32 1, %s5
  %s8 = scalar_select 0, %s7, %s5
  // Predicated region
  $region2: #{lstm_forward.1} parent=0 // pred_check
    _
  $region3: #{lstm_forward.1} parent=0 // pred_check_branch
    %10 = sbr.rel (0) target = $region5
  $region4: #{lstm_forward.1} parent=0 // pred_region
    _
  $region5: #{lstm_forward.1} parent=0 // pred_fallthru
    _
  // Predicated region
  $region6: #{lstm_forward.1} parent=0 // pred_check
    _
  $region7: #{lstm_forward.1} parent=0 // pred_check_branch
    %12 = sbr.rel (0) target = $region9
  $region8: #{lstm_forward.1} parent=0 // pred_region
    _
  $region9: #{lstm_forward.1} parent=0 // pred_fallthru
    _
  // Predicated region
  $region10: #{lstm_forward.1} parent=0 // pred_check
    _
  $region11: #{lstm_forward.1} parent=0 // pred_check_branch
    %14 = sbr.rel (0) target = $region13
  $region12: #{lstm_forward.1} parent=0 // pred_region
    _
  $region13: #{lstm_forward.1} parent=0 // pred_fallthru
    _
  // Predicated region
  $region14: #{lstm_forward.1} parent=0 // pred_check
    _
  $region15: #{lstm_forward.1} parent=0 // pred_check_branch
    %16 = sbr.rel (0) target = $region17
  $region16: #{lstm_forward.1} parent=0 // pred_region
    _
  $region17: #{lstm_forward.1} parent=0 // pred_fallthru
    _
  %v17 = vld [vmem:[%s1] sm:$0xff]
  %v18 = vld [vmem:[%s1 + $0x8] sm:$0xff]
  %v19 = vld [vmem:[%s1 + $0x10] sm:$0xff]
  %v20 = vld [vmem:[%s1 + $0x18] sm:$0xff]
  %v21 = vld [vmem:[%s1 + $0x20] sm:$0xff]
  %v22 = vld [vmem:[%s1 + $0x28] sm:$0xff]
  %v23 = vld [vmem:[%s1 + $0x30] sm:$0xff]
  %v24 = vld [vmem:[%s1 + $0x38] sm:$0xff]
  %v25 = vld [vmem:[%s1 + $0x40] sm:$0xff]
  %v26 = vld [vmem:[%s1 + $0x48] sm:$0xff]
  %v27 = vld [vmem:[%s1 + $0x50] sm:$0xff]
  %v28 = vld [vmem:[%s1 + $0x58] sm:$0xff]
  %v29 = vld [vmem:[%s1 + $0x60] sm:$0xff]
  %v30 = vld [vmem:[%s1 + $0x68] sm:$0xff]
  %v31 = vld [vmem:[%s1 + $0x70] sm:$0xff]
  %v32 = vld [vmem:[%s1 + $0x78] sm:$0xff]
  %v33 = vld [vmem:[%s0] sm:$0xff]
  %v34 = vld [vmem:[%s0 + $0x8] sm:$0xff]
  %vm35 = vcmask 523264
  %v37 = vsel %vm35, 0.0, 0
  %39 = vmatprep.subr.mxu0 0.0
  %40 = vmatpush1.msra.mxu0 0.0
  %41 = vmatprep.subr.mxu0 0.0
  %42 = vmatpush1.msra.mxu0 0.0
  %43 = vmatprep.subr.mxu0 0.0
  %44 = vmatpush1.msra.mxu0 0.0
  %45 = vmatprep.subr.mxu0 0.0
  %46 = vmatpush1.msra.mxu0 0.0
  %47 = vmatprep.subr.mxu0 0.0
  %48 = vmatpush1.msra.mxu0 0.0
  %49 = vmatprep.subr.mxu0 0.0
  %50 = vmatpush1.msra.mxu0 0.0
  %51 = vmatprep.subr.mxu0 0.0
  %52 = vmatpush1.msra.mxu0 0.0
  %53 = vmatprep.subr.mxu0 0.0
  %54 = vmatpush1.msra.mxu0 0.0
  %55 = vmatprep.subr.mxu0 %v32
  %56 = vmatpush1.msra.mxu0 %v31
  %57 = vmatprep.subr.mxu0 %v30
  %58 = vmatpush1.msra.mxu0 %v29
  %59 = vmatprep.subr.mxu0 %v28
  %60 = vmatpush1.msra.mxu0 %v27
  %61 = vmatprep.subr.mxu0 %v26
  %62 = vmatpush1.msra.mxu0 %v25
  %63 = vmatprep.subr.mxu0 %v24
  %64 = vmatpush1.msra.mxu0 %v23
  %65 = vmatprep.subr.mxu0 %v22
  %66 = vmatpush1.msra.mxu0 %v21
  %67 = vmatprep.subr.mxu0 %v20
  %68 = vmatpush1.msra.mxu0 %v19
  %69 = vmatprep.subr.mxu0 %v18
  %70 = vmatpush1.msra.mxu0 %v17
  %71 = vmatprep.subr.mxu0 0.0
  %72 = vmatpush2.msra.mxu0 0.0
  %73 = vmatprep.subr.mxu0 0.0
  %74 = vmatpush2.msra.mxu0 0.0
  %75 = vmatprep.subr.mxu0 0.0
  %76 = vmatpush2.msra.mxu0 0.0
  %77 = vmatprep.subr.mxu0 0.0
  %78 = vmatpush2.msra.mxu0 0.0
  %79 = vmatprep.subr.mxu0 0.0
  %80 = vmatpush2.msra.mxu0 0.0
  %81 = vmatprep.subr.mxu0 0.0
  %82 = vmatpush2.msra.mxu0 0.0
  %83 = vmatprep.subr.mxu0 0.0
  %84 = vmatpush2.msra.mxu0 0.0
  %85 = vmatprep.subr.mxu0 0.0
  %86 = vmatpush2.msra.mxu0 0.0
  %87 = vmatprep.subr.mxu0 0.0
  %88 = vmatpush2.msra.mxu0 0.0
  %89 = vmatprep.subr.mxu0 0.0
  %90 = vmatpush2.msra.mxu0 0.0
  %91 = vmatprep.subr.mxu0 0.0
  %92 = vmatpush2.msra.mxu0 0.0
  %93 = vmatprep.subr.mxu0 0.0
  %94 = vmatpush2.msra.mxu0 0.0
  %95 = vmatprep.subr.mxu0 0.0
  %96 = vmatpush2.msra.mxu0 0.0
  %97 = vmatprep.subr.mxu0 0.0
  %98 = vmatpush2.msra.mxu0 0.0
  %99 = vmatprep.subr.mxu0 0.0
  %100 = vmatpush2.msra.mxu0 0.0
  %101 = vmatprep.subr.mxu0 0.0
  %102 = vmatpush2.msra.mxu0 0.0
  %103 = vmatprep.mubr.f32.mxu0 0.0
  %104 = vmatmul.mubr.f32.gmra.mxu0 %v37
  %v105 = vpop.f32.mrf.mxu0
  %v106 = vadd.f32 0.0, %v105
  %v107 = vpop.f32.mrf.mxu0
  %v108 = vadd.f32 0.0, %v107
  %109 = vdwg.mxu0
  %v110 = vadd.f32 %v33, %v106
  %v111 = vadd.f32 %v34, %v108
  %v112 = vtanh.pop %v110
  %v113 = vtanh.pop %v111
  %v114 = vmul.f32 %v112, 0.5
  %v115 = vmul.f32 %v113, 0.5
  %v116 = vadd.f32 %v114, 0.5
  %v117 = vadd.f32 %v115, 0.5
  %v118 = vmul.f32 %v116, 0.0
  %120 = vrot.lane.b32.xlu0 %v113, 64
  %v121 = vpop.permute.xlu0 %120
  %v123 = vmul.f32 %v116, %v121
  %125 = vrot.lane.b32.xlu0 %v123, 64
  %v126 = vpop.permute.xlu0 %125
  %v128 = vadd.f32 %v118, %v126
  %v129 = vtanh.pop %v128
  %131 = vrot.lane.b32.xlu0 %v129, 64
  %v132 = vpop.permute.xlu0 %131
  %v134 = vmul.f32 %v117, %v132
  %s135 = scalar_lea.vmem %s0, 16
  %v136 = vld [vmem:[%s135] sm:$0xff]
  %v137 = vld [vmem:[%s135 + $0x8] sm:$0xff]
  %v139 = vsel %vm35, %v134, 0
  %141 = vmatprep.subr.mxu0 0.0
  %142 = vmatpush1.msra.mxu0 0.0
  %143 = vmatprep.subr.mxu0 0.0
  %144 = vmatpush1.msra.mxu0 0.0
  %145 = vmatprep.subr.mxu0 0.0
  %146 = vmatpush1.msra.mxu0 0.0
  %147 = vmatprep.subr.mxu0 0.0
  %148 = vmatpush1.msra.mxu0 0.0
  %149 = vmatprep.subr.mxu0 0.0
  %150 = vmatpush1.msra.mxu0 0.0
  %151 = vmatprep.subr.mxu0 0.0
  %152 = vmatpush1.msra.mxu0 0.0
  %153 = vmatprep.subr.mxu0 0.0
  %154 = vmatpush1.msra.mxu0 0.0
  %155 = vmatprep.subr.mxu0 0.0
  %156 = vmatpush1.msra.mxu0 0.0
  %157 = vmatprep.subr.mxu0 %v32
  %158 = vmatpush1.msra.mxu0 %v31
  %159 = vmatprep.subr.mxu0 %v30
  %160 = vmatpush1.msra.mxu0 %v29
  %161 = vmatprep.subr.mxu0 %v28
  %162 = vmatpush1.msra.mxu0 %v27
  %163 = vmatprep.subr.mxu0 %v26
  %164 = vmatpush1.msra.mxu0 %v25
  %165 = vmatprep.subr.mxu0 %v24
  %166 = vmatpush1.msra.mxu0 %v23
  %167 = vmatprep.subr.mxu0 %v22
  %168 = vmatpush1.msra.mxu0 %v21
  %169 = vmatprep.subr.mxu0 %v20
  %170 = vmatpush1.msra.mxu0 %v19
  %171 = vmatprep.subr.mxu0 %v18
  %172 = vmatpush1.msra.mxu0 %v17
  %173 = vmatprep.subr.mxu0 0.0
  %174 = vmatpush2.msra.mxu0 0.0
  %175 = vmatprep.subr.mxu0 0.0
  %176 = vmatpush2.msra.mxu0 0.0
  %177 = vmatprep.subr.mxu0 0.0
  %178 = vmatpush2.msra.mxu0 0.0
  %179 = vmatprep.subr.mxu0 0.0
  %180 = vmatpush2.msra.mxu0 0.0
  %181 = vmatprep.subr.mxu0 0.0
  %182 = vmatpush2.msra.mxu0 0.0
  %183 = vmatprep.subr.mxu0 0.0
  %184 = vmatpush2.msra.mxu0 0.0
  %185 = vmatprep.subr.mxu0 0.0
  %186 = vmatpush2.msra.mxu0 0.0
  %187 = vmatprep.subr.mxu0 0.0
  %188 = vmatpush2.msra.mxu0 0.0
  %189 = vmatprep.subr.mxu0 0.0
  %190 = vmatpush2.msra.mxu0 0.0
  %191 = vmatprep.subr.mxu0 0.0
  %192 = vmatpush2.msra.mxu0 0.0
  %193 = vmatprep.subr.mxu0 0.0
  %194 = vmatpush2.msra.mxu0 0.0
  %195 = vmatprep.subr.mxu0 0.0
  %196 = vmatpush2.msra.mxu0 0.0
  %197 = vmatprep.subr.mxu0 0.0
  %198 = vmatpush2.msra.mxu0 0.0
  %199 = vmatprep.subr.mxu0 0.0
  %200 = vmatpush2.msra.mxu0 0.0
  %201 = vmatprep.subr.mxu0 0.0
  %202 = vmatpush2.msra.mxu0 0.0
  %203 = vmatprep.subr.mxu0 0.0
  %204 = vmatpush2.msra.mxu0 0.0
  %205 = vmatprep.mubr.f32.mxu0 0.0
  %206 = vmatmul.mubr.f32.gmra.mxu0 %v139
  %v207 = vpop.f32.mrf.mxu0
  %v208 = vadd.f32 0.0, %v207
  %v209 = vpop.f32.mrf.mxu0
  %v210 = vadd.f32 0.0, %v209
  %211 = vdwg.mxu0
  %v212 = vadd.f32 %v136, %v208
  %v213 = vadd.f32 %v137, %v210
  %v214 = vtanh.pop %v212
  %v215 = vtanh.pop %v213
  %v216 = vmul.f32 %v214, 0.5
  %v217 = vmul.f32 %v215, 0.5
  %v218 = vadd.f32 %v216, 0.5
  %v219 = vadd.f32 %v217, 0.5
  %v220 = vmul.f32 %v218, %v128
  %222 = vrot.lane.b32.xlu0 %v215, 64
  %v223 = vpop.permute.xlu0 %222
  %v225 = vmul.f32 %v218, %v223
  %227 = vrot.lane.b32.xlu0 %v225, 64
  %v228 = vpop.permute.xlu0 %227
  %v230 = vadd.f32 %v220, %v228
  %v231 = vtanh.pop %v230
  %233 = vrot.lane.b32.xlu0 %v231, 64
  %v234 = vpop.permute.xlu0 %233
  %v236 = vmul.f32 %v219, %v234
  %s237 = scalar_lea.vmem %s0, 32
  %v238 = vld [vmem:[%s237] sm:$0xff]
  %v239 = vld [vmem:[%s237 + $0x8] sm:$0xff]
  %v241 = vsel %vm35, %v236, 0
  %243 = vmatprep.subr.mxu0 0.0
  %244 = vmatpush1.msra.mxu0 0.0
  %245 = vmatprep.subr.mxu0 0.0
  %246 = vmatpush1.msra.mxu0 0.0
  %247 = vmatprep.subr.mxu0 0.0
  %248 = vmatpush1.msra.mxu0 0.0
  %249 = vmatprep.subr.mxu0 0.0
  %250 = vmatpush1.msra.mxu0 0.0
  %251 = vmatprep.subr.mxu0 0.0
  %252 = vmatpush1.msra.mxu0 0.0
  %253 = vmatprep.subr.mxu0 0.0
  %254 = vmatpush1.msra.mxu0 0.0
  %255 = vmatprep.subr.mxu0 0.0
  %256 = vmatpush1.msra.mxu0 0.0
  %257 = vmatprep.subr.mxu0 0.0
  %258 = vmatpush1.msra.mxu0 0.0
  %259 = vmatprep.subr.mxu0 %v32
  %260 = vmatpush1.msra.mxu0 %v31
  %261 = vmatprep.subr.mxu0 %v30
  %262 = vmatpush1.msra.mxu0 %v29
  %263 = vmatprep.subr.mxu0 %v28
  %264 = vmatpush1.msra.mxu0 %v27
  %265 = vmatprep.subr.mxu0 %v26
  %266 = vmatpush1.msra.mxu0 %v25
  %267 = vmatprep.subr.mxu0 %v24
  %268 = vmatpush1.msra.mxu0 %v23
  %269 = vmatprep.subr.mxu0 %v22
  %270 = vmatpush1.msra.mxu0 %v21
  %271 = vmatprep.subr.mxu0 %v20
  %272 = vmatpush1.msra.mxu0 %v19
  %273 = vmatprep.subr.mxu0 %v18
  %274 = vmatpush1.msra.mxu0 %v17
  %275 = vmatprep.subr.mxu0 0.0
  %276 = vmatpush2.msra.mxu0 0.0
  %277 = vmatprep.subr.mxu0 0.0
  %278 = vmatpush2.msra.mxu0 0.0
  %279 = vmatprep.subr.mxu0 0.0
  %280 = vmatpush2.msra.mxu0 0.0
  %281 = vmatprep.subr.mxu0 0.0
  %282 = vmatpush2.msra.mxu0 0.0
  %283 = vmatprep.subr.mxu0 0.0
  %284 = vmatpush2.msra.mxu0 0.0
  %285 = vmatprep.subr.mxu0 0.0
  %286 = vmatpush2.msra.mxu0 0.0
  %287 = vmatprep.subr.mxu0 0.0
  %288 = vmatpush2.msra.mxu0 0.0
  %289 = vmatprep.subr.mxu0 0.0
  %290 = vmatpush2.msra.mxu0 0.0
  %291 = vmatprep.subr.mxu0 0.0
  %292 = vmatpush2.msra.mxu0 0.0
  %293 = vmatprep.subr.mxu0 0.0
  %294 = vmatpush2.msra.mxu0 0.0
  %295 = vmatprep.subr.mxu0 0.0
  %296 = vmatpush2.msra.mxu0 0.0
  %297 = vmatprep.subr.mxu0 0.0
  %298 = vmatpush2.msra.mxu0 0.0
  %299 = vmatprep.subr.mxu0 0.0
  %300 = vmatpush2.msra.mxu0 0.0
  %301 = vmatprep.subr.mxu0 0.0
  %302 = vmatpush2.msra.mxu0 0.0
  %303 = vmatprep.subr.mxu0 0.0
  %304 = vmatpush2.msra.mxu0 0.0
  %305 = vmatprep.subr.mxu0 0.0
  %306 = vmatpush2.msra.mxu0 0.0
  %307 = vmatprep.mubr.f32.mxu0 0.0
  %308 = vmatmul.mubr.f32.gmra.mxu0 %v241
  %v309 = vpop.f32.mrf.mxu0
  %v310 = vadd.f32 0.0, %v309
  %v311 = vpop.f32.mrf.mxu0
  %v312 = vadd.f32 0.0, %v311
  %313 = vdwg.mxu0
  %v314 = vadd.f32 %v238, %v310
  %v315 = vadd.f32 %v239, %v312
  %v316 = vtanh.pop %v314
  %v317 = vtanh.pop %v315
  %v318 = vmul.f32 %v316, 0.5
  %v319 = vmul.f32 %v317, 0.5
  %v320 = vadd.f32 %v318, 0.5
  %v321 = vadd.f32 %v319, 0.5
  %v322 = vmul.f32 %v320, %v230
  %324 = vrot.lane.b32.xlu0 %v317, 64
  %v325 = vpop.permute.xlu0 %324
  %v327 = vmul.f32 %v320, %v325
  %329 = vrot.lane.b32.xlu0 %v327, 64
  %v330 = vpop.permute.xlu0 %329
  %v332 = vadd.f32 %v322, %v330
  %v333 = vtanh.pop %v332
  %335 = vrot.lane.b32.xlu0 %v333, 64
  %v336 = vpop.permute.xlu0 %335
  %v338 = vmul.f32 %v321, %v336
  %s339 = scalar_lea.vmem %s0, 48
  %v340 = vld [vmem:[%s339] sm:$0xff]
  %v341 = vld [vmem:[%s339 + $0x8] sm:$0xff]
  %v343 = vsel %vm35, %v338, 0
  %345 = vmatprep.subr.mxu0 0.0
  %346 = vmatpush1.msra.mxu0 0.0
  %347 = vmatprep.subr.mxu0 0.0
  %348 = vmatpush1.msra.mxu0 0.0
  %349 = vmatprep.subr.mxu0 0.0
  %350 = vmatpush1.msra.mxu0 0.0
  %351 = vmatprep.subr.mxu0 0.0
  %352 = vmatpush1.msra.mxu0 0.0
  %353 = vmatprep.subr.mxu0 0.0
  %354 = vmatpush1.msra.mxu0 0.0
  %355 = vmatprep.subr.mxu0 0.0
  %356 = vmatpush1.msra.mxu0 0.0
  %357 = vmatprep.subr.mxu0 0.0
  %358 = vmatpush1.msra.mxu0 0.0
  %359 = vmatprep.subr.mxu0 0.0
  %360 = vmatpush1.msra.mxu0 0.0
  %361 = vmatprep.subr.mxu0 %v32
  %362 = vmatpush1.msra.mxu0 %v31
  %363 = vmatprep.subr.mxu0 %v30
  %364 = vmatpush1.msra.mxu0 %v29
  %365 = vmatprep.subr.mxu0 %v28
  %366 = vmatpush1.msra.mxu0 %v27
  %367 = vmatprep.subr.mxu0 %v26
  %368 = vmatpush1.msra.mxu0 %v25
  %369 = vmatprep.subr.mxu0 %v24
  %370 = vmatpush1.msra.mxu0 %v23
  %371 = vmatprep.subr.mxu0 %v22
  %372 = vmatpush1.msra.mxu0 %v21
  %373 = vmatprep.subr.mxu0 %v20
  %374 = vmatpush1.msra.mxu0 %v19
  %375 = vmatprep.subr.mxu0 %v18
  %376 = vmatpush1.msra.mxu0 %v17
  %377 = vmatprep.subr.mxu0 0.0
  %378 = vmatpush2.msra.mxu0 0.0
  %379 = vmatprep.subr.mxu0 0.0
  %380 = vmatpush2.msra.mxu0 0.0
  %381 = vmatprep.subr.mxu0 0.0
  %382 = vmatpush2.msra.mxu0 0.0
  %383 = vmatprep.subr.mxu0 0.0
  %384 = vmatpush2.msra.mxu0 0.0
  %385 = vmatprep.subr.mxu0 0.0
  %386 = vmatpush2.msra.mxu0 0.0
  %387 = vmatprep.subr.mxu0 0.0
  %388 = vmatpush2.msra.mxu0 0.0
  %389 = vmatprep.subr.mxu0 0.0
  %390 = vmatpush2.msra.mxu0 0.0
  %391 = vmatprep.subr.mxu0 0.0
  %392 = vmatpush2.msra.mxu0 0.0
  %393 = vmatprep.subr.mxu0 0.0
  %394 = vmatpush2.msra.mxu0 0.0
  %395 = vmatprep.subr.mxu0 0.0
  %396 = vmatpush2.msra.mxu0 0.0
  %397 = vmatprep.subr.mxu0 0.0
  %398 = vmatpush2.msra.mxu0 0.0
  %399 = vmatprep.subr.mxu0 0.0
  %400 = vmatpush2.msra.mxu0 0.0
  %401 = vmatprep.subr.mxu0 0.0
  %402 = vmatpush2.msra.mxu0 0.0
  %403 = vmatprep.subr.mxu0 0.0
  %404 = vmatpush2.msra.mxu0 0.0
  %405 = vmatprep.subr.mxu0 0.0
  %406 = vmatpush2.msra.mxu0 0.0
  %407 = vmatprep.subr.mxu0 0.0
  %408 = vmatpush2.msra.mxu0 0.0
  %409 = vmatprep.mubr.f32.mxu0 0.0
  %410 = vmatmul.mubr.f32.gmra.mxu0 %v343
  %v411 = vpop.f32.mrf.mxu0
  %v412 = vadd.f32 0.0, %v411
  %v413 = vpop.f32.mrf.mxu0
  %v414 = vadd.f32 0.0, %v413
  %415 = vdwg.mxu0
  %v416 = vadd.f32 %v340, %v412
  %v417 = vadd.f32 %v341, %v414
  %v418 = vtanh.pop %v416
  %v419 = vtanh.pop %v417
  %v420 = vmul.f32 %v418, 0.5
  %v421 = vmul.f32 %v419, 0.5
  %v422 = vadd.f32 %v420, 0.5
  %v423 = vadd.f32 %v421, 0.5
  %v424 = vmul.f32 %v422, %v332
  %426 = vrot.lane.b32.xlu0 %v419, 64
  %v427 = vpop.permute.xlu0 %426
  %v429 = vmul.f32 %v422, %v427
  %431 = vrot.lane.b32.xlu0 %v429, 64
  %v432 = vpop.permute.xlu0 %431
  %v434 = vadd.f32 %v424, %v432
  %v435 = vtanh.pop %v434
  %437 = vrot.lane.b32.xlu0 %v435, 64
  %v438 = vpop.permute.xlu0 %437
  %v440 = vmul.f32 %v423, %v438
  %s441 = scalar_lea.vmem %s0, 64
  %v442 = vld [vmem:[%s441] sm:$0xff]
  %v443 = vld [vmem:[%s441 + $0x8] sm:$0xff]
  %v445 = vsel %vm35, %v440, 0
  %447 = vmatprep.subr.mxu0 0.0
  %448 = vmatpush1.msra.mxu0 0.0
  %449 = vmatprep.subr.mxu0 0.0
  %450 = vmatpush1.msra.mxu0 0.0
  %451 = vmatprep.subr.mxu0 0.0
  %452 = vmatpush1.msra.mxu0 0.0
  %453 = vmatprep.subr.mxu0 0.0
  %454 = vmatpush1.msra.mxu0 0.0
  %455 = vmatprep.subr.mxu0 0.0
  %456 = vmatpush1.msra.mxu0 0.0
  %457 = vmatprep.subr.mxu0 0.0
  %458 = vmatpush1.msra.mxu0 0.0
  %459 = vmatprep.subr.mxu0 0.0
  %460 = vmatpush1.msra.mxu0 0.0
  %461 = vmatprep.subr.mxu0 0.0
  %462 = vmatpush1.msra.mxu0 0.0
  %463 = vmatprep.subr.mxu0 %v32
  %464 = vmatpush1.msra.mxu0 %v31
  %465 = vmatprep.subr.mxu0 %v30
  %466 = vmatpush1.msra.mxu0 %v29
  %467 = vmatprep.subr.mxu0 %v28
  %468 = vmatpush1.msra.mxu0 %v27
  %469 = vmatprep.subr.mxu0 %v26
  %470 = vmatpush1.msra.mxu0 %v25
  %471 = vmatprep.subr.mxu0 %v24
  %472 = vmatpush1.msra.mxu0 %v23
  %473 = vmatprep.subr.mxu0 %v22
  %474 = vmatpush1.msra.mxu0 %v21
  %475 = vmatprep.subr.mxu0 %v20
  %476 = vmatpush1.msra.mxu0 %v19
  %477 = vmatprep.subr.mxu0 %v18
  %478 = vmatpush1.msra.mxu0 %v17
  %479 = vmatprep.subr.mxu0 0.0
  %480 = vmatpush2.msra.mxu0 0.0
  %481 = vmatprep.subr.mxu0 0.0
  %482 = vmatpush2.msra.mxu0 0.0
  %483 = vmatprep.subr.mxu0 0.0
  %484 = vmatpush2.msra.mxu0 0.0
  %485 = vmatprep.subr.mxu0 0.0
  %486 = vmatpush2.msra.mxu0 0.0
  %487 = vmatprep.subr.mxu0 0.0
  %488 = vmatpush2.msra.mxu0 0.0
  %489 = vmatprep.subr.mxu0 0.0
  %490 = vmatpush2.msra.mxu0 0.0
  %491 = vmatprep.subr.mxu0 0.0
  %492 = vmatpush2.msra.mxu0 0.0
  %493 = vmatprep.subr.mxu0 0.0
  %494 = vmatpush2.msra.mxu0 0.0
  %495 = vmatprep.subr.mxu0 0.0
  %496 = vmatpush2.msra.mxu0 0.0
  %497 = vmatprep.subr.mxu0 0.0
  %498 = vmatpush2.msra.mxu0 0.0
  %499 = vmatprep.subr.mxu0 0.0
  %500 = vmatpush2.msra.mxu0 0.0
  %501 = vmatprep.subr.mxu0 0.0
  %502 = vmatpush2.msra.mxu0 0.0
  %503 = vmatprep.subr.mxu0 0.0
  %504 = vmatpush2.msra.mxu0 0.0
  %505 = vmatprep.subr.mxu0 0.0
  %506 = vmatpush2.msra.mxu0 0.0
  %507 = vmatprep.subr.mxu0 0.0
  %508 = vmatpush2.msra.mxu0 0.0
  %509 = vmatprep.subr.mxu0 0.0
  %510 = vmatpush2.msra.mxu0 0.0
  %511 = vmatprep.mubr.f32.mxu0 0.0
  %512 = vmatmul.mubr.f32.gmra.mxu0 %v445
  %v513 = vpop.f32.mrf.mxu0
  %v514 = vadd.f32 0.0, %v513
  %v515 = vpop.f32.mrf.mxu0
  %v516 = vadd.f32 0.0, %v515
  %517 = vdwg.mxu0
  %v518 = vadd.f32 %v442, %v514
  %v519 = vadd.f32 %v443, %v516
  %v520 = vtanh.pop %v518
  %v521 = vtanh.pop %v519
  %v522 = vmul.f32 %v520, 0.5
  %v523 = vmul.f32 %v521, 0.5
  %v524 = vadd.f32 %v522, 0.5
  %v525 = vadd.f32 %v523, 0.5
  %v526 = vmul.f32 %v524, %v434
  %528 = vrot.lane.b32.xlu0 %v521, 64
  %v529 = vpop.permute.xlu0 %528
  %v531 = vmul.f32 %v524, %v529
  %533 = vrot.lane.b32.xlu0 %v531, 64
  %v534 = vpop.permute.xlu0 %533
  %v536 = vadd.f32 %v526, %v534
  %v537 = vtanh.pop %v536
  %539 = vrot.lane.b32.xlu0 %v537, 64
  %v540 = vpop.permute.xlu0 %539
  %v542 = vmul.f32 %v525, %v540
  %s543 = scalar_lea.vmem %s0, 80
  %v544 = vld [vmem:[%s543] sm:$0xff]
  %v545 = vld [vmem:[%s543 + $0x8] sm:$0xff]
  %v547 = vsel %vm35, %v542, 0
  %549 = vmatprep.subr.mxu0 0.0
  %550 = vmatpush1.msra.mxu0 0.0
  %551 = vmatprep.subr.mxu0 0.0
  %552 = vmatpush1.msra.mxu0 0.0
  %553 = vmatprep.subr.mxu0 0.0
  %554 = vmatpush1.msra.mxu0 0.0
  %555 = vmatprep.subr.mxu0 0.0
  %556 = vmatpush1.msra.mxu0 0.0
  %557 = vmatprep.subr.mxu0 0.0
  %558 = vmatpush1.msra.mxu0 0.0
  %559 = vmatprep.subr.mxu0 0.0
  %560 = vmatpush1.msra.mxu0 0.0
  %561 = vmatprep.subr.mxu0 0.0
  %562 = vmatpush1.msra.mxu0 0.0
  %563 = vmatprep.subr.mxu0 0.0
  %564 = vmatpush1.msra.mxu0 0.0
  %565 = vmatprep.subr.mxu0 %v32
  %566 = vmatpush1.msra.mxu0 %v31
  %567 = vmatprep.subr.mxu0 %v30
  %568 = vmatpush1.msra.mxu0 %v29
  %569 = vmatprep.subr.mxu0 %v28
  %570 = vmatpush1.msra.mxu0 %v27
  %571 = vmatprep.subr.mxu0 %v26
  %572 = vmatpush1.msra.mxu0 %v25
  %573 = vmatprep.subr.mxu0 %v24
  %574 = vmatpush1.msra.mxu0 %v23
  %575 = vmatprep.subr.mxu0 %v22
  %576 = vmatpush1.msra.mxu0 %v21
  %577 = vmatprep.subr.mxu0 %v20
  %578 = vmatpush1.msra.mxu0 %v19
  %579 = vmatprep.subr.mxu0 %v18
  %580 = vmatpush1.msra.mxu0 %v17
  %581 = vmatprep.subr.mxu0 0.0
  %582 = vmatpush2.msra.mxu0 0.0
  %583 = vmatprep.subr.mxu0 0.0
  %584 = vmatpush2.msra.mxu0 0.0
  %585 = vmatprep.subr.mxu0 0.0
  %586 = vmatpush2.msra.mxu0 0.0
  %587 = vmatprep.subr.mxu0 0.0
  %588 = vmatpush2.msra.mxu0 0.0
  %589 = vmatprep.subr.mxu0 0.0
  %590 = vmatpush2.msra.mxu0 0.0
  %591 = vmatprep.subr.mxu0 0.0
  %592 = vmatpush2.msra.mxu0 0.0
  %593 = vmatprep.subr.mxu0 0.0
  %594 = vmatpush2.msra.mxu0 0.0
  %595 = vmatprep.subr.mxu0 0.0
  %596 = vmatpush2.msra.mxu0 0.0
  %597 = vmatprep.subr.mxu0 0.0
  %598 = vmatpush2.msra.mxu0 0.0
  %599 = vmatprep.subr.mxu0 0.0
  %600 = vmatpush2.msra.mxu0 0.0
  %601 = vmatprep.subr.mxu0 0.0
  %602 = vmatpush2.msra.mxu0 0.0
  %603 = vmatprep.subr.mxu0 0.0
  %604 = vmatpush2.msra.mxu0 0.0
  %605 = vmatprep.subr.mxu0 0.0
  %606 = vmatpush2.msra.mxu0 0.0
  %607 = vmatprep.subr.mxu0 0.0
  %608 = vmatpush2.msra.mxu0 0.0
  %609 = vmatprep.subr.mxu0 0.0
  %610 = vmatpush2.msra.mxu0 0.0
  %611 = vmatprep.subr.mxu0 0.0
  %612 = vmatpush2.msra.mxu0 0.0
  %613 = vmatprep.mubr.f32.mxu0 0.0
  %614 = vmatmul.mubr.f32.gmra.mxu0 %v547
  %v615 = vpop.f32.mrf.mxu0
  %v616 = vadd.f32 0.0, %v615
  %v617 = vpop.f32.mrf.mxu0
  %v618 = vadd.f32 0.0, %v617
  %619 = vdwg.mxu0
  %v620 = vadd.f32 %v544, %v616
  %v621 = vadd.f32 %v545, %v618
  %v622 = vtanh.pop %v620
  %v623 = vtanh.pop %v621
  %v624 = vmul.f32 %v622, 0.5
  %v625 = vmul.f32 %v623, 0.5
  %v626 = vadd.f32 %v624, 0.5
  %v627 = vadd.f32 %v625, 0.5
  %v628 = vmul.f32 %v626, %v536
  %630 = vrot.lane.b32.xlu0 %v623, 64
  %v631 = vpop.permute.xlu0 %630
  %v633 = vmul.f32 %v626, %v631
  %635 = vrot.lane.b32.xlu0 %v633, 64
  %v636 = vpop.permute.xlu0 %635
  %v638 = vadd.f32 %v628, %v636
  %v639 = vtanh.pop %v638
  %641 = vrot.lane.b32.xlu0 %v639, 64
  %v642 = vpop.permute.xlu0 %641
  %v644 = vmul.f32 %v627, %v642
  %s645 = scalar_lea.vmem %s0, 96
  %v646 = vld [vmem:[%s645] sm:$0xff]
  %v647 = vld [vmem:[%s645 + $0x8] sm:$0xff]
  %v649 = vsel %vm35, %v644, 0
  %651 = vmatprep.subr.mxu0 0.0
  %652 = vmatpush1.msra.mxu0 0.0
  %653 = vmatprep.subr.mxu0 0.0
  %654 = vmatpush1.msra.mxu0 0.0
  %655 = vmatprep.subr.mxu0 0.0
  %656 = vmatpush1.msra.mxu0 0.0
  %657 = vmatprep.subr.mxu0 0.0
  %658 = vmatpush1.msra.mxu0 0.0
  %659 = vmatprep.subr.mxu0 0.0
  %660 = vmatpush1.msra.mxu0 0.0
  %661 = vmatprep.subr.mxu0 0.0
  %662 = vmatpush1.msra.mxu0 0.0
  %663 = vmatprep.subr.mxu0 0.0
  %664 = vmatpush1.msra.mxu0 0.0
  %665 = vmatprep.subr.mxu0 0.0
  %666 = vmatpush1.msra.mxu0 0.0
  %667 = vmatprep.subr.mxu0 %v32
  %668 = vmatpush1.msra.mxu0 %v31
  %669 = vmatprep.subr.mxu0 %v30
  %670 = vmatpush1.msra.mxu0 %v29
  %671 = vmatprep.subr.mxu0 %v28
  %672 = vmatpush1.msra.mxu0 %v27
  %673 = vmatprep.subr.mxu0 %v26
  %674 = vmatpush1.msra.mxu0 %v25
  %675 = vmatprep.subr.mxu0 %v24
  %676 = vmatpush1.msra.mxu0 %v23
  %677 = vmatprep.subr.mxu0 %v22
  %678 = vmatpush1.msra.mxu0 %v21
  %679 = vmatprep.subr.mxu0 %v20
  %680 = vmatpush1.msra.mxu0 %v19
  %681 = vmatprep.subr.mxu0 %v18
  %682 = vmatpush1.msra.mxu0 %v17
  %683 = vmatprep.subr.mxu0 0.0
  %684 = vmatpush2.msra.mxu0 0.0
  %685 = vmatprep.subr.mxu0 0.0
  %686 = vmatpush2.msra.mxu0 0.0
  %687 = vmatprep.subr.mxu0 0.0
  %688 = vmatpush2.msra.mxu0 0.0
  %689 = vmatprep.subr.mxu0 0.0
  %690 = vmatpush2.msra.mxu0 0.0
  %691 = vmatprep.subr.mxu0 0.0
  %692 = vmatpush2.msra.mxu0 0.0
  %693 = vmatprep.subr.mxu0 0.0
  %694 = vmatpush2.msra.mxu0 0.0
  %695 = vmatprep.subr.mxu0 0.0
  %696 = vmatpush2.msra.mxu0 0.0
  %697 = vmatprep.subr.mxu0 0.0
  %698 = vmatpush2.msra.mxu0 0.0
  %699 = vmatprep.subr.mxu0 0.0
  %700 = vmatpush2.msra.mxu0 0.0
  %701 = vmatprep.subr.mxu0 0.0
  %702 = vmatpush2.msra.mxu0 0.0
  %703 = vmatprep.subr.mxu0 0.0
  %704 = vmatpush2.msra.mxu0 0.0
  %705 = vmatprep.subr.mxu0 0.0
  %706 = vmatpush2.msra.mxu0 0.0
  %707 = vmatprep.subr.mxu0 0.0
  %708 = vmatpush2.msra.mxu0 0.0
  %709 = vmatprep.subr.mxu0 0.0
  %710 = vmatpush2.msra.mxu0 0.0
  %711 = vmatprep.subr.mxu0 0.0
  %712 = vmatpush2.msra.mxu0 0.0
  %713 = vmatprep.subr.mxu0 0.0
  %714 = vmatpush2.msra.mxu0 0.0
  %715 = vmatprep.mubr.f32.mxu0 0.0
  %716 = vmatmul.mubr.f32.gmra.mxu0 %v649
  %v717 = vpop.f32.mrf.mxu0
  %v718 = vadd.f32 0.0, %v717
  %v719 = vpop.f32.mrf.mxu0
  %v720 = vadd.f32 0.0, %v719
  %721 = vdwg.mxu0
  %v722 = vadd.f32 %v646, %v718
  %v723 = vadd.f32 %v647, %v720
  %v724 = vtanh.pop %v722
  %v725 = vtanh.pop %v723
  %v726 = vmul.f32 %v724, 0.5
  %v727 = vmul.f32 %v725, 0.5
  %v728 = vadd.f32 %v726, 0.5
  %v729 = vadd.f32 %v727, 0.5
  %v730 = vmul.f32 %v728, %v638
  %732 = vrot.lane.b32.xlu0 %v725, 64
  %v733 = vpop.permute.xlu0 %732
  %v735 = vmul.f32 %v728, %v733
  %737 = vrot.lane.b32.xlu0 %v735, 64
  %v738 = vpop.permute.xlu0 %737
  %v740 = vadd.f32 %v730, %v738
  %v741 = vtanh.pop %v740
  %743 = vrot.lane.b32.xlu0 %v741, 64
  %v744 = vpop.permute.xlu0 %743
  %v746 = vmul.f32 %v729, %v744
  %s747 = scalar_lea.vmem %s0, 112
  %v748 = vld [vmem:[%s747] sm:$0xff]
  %v749 = vld [vmem:[%s747 + $0x8] sm:$0xff]
  %v751 = vsel %vm35, %v746, 0
  %753 = vmatprep.subr.mxu0 0.0
  %754 = vmatpush1.msra.mxu0 0.0
  %755 = vmatprep.subr.mxu0 0.0
  %756 = vmatpush1.msra.mxu0 0.0
  %757 = vmatprep.subr.mxu0 0.0
  %758 = vmatpush1.msra.mxu0 0.0
  %759 = vmatprep.subr.mxu0 0.0
  %760 = vmatpush1.msra.mxu0 0.0
  %761 = vmatprep.subr.mxu0 0.0
  %762 = vmatpush1.msra.mxu0 0.0
  %763 = vmatprep.subr.mxu0 0.0
  %764 = vmatpush1.msra.mxu0 0.0
  %765 = vmatprep.subr.mxu0 0.0
  %766 = vmatpush1.msra.mxu0 0.0
  %767 = vmatprep.subr.mxu0 0.0
  %768 = vmatpush1.msra.mxu0 0.0
  %769 = vmatprep.subr.mxu0 %v32
  %770 = vmatpush1.msra.mxu0 %v31
  %771 = vmatprep.subr.mxu0 %v30
  %772 = vmatpush1.msra.mxu0 %v29
  %773 = vmatprep.subr.mxu0 %v28
  %774 = vmatpush1.msra.mxu0 %v27
  %775 = vmatprep.subr.mxu0 %v26
  %776 = vmatpush1.msra.mxu0 %v25
  %777 = vmatprep.subr.mxu0 %v24
  %778 = vmatpush1.msra.mxu0 %v23
  %779 = vmatprep.subr.mxu0 %v22
  %780 = vmatpush1.msra.mxu0 %v21
  %781 = vmatprep.subr.mxu0 %v20
  %782 = vmatpush1.msra.mxu0 %v19
  %783 = vmatprep.subr.mxu0 %v18
  %784 = vmatpush1.msra.mxu0 %v17
  %785 = vmatprep.subr.mxu0 0.0
  %786 = vmatpush2.msra.mxu0 0.0
  %787 = vmatprep.subr.mxu0 0.0
  %788 = vmatpush2.msra.mxu0 0.0
  %789 = vmatprep.subr.mxu0 0.0
  %790 = vmatpush2.msra.mxu0 0.0
  %791 = vmatprep.subr.mxu0 0.0
  %792 = vmatpush2.msra.mxu0 0.0
  %793 = vmatprep.subr.mxu0 0.0
  %794 = vmatpush2.msra.mxu0 0.0
  %795 = vmatprep.subr.mxu0 0.0
  %796 = vmatpush2.msra.mxu0 0.0
  %797 = vmatprep.subr.mxu0 0.0
  %798 = vmatpush2.msra.mxu0 0.0
  %799 = vmatprep.subr.mxu0 0.0
  %800 = vmatpush2.msra.mxu0 0.0
  %801 = vmatprep.subr.mxu0 0.0
  %802 = vmatpush2.msra.mxu0 0.0
  %803 = vmatprep.subr.mxu0 0.0
  %804 = vmatpush2.msra.mxu0 0.0
  %805 = vmatprep.subr.mxu0 0.0
  %806 = vmatpush2.msra.mxu0 0.0
  %807 = vmatprep.subr.mxu0 0.0
  %808 = vmatpush2.msra.mxu0 0.0
  %809 = vmatprep.subr.mxu0 0.0
  %810 = vmatpush2.msra.mxu0 0.0
  %811 = vmatprep.subr.mxu0 0.0
  %812 = vmatpush2.msra.mxu0 0.0
  %813 = vmatprep.subr.mxu0 0.0
  %814 = vmatpush2.msra.mxu0 0.0
  %815 = vmatprep.subr.mxu0 0.0
  %816 = vmatpush2.msra.mxu0 0.0
  %817 = vmatprep.mubr.f32.mxu0 0.0
  %818 = vmatmul.mubr.f32.gmra.mxu0 %v751
  %v819 = vpop.f32.mrf.mxu0
  %v820 = vadd.f32 0.0, %v819
  %v821 = vpop.f32.mrf.mxu0
  %v822 = vadd.f32 0.0, %v821
  %823 = vdwg.mxu0
  %v824 = vadd.f32 %v748, %v820
  %v825 = vadd.f32 %v749, %v822
  %v826 = vtanh.pop %v824
  %v827 = vtanh.pop %v825
  %v828 = vmul.f32 %v826, 0.5
  %v829 = vmul.f32 %v827, 0.5
  %v830 = vadd.f32 %v828, 0.5
  %v831 = vadd.f32 %v829, 0.5
  %v832 = vmul.f32 %v830, %v740
  %834 = vrot.lane.b32.xlu0 %v827, 64
  %v835 = vpop.permute.xlu0 %834
  %v837 = vmul.f32 %v830, %v835
  %839 = vrot.lane.b32.xlu0 %v837, 64
  %v840 = vpop.permute.xlu0 %839
  %v842 = vadd.f32 %v832, %v840
  %v843 = vtanh.pop %v842
  %845 = vrot.lane.b32.xlu0 %v843, 64
  %v846 = vpop.permute.xlu0 %845
  %v848 = vmul.f32 %v831, %v846
  %s849 = scalar_lea.vmem %s0, 128
  %v850 = vld [vmem:[%s849] sm:$0xff]
  %v851 = vld [vmem:[%s849 + $0x8] sm:$0xff]
  %v853 = vsel %vm35, %v848, 0
  %855 = vmatprep.subr.mxu0 0.0
  %856 = vmatpush1.msra.mxu0 0.0
  %857 = vmatprep.subr.mxu0 0.0
  %858 = vmatpush1.msra.mxu0 0.0
  %859 = vmatprep.subr.mxu0 0.0
  %860 = vmatpush1.msra.mxu0 0.0
  %861 = vmatprep.subr.mxu0 0.0
  %862 = vmatpush1.msra.mxu0 0.0
  %863 = vmatprep.subr.mxu0 0.0
  %864 = vmatpush1.msra.mxu0 0.0
  %865 = vmatprep.subr.mxu0 0.0
  %866 = vmatpush1.msra.mxu0 0.0
  %867 = vmatprep.subr.mxu0 0.0
  %868 = vmatpush1.msra.mxu0 0.0
  %869 = vmatprep.subr.mxu0 0.0
  %870 = vmatpush1.msra.mxu0 0.0
  %871 = vmatprep.subr.mxu0 %v32
  %872 = vmatpush1.msra.mxu0 %v31
  %873 = vmatprep.subr.mxu0 %v30
  %874 = vmatpush1.msra.mxu0 %v29
  %875 = vmatprep.subr.mxu0 %v28
  %876 = vmatpush1.msra.mxu0 %v27
  %877 = vmatprep.subr.mxu0 %v26
  %878 = vmatpush1.msra.mxu0 %v25
  %879 = vmatprep.subr.mxu0 %v24
  %880 = vmatpush1.msra.mxu0 %v23
  %881 = vmatprep.subr.mxu0 %v22
  %882 = vmatpush1.msra.mxu0 %v21
  %883 = vmatprep.subr.mxu0 %v20
  %884 = vmatpush1.msra.mxu0 %v19
  %885 = vmatprep.subr.mxu0 %v18
  %886 = vmatpush1.msra.mxu0 %v17
  %887 = vmatprep.subr.mxu0 0.0
  %888 = vmatpush2.msra.mxu0 0.0
  %889 = vmatprep.subr.mxu0 0.0
  %890 = vmatpush2.msra.mxu0 0.0
  %891 = vmatprep.subr.mxu0 0.0
  %892 = vmatpush2.msra.mxu0 0.0
  %893 = vmatprep.subr.mxu0 0.0
  %894 = vmatpush2.msra.mxu0 0.0
  %895 = vmatprep.subr.mxu0 0.0
  %896 = vmatpush2.msra.mxu0 0.0
  %897 = vmatprep.subr.mxu0 0.0
  %898 = vmatpush2.msra.mxu0 0.0
  %899 = vmatprep.subr.mxu0 0.0
  %900 = vmatpush2.msra.mxu0 0.0
  %901 = vmatprep.subr.mxu0 0.0
  %902 = vmatpush2.msra.mxu0 0.0
  %903 = vmatprep.subr.mxu0 0.0
  %904 = vmatpush2.msra.mxu0 0.0
  %905 = vmatprep.subr.mxu0 0.0
  %906 = vmatpush2.msra.mxu0 0.0
  %907 = vmatprep.subr.mxu0 0.0
  %908 = vmatpush2.msra.mxu0 0.0
  %909 = vmatprep.subr.mxu0 0.0
  %910 = vmatpush2.msra.mxu0 0.0
  %911 = vmatprep.subr.mxu0 0.0
  %912 = vmatpush2.msra.mxu0 0.0
  %913 = vmatprep.subr.mxu0 0.0
  %914 = vmatpush2.msra.mxu0 0.0
  %915 = vmatprep.subr.mxu0 0.0
  %916 = vmatpush2.msra.mxu0 0.0
  %917 = vmatprep.subr.mxu0 0.0
  %918 = vmatpush2.msra.mxu0 0.0
  %919 = vmatprep.mubr.f32.mxu0 0.0
  %920 = vmatmul.mubr.f32.gmra.mxu0 %v853
  %v921 = vpop.f32.mrf.mxu0
  %v922 = vadd.f32 0.0, %v921
  %v923 = vpop.f32.mrf.mxu0
  %v924 = vadd.f32 0.0, %v923
  %925 = vdwg.mxu0
  %v926 = vadd.f32 %v850, %v922
  %v927 = vadd.f32 %v851, %v924
  %v928 = vtanh.pop %v926
  %v929 = vtanh.pop %v927
  %v930 = vmul.f32 %v928, 0.5
  %v931 = vmul.f32 %v929, 0.5
  %v932 = vadd.f32 %v930, 0.5
  %v933 = vadd.f32 %v931, 0.5
  %v934 = vmul.f32 %v932, %v842
  %936 = vrot.lane.b32.xlu0 %v929, 64
  %v937 = vpop.permute.xlu0 %936
  %v939 = vmul.f32 %v932, %v937
  %941 = vrot.lane.b32.xlu0 %v939, 64
  %v942 = vpop.permute.xlu0 %941
  %v944 = vadd.f32 %v934, %v942
  %v945 = vtanh.pop %v944
  %947 = vrot.lane.b32.xlu0 %v945, 64
  %v948 = vpop.permute.xlu0 %947
  %v950 = vmul.f32 %v933, %v948
  %s951 = scalar_lea.vmem %s0, 144
  %v952 = vld [vmem:[%s951] sm:$0xff]
  %v953 = vld [vmem:[%s951 + $0x8] sm:$0xff]
  %v955 = vsel %vm35, %v950, 0
  %957 = vmatprep.subr.mxu0 0.0
  %958 = vmatpush1.msra.mxu0 0.0
  %959 = vmatprep.subr.mxu0 0.0
  %960 = vmatpush1.msra.mxu0 0.0
  %961 = vmatprep.subr.mxu0 0.0
  %962 = vmatpush1.msra.mxu0 0.0
  %963 = vmatprep.subr.mxu0 0.0
  %964 = vmatpush1.msra.mxu0 0.0
  %965 = vmatprep.subr.mxu0 0.0
  %966 = vmatpush1.msra.mxu0 0.0
  %967 = vmatprep.subr.mxu0 0.0
  %968 = vmatpush1.msra.mxu0 0.0
  %969 = vmatprep.subr.mxu0 0.0
  %970 = vmatpush1.msra.mxu0 0.0
  %971 = vmatprep.subr.mxu0 0.0
  %972 = vmatpush1.msra.mxu0 0.0
  %973 = vmatprep.subr.mxu0 %v32
  %974 = vmatpush1.msra.mxu0 %v31
  %975 = vmatprep.subr.mxu0 %v30
  %976 = vmatpush1.msra.mxu0 %v29
  %977 = vmatprep.subr.mxu0 %v28
  %978 = vmatpush1.msra.mxu0 %v27
  %979 = vmatprep.subr.mxu0 %v26
  %980 = vmatpush1.msra.mxu0 %v25
  %981 = vmatprep.subr.mxu0 %v24
  %982 = vmatpush1.msra.mxu0 %v23
  %983 = vmatprep.subr.mxu0 %v22
  %984 = vmatpush1.msra.mxu0 %v21
  %985 = vmatprep.subr.mxu0 %v20
  %986 = vmatpush1.msra.mxu0 %v19
  %987 = vmatprep.subr.mxu0 %v18
  %988 = vmatpush1.msra.mxu0 %v17
  %989 = vmatprep.subr.mxu0 0.0
  %990 = vmatpush2.msra.mxu0 0.0
  %991 = vmatprep.subr.mxu0 0.0
  %992 = vmatpush2.msra.mxu0 0.0
  %993 = vmatprep.subr.mxu0 0.0
  %994 = vmatpush2.msra.mxu0 0.0
  %995 = vmatprep.subr.mxu0 0.0
  %996 = vmatpush2.msra.mxu0 0.0
  %997 = vmatprep.subr.mxu0 0.0
  %998 = vmatpush2.msra.mxu0 0.0
  %999 = vmatprep.subr.mxu0 0.0
  %1000 = vmatpush2.msra.mxu0 0.0
  %1001 = vmatprep.subr.mxu0 0.0
  %1002 = vmatpush2.msra.mxu0 0.0
  %1003 = vmatprep.subr.mxu0 0.0
  %1004 = vmatpush2.msra.mxu0 0.0
  %1005 = vmatprep.subr.mxu0 0.0
  %1006 = vmatpush2.msra.mxu0 0.0
  %1007 = vmatprep.subr.mxu0 0.0
  %1008 = vmatpush2.msra.mxu0 0.0
  %1009 = vmatprep.subr.mxu0 0.0
  %1010 = vmatpush2.msra.mxu0 0.0
  %1011 = vmatprep.subr.mxu0 0.0
  %1012 = vmatpush2.msra.mxu0 0.0
  %1013 = vmatprep.subr.mxu0 0.0
  %1014 = vmatpush2.msra.mxu0 0.0
  %1015 = vmatprep.subr.mxu0 0.0
  %1016 = vmatpush2.msra.mxu0 0.0
  %1017 = vmatprep.subr.mxu0 0.0
  %1018 = vmatpush2.msra.mxu0 0.0
  %1019 = vmatprep.subr.mxu0 0.0
  %1020 = vmatpush2.msra.mxu0 0.0
  %1021 = vmatprep.mubr.f32.mxu0 0.0
  %1022 = vmatmul.mubr.f32.gmra.mxu0 %v955
  %v1023 = vpop.f32.mrf.mxu0
  %v1024 = vadd.f32 0.0, %v1023
  %v1025 = vpop.f32.mrf.mxu0
  %v1026 = vadd.f32 0.0, %v1025
  %1027 = vdwg.mxu0
  %v1028 = vadd.f32 %v952, %v1024
  %v1029 = vadd.f32 %v953, %v1026
  %v1030 = vtanh.pop %v1028
  %v1031 = vtanh.pop %v1029
  %v1032 = vmul.f32 %v1030, 0.5
  %v1033 = vmul.f32 %v1031, 0.5
  %v1034 = vadd.f32 %v1032, 0.5
  %v1035 = vadd.f32 %v1033, 0.5
  %v1036 = vmul.f32 %v1034, %v944
  %1038 = vrot.lane.b32.xlu0 %v1031, 64
  %v1039 = vpop.permute.xlu0 %1038
  %v1041 = vmul.f32 %v1034, %v1039
  %1043 = vrot.lane.b32.xlu0 %v1041, 64
  %v1044 = vpop.permute.xlu0 %1043
  %v1046 = vadd.f32 %v1036, %v1044
  %v1047 = vtanh.pop %v1046
  %1049 = vrot.lane.b32.xlu0 %v1047, 64
  %v1050 = vpop.permute.xlu0 %1049
  %v1052 = vmul.f32 %v1035, %v1050
  %s1053 = scalar_lea.vmem %s0, 160
  %v1054 = vld [vmem:[%s1053] sm:$0xff]
  %v1055 = vld [vmem:[%s1053 + $0x8] sm:$0xff]
  %v1057 = vsel %vm35, %v1052, 0
  %1059 = vmatprep.subr.mxu0 0.0
  %1060 = vmatpush1.msra.mxu0 0.0
  %1061 = vmatprep.subr.mxu0 0.0
  %1062 = vmatpush1.msra.mxu0 0.0
  %1063 = vmatprep.subr.mxu0 0.0
  %1064 = vmatpush1.msra.mxu0 0.0
  %1065 = vmatprep.subr.mxu0 0.0
  %1066 = vmatpush1.msra.mxu0 0.0
  %1067 = vmatprep.subr.mxu0 0.0
  %1068 = vmatpush1.msra.mxu0 0.0
  %1069 = vmatprep.subr.mxu0 0.0
  %1070 = vmatpush1.msra.mxu0 0.0
  %1071 = vmatprep.subr.mxu0 0.0
  %1072 = vmatpush1.msra.mxu0 0.0
  %1073 = vmatprep.subr.mxu0 0.0
  %1074 = vmatpush1.msra.mxu0 0.0
  %1075 = vmatprep.subr.mxu0 %v32
  %1076 = vmatpush1.msra.mxu0 %v31
  %1077 = vmatprep.subr.mxu0 %v30
  %1078 = vmatpush1.msra.mxu0 %v29
  %1079 = vmatprep.subr.mxu0 %v28
  %1080 = vmatpush1.msra.mxu0 %v27
  %1081 = vmatprep.subr.mxu0 %v26
  %1082 = vmatpush1.msra.mxu0 %v25
  %1083 = vmatprep.subr.mxu0 %v24
  %1084 = vmatpush1.msra.mxu0 %v23
  %1085 = vmatprep.subr.mxu0 %v22
  %1086 = vmatpush1.msra.mxu0 %v21
  %1087 = vmatprep.subr.mxu0 %v20
  %1088 = vmatpush1.msra.mxu0 %v19
  %1089 = vmatprep.subr.mxu0 %v18
  %1090 = vmatpush1.msra.mxu0 %v17
  %1091 = vmatprep.subr.mxu0 0.0
  %1092 = vmatpush2.msra.mxu0 0.0
  %1093 = vmatprep.subr.mxu0 0.0
  %1094 = vmatpush2.msra.mxu0 0.0
  %1095 = vmatprep.subr.mxu0 0.0
  %1096 = vmatpush2.msra.mxu0 0.0
  %1097 = vmatprep.subr.mxu0 0.0
  %1098 = vmatpush2.msra.mxu0 0.0
  %1099 = vmatprep.subr.mxu0 0.0
  %1100 = vmatpush2.msra.mxu0 0.0
  %1101 = vmatprep.subr.mxu0 0.0
  %1102 = vmatpush2.msra.mxu0 0.0
  %1103 = vmatprep.subr.mxu0 0.0
  %1104 = vmatpush2.msra.mxu0 0.0
  %1105 = vmatprep.subr.mxu0 0.0
  %1106 = vmatpush2.msra.mxu0 0.0
  %1107 = vmatprep.subr.mxu0 0.0
  %1108 = vmatpush2.msra.mxu0 0.0
  %1109 = vmatprep.subr.mxu0 0.0
  %1110 = vmatpush2.msra.mxu0 0.0
  %1111 = vmatprep.subr.mxu0 0.0
  %1112 = vmatpush2.msra.mxu0 0.0
  %1113 = vmatprep.subr.mxu0 0.0
  %1114 = vmatpush2.msra.mxu0 0.0
  %1115 = vmatprep.subr.mxu0 0.0
  %1116 = vmatpush2.msra.mxu0 0.0
  %1117 = vmatprep.subr.mxu0 0.0
  %1118 = vmatpush2.msra.mxu0 0.0
  %1119 = vmatprep.subr.mxu0 0.0
  %1120 = vmatpush2.msra.mxu0 0.0
  %1121 = vmatprep.subr.mxu0 0.0
  %1122 = vmatpush2.msra.mxu0 0.0
  %1123 = vmatprep.mubr.f32.mxu0 0.0
  %1124 = vmatmul.mubr.f32.gmra.mxu0 %v1057
  %v1125 = vpop.f32.mrf.mxu0
  %v1126 = vadd.f32 0.0, %v1125
  %v1127 = vpop.f32.mrf.mxu0
  %v1128 = vadd.f32 0.0, %v1127
  %1129 = vdwg.mxu0
  %v1130 = vadd.f32 %v1054, %v1126
  %v1131 = vadd.f32 %v1055, %v1128
  %v1132 = vtanh.pop %v1130
  %v1133 = vtanh.pop %v1131
  %v1134 = vmul.f32 %v1132, 0.5
  %v1135 = vmul.f32 %v1133, 0.5
  %v1136 = vadd.f32 %v1134, 0.5
  %v1137 = vadd.f32 %v1135, 0.5
  %v1138 = vmul.f32 %v1136, %v1046
  %1140 = vrot.lane.b32.xlu0 %v1133, 64
  %v1141 = vpop.permute.xlu0 %1140
  %v1143 = vmul.f32 %v1136, %v1141
  %1145 = vrot.lane.b32.xlu0 %v1143, 64
  %v1146 = vpop.permute.xlu0 %1145
  %v1148 = vadd.f32 %v1138, %v1146
  %v1149 = vtanh.pop %v1148
  %1151 = vrot.lane.b32.xlu0 %v1149, 64
  %v1152 = vpop.permute.xlu0 %1151
  %v1154 = vmul.f32 %v1137, %v1152
  %s1155 = scalar_lea.vmem %s0, 176
  %v1156 = vld [vmem:[%s1155] sm:$0xff]
  %v1157 = vld [vmem:[%s1155 + $0x8] sm:$0xff]
  %v1159 = vsel %vm35, %v1154, 0
  %1161 = vmatprep.subr.mxu0 0.0
  %1162 = vmatpush1.msra.mxu0 0.0
  %1163 = vmatprep.subr.mxu0 0.0
  %1164 = vmatpush1.msra.mxu0 0.0
  %1165 = vmatprep.subr.mxu0 0.0
  %1166 = vmatpush1.msra.mxu0 0.0
  %1167 = vmatprep.subr.mxu0 0.0
  %1168 = vmatpush1.msra.mxu0 0.0
  %1169 = vmatprep.subr.mxu0 0.0
  %1170 = vmatpush1.msra.mxu0 0.0
  %1171 = vmatprep.subr.mxu0 0.0
  %1172 = vmatpush1.msra.mxu0 0.0
  %1173 = vmatprep.subr.mxu0 0.0
  %1174 = vmatpush1.msra.mxu0 0.0
  %1175 = vmatprep.subr.mxu0 0.0
  %1176 = vmatpush1.msra.mxu0 0.0
  %1177 = vmatprep.subr.mxu0 %v32
  %1178 = vmatpush1.msra.mxu0 %v31
  %1179 = vmatprep.subr.mxu0 %v30
  %1180 = vmatpush1.msra.mxu0 %v29
  %1181 = vmatprep.subr.mxu0 %v28
  %1182 = vmatpush1.msra.mxu0 %v27
  %1183 = vmatprep.subr.mxu0 %v26
  %1184 = vmatpush1.msra.mxu0 %v25
  %1185 = vmatprep.subr.mxu0 %v24
  %1186 = vmatpush1.msra.mxu0 %v23
  %1187 = vmatprep.subr.mxu0 %v22
  %1188 = vmatpush1.msra.mxu0 %v21
  %1189 = vmatprep.subr.mxu0 %v20
  %1190 = vmatpush1.msra.mxu0 %v19
  %1191 = vmatprep.subr.mxu0 %v18
  %1192 = vmatpush1.msra.mxu0 %v17
  %1193 = vmatprep.subr.mxu0 0.0
  %1194 = vmatpush2.msra.mxu0 0.0
  %1195 = vmatprep.subr.mxu0 0.0
  %1196 = vmatpush2.msra.mxu0 0.0
  %1197 = vmatprep.subr.mxu0 0.0
  %1198 = vmatpush2.msra.mxu0 0.0
  %1199 = vmatprep.subr.mxu0 0.0
  %1200 = vmatpush2.msra.mxu0 0.0
  %1201 = vmatprep.subr.mxu0 0.0
  %1202 = vmatpush2.msra.mxu0 0.0
  %1203 = vmatprep.subr.mxu0 0.0
  %1204 = vmatpush2.msra.mxu0 0.0
  %1205 = vmatprep.subr.mxu0 0.0
  %1206 = vmatpush2.msra.mxu0 0.0
  %1207 = vmatprep.subr.mxu0 0.0
  %1208 = vmatpush2.msra.mxu0 0.0
  %1209 = vmatprep.subr.mxu0 0.0
  %1210 = vmatpush2.msra.mxu0 0.0
  %1211 = vmatprep.subr.mxu0 0.0
  %1212 = vmatpush2.msra.mxu0 0.0
  %1213 = vmatprep.subr.mxu0 0.0
  %1214 = vmatpush2.msra.mxu0 0.0
  %1215 = vmatprep.subr.mxu0 0.0
  %1216 = vmatpush2.msra.mxu0 0.0
  %1217 = vmatprep.subr.mxu0 0.0
  %1218 = vmatpush2.msra.mxu0 0.0
  %1219 = vmatprep.subr.mxu0 0.0
  %1220 = vmatpush2.msra.mxu0 0.0
  %1221 = vmatprep.subr.mxu0 0.0
  %1222 = vmatpush2.msra.mxu0 0.0
  %1223 = vmatprep.subr.mxu0 0.0
  %1224 = vmatpush2.msra.mxu0 0.0
  %1225 = vmatprep.mubr.f32.mxu0 0.0
  %1226 = vmatmul.mubr.f32.gmra.mxu0 %v1159
  %v1227 = vpop.f32.mrf.mxu0
  %v1228 = vadd.f32 0.0, %v1227
  %v1229 = vpop.f32.mrf.mxu0
  %v1230 = vadd.f32 0.0, %v1229
  %1231 = vdwg.mxu0
  %v1232 = vadd.f32 %v1156, %v1228
  %v1233 = vadd.f32 %v1157, %v1230
  %v1234 = vtanh.pop %v1232
  %v1235 = vtanh.pop %v1233
  %v1236 = vmul.f32 %v1234, 0.5
  %v1237 = vmul.f32 %v1235, 0.5
  %v1238 = vadd.f32 %v1236, 0.5
  %v1239 = vadd.f32 %v1237, 0.5
  %v1240 = vmul.f32 %v1238, %v1148
  %1242 = vrot.lane.b32.xlu0 %v1235, 64
  %v1243 = vpop.permute.xlu0 %1242
  %v1245 = vmul.f32 %v1238, %v1243
  %1247 = vrot.lane.b32.xlu0 %v1245, 64
  %v1248 = vpop.permute.xlu0 %1247
  %v1250 = vadd.f32 %v1240, %v1248
  %v1251 = vtanh.pop %v1250
  %1253 = vrot.lane.b32.xlu0 %v1251, 64
  %v1254 = vpop.permute.xlu0 %1253
  %v1256 = vmul.f32 %v1239, %v1254
  %s1257 = scalar_lea.vmem %s0, 192
  %v1258 = vld [vmem:[%s1257] sm:$0xff]
  %v1259 = vld [vmem:[%s1257 + $0x8] sm:$0xff]
  %v1261 = vsel %vm35, %v1256, 0
  %1263 = vmatprep.subr.mxu0 0.0
  %1264 = vmatpush1.msra.mxu0 0.0
  %1265 = vmatprep.subr.mxu0 0.0
  %1266 = vmatpush1.msra.mxu0 0.0
  %1267 = vmatprep.subr.mxu0 0.0
  %1268 = vmatpush1.msra.mxu0 0.0
  %1269 = vmatprep.subr.mxu0 0.0
  %1270 = vmatpush1.msra.mxu0 0.0
  %1271 = vmatprep.subr.mxu0 0.0
  %1272 = vmatpush1.msra.mxu0 0.0
  %1273 = vmatprep.subr.mxu0 0.0
  %1274 = vmatpush1.msra.mxu0 0.0
  %1275 = vmatprep.subr.mxu0 0.0
  %1276 = vmatpush1.msra.mxu0 0.0
  %1277 = vmatprep.subr.mxu0 0.0
  %1278 = vmatpush1.msra.mxu0 0.0
  %1279 = vmatprep.subr.mxu0 %v32
  %1280 = vmatpush1.msra.mxu0 %v31
  %1281 = vmatprep.subr.mxu0 %v30
  %1282 = vmatpush1.msra.mxu0 %v29
  %1283 = vmatprep.subr.mxu0 %v28
  %1284 = vmatpush1.msra.mxu0 %v27
  %1285 = vmatprep.subr.mxu0 %v26
  %1286 = vmatpush1.msra.mxu0 %v25
  %1287 = vmatprep.subr.mxu0 %v24
  %1288 = vmatpush1.msra.mxu0 %v23
  %1289 = vmatprep.subr.mxu0 %v22
  %1290 = vmatpush1.msra.mxu0 %v21
  %1291 = vmatprep.subr.mxu0 %v20
  %1292 = vmatpush1.msra.mxu0 %v19
  %1293 = vmatprep.subr.mxu0 %v18
  %1294 = vmatpush1.msra.mxu0 %v17
  %1295 = vmatprep.subr.mxu0 0.0
  %1296 = vmatpush2.msra.mxu0 0.0
  %1297 = vmatprep.subr.mxu0 0.0
  %1298 = vmatpush2.msra.mxu0 0.0
  %1299 = vmatprep.subr.mxu0 0.0
  %1300 = vmatpush2.msra.mxu0 0.0
  %1301 = vmatprep.subr.mxu0 0.0
  %1302 = vmatpush2.msra.mxu0 0.0
  %1303 = vmatprep.subr.mxu0 0.0
  %1304 = vmatpush2.msra.mxu0 0.0
  %1305 = vmatprep.subr.mxu0 0.0
  %1306 = vmatpush2.msra.mxu0 0.0
  %1307 = vmatprep.subr.mxu0 0.0
  %1308 = vmatpush2.msra.mxu0 0.0
  %1309 = vmatprep.subr.mxu0 0.0
  %1310 = vmatpush2.msra.mxu0 0.0
  %1311 = vmatprep.subr.mxu0 0.0
  %1312 = vmatpush2.msra.mxu0 0.0
  %1313 = vmatprep.subr.mxu0 0.0
  %1314 = vmatpush2.msra.mxu0 0.0
  %1315 = vmatprep.subr.mxu0 0.0
  %1316 = vmatpush2.msra.mxu0 0.0
  %1317 = vmatprep.subr.mxu0 0.0
  %1318 = vmatpush2.msra.mxu0 0.0
  %1319 = vmatprep.subr.mxu0 0.0
  %1320 = vmatpush2.msra.mxu0 0.0
  %1321 = vmatprep.subr.mxu0 0.0
  %1322 = vmatpush2.msra.mxu0 0.0
  %1323 = vmatprep.subr.mxu0 0.0
  %1324 = vmatpush2.msra.mxu0 0.0
  %1325 = vmatprep.subr.mxu0 0.0
  %1326 = vmatpush2.msra.mxu0 0.0
  %1327 = vmatprep.mubr.f32.mxu0 0.0
  %1328 = vmatmul.mubr.f32.gmra.mxu0 %v1261
  %v1329 = vpop.f32.mrf.mxu0
  %v1330 = vadd.f32 0.0, %v1329
  %v1331 = vpop.f32.mrf.mxu0
  %v1332 = vadd.f32 0.0, %v1331
  %1333 = vdwg.mxu0
  %v1334 = vadd.f32 %v1258, %v1330
  %v1335 = vadd.f32 %v1259, %v1332
  %v1336 = vtanh.pop %v1334
  %v1337 = vtanh.pop %v1335
  %v1338 = vmul.f32 %v1336, 0.5
  %v1339 = vmul.f32 %v1337, 0.5
  %v1340 = vadd.f32 %v1338, 0.5
  %v1341 = vadd.f32 %v1339, 0.5
  %v1342 = vmul.f32 %v1340, %v1250
  %1344 = vrot.lane.b32.xlu0 %v1337, 64
  %v1345 = vpop.permute.xlu0 %1344
  %v1347 = vmul.f32 %v1340, %v1345
  %1349 = vrot.lane.b32.xlu0 %v1347, 64
  %v1350 = vpop.permute.xlu0 %1349
  %v1352 = vadd.f32 %v1342, %v1350
  %v1353 = vtanh.pop %v1352
  %1355 = vrot.lane.b32.xlu0 %v1353, 64
  %v1356 = vpop.permute.xlu0 %1355
  %v1358 = vmul.f32 %v1341, %v1356
  %s1359 = scalar_lea.vmem %s0, 208
  %v1360 = vld [vmem:[%s1359] sm:$0xff]
  %v1361 = vld [vmem:[%s1359 + $0x8] sm:$0xff]
  %v1363 = vsel %vm35, %v1358, 0
  %1365 = vmatprep.subr.mxu0 0.0
  %1366 = vmatpush1.msra.mxu0 0.0
  %1367 = vmatprep.subr.mxu0 0.0
  %1368 = vmatpush1.msra.mxu0 0.0
  %1369 = vmatprep.subr.mxu0 0.0
  %1370 = vmatpush1.msra.mxu0 0.0
  %1371 = vmatprep.subr.mxu0 0.0
  %1372 = vmatpush1.msra.mxu0 0.0
  %1373 = vmatprep.subr.mxu0 0.0
  %1374 = vmatpush1.msra.mxu0 0.0
  %1375 = vmatprep.subr.mxu0 0.0
  %1376 = vmatpush1.msra.mxu0 0.0
  %1377 = vmatprep.subr.mxu0 0.0
  %1378 = vmatpush1.msra.mxu0 0.0
  %1379 = vmatprep.subr.mxu0 0.0
  %1380 = vmatpush1.msra.mxu0 0.0
  %1381 = vmatprep.subr.mxu0 %v32
  %1382 = vmatpush1.msra.mxu0 %v31
  %1383 = vmatprep.subr.mxu0 %v30
  %1384 = vmatpush1.msra.mxu0 %v29
  %1385 = vmatprep.subr.mxu0 %v28
  %1386 = vmatpush1.msra.mxu0 %v27
  %1387 = vmatprep.subr.mxu0 %v26
  %1388 = vmatpush1.msra.mxu0 %v25
  %1389 = vmatprep.subr.mxu0 %v24
  %1390 = vmatpush1.msra.mxu0 %v23
  %1391 = vmatprep.subr.mxu0 %v22
  %1392 = vmatpush1.msra.mxu0 %v21
  %1393 = vmatprep.subr.mxu0 %v20
  %1394 = vmatpush1.msra.mxu0 %v19
  %1395 = vmatprep.subr.mxu0 %v18
  %1396 = vmatpush1.msra.mxu0 %v17
  %1397 = vmatprep.subr.mxu0 0.0
  %1398 = vmatpush2.msra.mxu0 0.0
  %1399 = vmatprep.subr.mxu0 0.0
  %1400 = vmatpush2.msra.mxu0 0.0
  %1401 = vmatprep.subr.mxu0 0.0
  %1402 = vmatpush2.msra.mxu0 0.0
  %1403 = vmatprep.subr.mxu0 0.0
  %1404 = vmatpush2.msra.mxu0 0.0
  %1405 = vmatprep.subr.mxu0 0.0
  %1406 = vmatpush2.msra.mxu0 0.0
  %1407 = vmatprep.subr.mxu0 0.0
  %1408 = vmatpush2.msra.mxu0 0.0
  %1409 = vmatprep.subr.mxu0 0.0
  %1410 = vmatpush2.msra.mxu0 0.0
  %1411 = vmatprep.subr.mxu0 0.0
  %1412 = vmatpush2.msra.mxu0 0.0
  %1413 = vmatprep.subr.mxu0 0.0
  %1414 = vmatpush2.msra.mxu0 0.0
  %1415 = vmatprep.subr.mxu0 0.0
  %1416 = vmatpush2.msra.mxu0 0.0
  %1417 = vmatprep.subr.mxu0 0.0
  %1418 = vmatpush2.msra.mxu0 0.0
  %1419 = vmatprep.subr.mxu0 0.0
  %1420 = vmatpush2.msra.mxu0 0.0
  %1421 = vmatprep.subr.mxu0 0.0
  %1422 = vmatpush2.msra.mxu0 0.0
  %1423 = vmatprep.subr.mxu0 0.0
  %1424 = vmatpush2.msra.mxu0 0.0
  %1425 = vmatprep.subr.mxu0 0.0
  %1426 = vmatpush2.msra.mxu0 0.0
  %1427 = vmatprep.subr.mxu0 0.0
  %1428 = vmatpush2.msra.mxu0 0.0
  %1429 = vmatprep.mubr.f32.mxu0 0.0
  %1430 = vmatmul.mubr.f32.gmra.mxu0 %v1363
  %v1431 = vpop.f32.mrf.mxu0
  %v1432 = vadd.f32 0.0, %v1431
  %v1433 = vpop.f32.mrf.mxu0
  %v1434 = vadd.f32 0.0, %v1433
  %1435 = vdwg.mxu0
  %v1436 = vadd.f32 %v1360, %v1432
  %v1437 = vadd.f32 %v1361, %v1434
  %v1438 = vtanh.pop %v1436
  %v1439 = vtanh.pop %v1437
  %v1440 = vmul.f32 %v1438, 0.5
  %v1441 = vmul.f32 %v1439, 0.5
  %v1442 = vadd.f32 %v1440, 0.5
  %v1443 = vadd.f32 %v1441, 0.5
  %v1444 = vmul.f32 %v1442, %v1352
  %1446 = vrot.lane.b32.xlu0 %v1439, 64
  %v1447 = vpop.permute.xlu0 %1446
  %v1449 = vmul.f32 %v1442, %v1447
  %1451 = vrot.lane.b32.xlu0 %v1449, 64
  %v1452 = vpop.permute.xlu0 %1451
  %v1454 = vadd.f32 %v1444, %v1452
  %v1455 = vtanh.pop %v1454
  %1457 = vrot.lane.b32.xlu0 %v1455, 64
  %v1458 = vpop.permute.xlu0 %1457
  %v1460 = vmul.f32 %v1443, %v1458
  %s1461 = scalar_lea.vmem %s0, 224
  %v1462 = vld [vmem:[%s1461] sm:$0xff]
  %v1463 = vld [vmem:[%s1461 + $0x8] sm:$0xff]
  %v1465 = vsel %vm35, %v1460, 0
  %1467 = vmatprep.subr.mxu0 0.0
  %1468 = vmatpush1.msra.mxu0 0.0
  %1469 = vmatprep.subr.mxu0 0.0
  %1470 = vmatpush1.msra.mxu0 0.0
  %1471 = vmatprep.subr.mxu0 0.0
  %1472 = vmatpush1.msra.mxu0 0.0
  %1473 = vmatprep.subr.mxu0 0.0
  %1474 = vmatpush1.msra.mxu0 0.0
  %1475 = vmatprep.subr.mxu0 0.0
  %1476 = vmatpush1.msra.mxu0 0.0
  %1477 = vmatprep.subr.mxu0 0.0
  %1478 = vmatpush1.msra.mxu0 0.0
  %1479 = vmatprep.subr.mxu0 0.0
  %1480 = vmatpush1.msra.mxu0 0.0
  %1481 = vmatprep.subr.mxu0 0.0
  %1482 = vmatpush1.msra.mxu0 0.0
  %1483 = vmatprep.subr.mxu0 %v32
  %1484 = vmatpush1.msra.mxu0 %v31
  %1485 = vmatprep.subr.mxu0 %v30
  %1486 = vmatpush1.msra.mxu0 %v29
  %1487 = vmatprep.subr.mxu0 %v28
  %1488 = vmatpush1.msra.mxu0 %v27
  %1489 = vmatprep.subr.mxu0 %v26
  %1490 = vmatpush1.msra.mxu0 %v25
  %1491 = vmatprep.subr.mxu0 %v24
  %1492 = vmatpush1.msra.mxu0 %v23
  %1493 = vmatprep.subr.mxu0 %v22
  %1494 = vmatpush1.msra.mxu0 %v21
  %1495 = vmatprep.subr.mxu0 %v20
  %1496 = vmatpush1.msra.mxu0 %v19
  %1497 = vmatprep.subr.mxu0 %v18
  %1498 = vmatpush1.msra.mxu0 %v17
  %1499 = vmatprep.subr.mxu0 0.0
  %1500 = vmatpush2.msra.mxu0 0.0
  %1501 = vmatprep.subr.mxu0 0.0
  %1502 = vmatpush2.msra.mxu0 0.0
  %1503 = vmatprep.subr.mxu0 0.0
  %1504 = vmatpush2.msra.mxu0 0.0
  %1505 = vmatprep.subr.mxu0 0.0
  %1506 = vmatpush2.msra.mxu0 0.0
  %1507 = vmatprep.subr.mxu0 0.0
  %1508 = vmatpush2.msra.mxu0 0.0
  %1509 = vmatprep.subr.mxu0 0.0
  %1510 = vmatpush2.msra.mxu0 0.0
  %1511 = vmatprep.subr.mxu0 0.0
  %1512 = vmatpush2.msra.mxu0 0.0
  %1513 = vmatprep.subr.mxu0 0.0
  %1514 = vmatpush2.msra.mxu0 0.0
  %1515 = vmatprep.subr.mxu0 0.0
  %1516 = vmatpush2.msra.mxu0 0.0
  %1517 = vmatprep.subr.mxu0 0.0
  %1518 = vmatpush2.msra.mxu0 0.0
  %1519 = vmatprep.subr.mxu0 0.0
  %1520 = vmatpush2.msra.mxu0 0.0
  %1521 = vmatprep.subr.mxu0 0.0
  %1522 = vmatpush2.msra.mxu0 0.0
  %1523 = vmatprep.subr.mxu0 0.0
  %1524 = vmatpush2.msra.mxu0 0.0
  %1525 = vmatprep.subr.mxu0 0.0
  %1526 = vmatpush2.msra.mxu0 0.0
  %1527 = vmatprep.subr.mxu0 0.0
  %1528 = vmatpush2.msra.mxu0 0.0
  %1529 = vmatprep.subr.mxu0 0.0
  %1530 = vmatpush2.msra.mxu0 0.0
  %1531 = vmatprep.mubr.f32.mxu0 0.0
  %1532 = vmatmul.mubr.f32.gmra.mxu0 %v1465
  %v1533 = vpop.f32.mrf.mxu0
  %v1534 = vadd.f32 0.0, %v1533
  %v1535 = vpop.f32.mrf.mxu0
  %v1536 = vadd.f32 0.0, %v1535
  %1537 = vdwg.mxu0
  %v1538 = vadd.f32 %v1462, %v1534
  %v1539 = vadd.f32 %v1463, %v1536
  %v1540 = vtanh.pop %v1538
  %v1541 = vtanh.pop %v1539
  %v1542 = vmul.f32 %v1540, 0.5
  %v1543 = vmul.f32 %v1541, 0.5
  %v1544 = vadd.f32 %v1542, 0.5
  %v1545 = vadd.f32 %v1543, 0.5
  %v1546 = vmul.f32 %v1544, %v1454
  %1548 = vrot.lane.b32.xlu0 %v1541, 64
  %v1549 = vpop.permute.xlu0 %1548
  %v1551 = vmul.f32 %v1544, %v1549
  %1553 = vrot.lane.b32.xlu0 %v1551, 64
  %v1554 = vpop.permute.xlu0 %1553
  %v1556 = vadd.f32 %v1546, %v1554
  %v1557 = vtanh.pop %v1556
  %1559 = vrot.lane.b32.xlu0 %v1557, 64
  %v1560 = vpop.permute.xlu0 %1559
  %v1562 = vmul.f32 %v1545, %v1560
  %s1563 = scalar_lea.vmem %s0, 240
  %v1564 = vld [vmem:[%s1563] sm:$0xff]
  %v1565 = vld [vmem:[%s1563 + $0x8] sm:$0xff]
  %v1567 = vsel %vm35, %v1562, 0
  %1569 = vmatprep.subr.mxu0 0.0
  %1570 = vmatpush1.msra.mxu0 0.0
  %1571 = vmatprep.subr.mxu0 0.0
  %1572 = vmatpush1.msra.mxu0 0.0
  %1573 = vmatprep.subr.mxu0 0.0
  %1574 = vmatpush1.msra.mxu0 0.0
  %1575 = vmatprep.subr.mxu0 0.0
  %1576 = vmatpush1.msra.mxu0 0.0
  %1577 = vmatprep.subr.mxu0 0.0
  %1578 = vmatpush1.msra.mxu0 0.0
  %1579 = vmatprep.subr.mxu0 0.0
  %1580 = vmatpush1.msra.mxu0 0.0
  %1581 = vmatprep.subr.mxu0 0.0
  %1582 = vmatpush1.msra.mxu0 0.0
  %1583 = vmatprep.subr.mxu0 0.0
  %1584 = vmatpush1.msra.mxu0 0.0
  %1585 = vmatprep.subr.mxu0 %v32
  %1586 = vmatpush1.msra.mxu0 %v31
  %1587 = vmatprep.subr.mxu0 %v30
  %1588 = vmatpush1.msra.mxu0 %v29
  %1589 = vmatprep.subr.mxu0 %v28
  %1590 = vmatpush1.msra.mxu0 %v27
  %1591 = vmatprep.subr.mxu0 %v26
  %1592 = vmatpush1.msra.mxu0 %v25
  %1593 = vmatprep.subr.mxu0 %v24
  %1594 = vmatpush1.msra.mxu0 %v23
  %1595 = vmatprep.subr.mxu0 %v22
  %1596 = vmatpush1.msra.mxu0 %v21
  %1597 = vmatprep.subr.mxu0 %v20
  %1598 = vmatpush1.msra.mxu0 %v19
  %1599 = vmatprep.subr.mxu0 %v18
  %1600 = vmatpush1.msra.mxu0 %v17
  %1601 = vmatprep.subr.mxu0 0.0
  %1602 = vmatpush2.msra.mxu0 0.0
  %1603 = vmatprep.subr.mxu0 0.0
  %1604 = vmatpush2.msra.mxu0 0.0
  %1605 = vmatprep.subr.mxu0 0.0
  %1606 = vmatpush2.msra.mxu0 0.0
  %1607 = vmatprep.subr.mxu0 0.0
  %1608 = vmatpush2.msra.mxu0 0.0
  %1609 = vmatprep.subr.mxu0 0.0
  %1610 = vmatpush2.msra.mxu0 0.0
  %1611 = vmatprep.subr.mxu0 0.0
  %1612 = vmatpush2.msra.mxu0 0.0
  %1613 = vmatprep.subr.mxu0 0.0
  %1614 = vmatpush2.msra.mxu0 0.0
  %1615 = vmatprep.subr.mxu0 0.0
  %1616 = vmatpush2.msra.mxu0 0.0
  %1617 = vmatprep.subr.mxu0 0.0
  %1618 = vmatpush2.msra.mxu0 0.0
  %1619 = vmatprep.subr.mxu0 0.0
  %1620 = vmatpush2.msra.mxu0 0.0
  %1621 = vmatprep.subr.mxu0 0.0
  %1622 = vmatpush2.msra.mxu0 0.0
  %1623 = vmatprep.subr.mxu0 0.0
  %1624 = vmatpush2.msra.mxu0 0.0
  %1625 = vmatprep.subr.mxu0 0.0
  %1626 = vmatpush2.msra.mxu0 0.0
  %1627 = vmatprep.subr.mxu0 0.0
  %1628 = vmatpush2.msra.mxu0 0.0
  %1629 = vmatprep.subr.mxu0 0.0
  %1630 = vmatpush2.msra.mxu0 0.0
  %1631 = vmatprep.subr.mxu0 0.0
  %1632 = vmatpush2.msra.mxu0 0.0
  %1633 = vmatprep.mubr.f32.mxu0 0.0
  %1634 = vmatmul.mubr.f32.gmra.mxu0 %v1567
  %v1635 = vpop.f32.mrf.mxu0
  %v1636 = vadd.f32 0.0, %v1635
  %v1637 = vpop.f32.mrf.mxu0
  %v1638 = vadd.f32 0.0, %v1637
  %1639 = vdwg.mxu0
  %v1640 = vadd.f32 %v1564, %v1636
  %v1641 = vadd.f32 %v1565, %v1638
  %v1642 = vtanh.pop %v1640
  %v1643 = vtanh.pop %v1641
  %v1644 = vmul.f32 %v1642, 0.5
  %v1645 = vmul.f32 %v1643, 0.5
  %v1646 = vadd.f32 %v1644, 0.5
  %v1647 = vadd.f32 %v1645, 0.5
  %v1648 = vmul.f32 %v1646, %v1556
  %1650 = vrot.lane.b32.xlu0 %v1643, 64
  %v1651 = vpop.permute.xlu0 %1650
  %v1653 = vmul.f32 %v1646, %v1651
  %1655 = vrot.lane.b32.xlu0 %v1653, 64
  %v1656 = vpop.permute.xlu0 %1655
  %v1658 = vadd.f32 %v1648, %v1656
  %v1659 = vtanh.pop %v1658
  %1661 = vrot.lane.b32.xlu0 %v1659, 64
  %v1662 = vpop.permute.xlu0 %1661
  %v1664 = vmul.f32 %v1647, %v1662
  %s1665 = scalar_lea.vmem %s0, 256
  %v1666 = vld [vmem:[%s1665] sm:$0xff]
  %v1667 = vld [vmem:[%s1665 + $0x8] sm:$0xff]
  %v1669 = vsel %vm35, %v1664, 0
  %1671 = vmatprep.subr.mxu0 0.0
  %1672 = vmatpush1.msra.mxu0 0.0
  %1673 = vmatprep.subr.mxu0 0.0
  %1674 = vmatpush1.msra.mxu0 0.0
  %1675 = vmatprep.subr.mxu0 0.0
  %1676 = vmatpush1.msra.mxu0 0.0
  %1677 = vmatprep.subr.mxu0 0.0
  %1678 = vmatpush1.msra.mxu0 0.0
  %1679 = vmatprep.subr.mxu0 0.0
  %1680 = vmatpush1.msra.mxu0 0.0
  %1681 = vmatprep.subr.mxu0 0.0
  %1682 = vmatpush1.msra.mxu0 0.0
  %1683 = vmatprep.subr.mxu0 0.0
  %1684 = vmatpush1.msra.mxu0 0.0
  %1685 = vmatprep.subr.mxu0 0.0
  %1686 = vmatpush1.msra.mxu0 0.0
  %1687 = vmatprep.subr.mxu0 %v32
  %1688 = vmatpush1.msra.mxu0 %v31
  %1689 = vmatprep.subr.mxu0 %v30
  %1690 = vmatpush1.msra.mxu0 %v29
  %1691 = vmatprep.subr.mxu0 %v28
  %1692 = vmatpush1.msra.mxu0 %v27
  %1693 = vmatprep.subr.mxu0 %v26
  %1694 = vmatpush1.msra.mxu0 %v25
  %1695 = vmatprep.subr.mxu0 %v24
  %1696 = vmatpush1.msra.mxu0 %v23
  %1697 = vmatprep.subr.mxu0 %v22
  %1698 = vmatpush1.msra.mxu0 %v21
  %1699 = vmatprep.subr.mxu0 %v20
  %1700 = vmatpush1.msra.mxu0 %v19
  %1701 = vmatprep.subr.mxu0 %v18
  %1702 = vmatpush1.msra.mxu0 %v17
  %1703 = vmatprep.subr.mxu0 0.0
  %1704 = vmatpush2.msra.mxu0 0.0
  %1705 = vmatprep.subr.mxu0 0.0
  %1706 = vmatpush2.msra.mxu0 0.0
  %1707 = vmatprep.subr.mxu0 0.0
  %1708 = vmatpush2.msra.mxu0 0.0
  %1709 = vmatprep.subr.mxu0 0.0
  %1710 = vmatpush2.msra.mxu0 0.0
  %1711 = vmatprep.subr.mxu0 0.0
  %1712 = vmatpush2.msra.mxu0 0.0
  %1713 = vmatprep.subr.mxu0 0.0
  %1714 = vmatpush2.msra.mxu0 0.0
  %1715 = vmatprep.subr.mxu0 0.0
  %1716 = vmatpush2.msra.mxu0 0.0
  %1717 = vmatprep.subr.mxu0 0.0
  %1718 = vmatpush2.msra.mxu0 0.0
  %1719 = vmatprep.subr.mxu0 0.0
  %1720 = vmatpush2.msra.mxu0 0.0
  %1721 = vmatprep.subr.mxu0 0.0
  %1722 = vmatpush2.msra.mxu0 0.0
  %1723 = vmatprep.subr.mxu0 0.0
  %1724 = vmatpush2.msra.mxu0 0.0
  %1725 = vmatprep.subr.mxu0 0.0
  %1726 = vmatpush2.msra.mxu0 0.0
  %1727 = vmatprep.subr.mxu0 0.0
  %1728 = vmatpush2.msra.mxu0 0.0
  %1729 = vmatprep.subr.mxu0 0.0
  %1730 = vmatpush2.msra.mxu0 0.0
  %1731 = vmatprep.subr.mxu0 0.0
  %1732 = vmatpush2.msra.mxu0 0.0
  %1733 = vmatprep.subr.mxu0 0.0
  %1734 = vmatpush2.msra.mxu0 0.0
  %1735 = vmatprep.mubr.f32.mxu0 0.0
  %1736 = vmatmul.mubr.f32.gmra.mxu0 %v1669
  %v1737 = vpop.f32.mrf.mxu0
  %v1738 = vadd.f32 0.0, %v1737
  %v1739 = vpop.f32.mrf.mxu0
  %v1740 = vadd.f32 0.0, %v1739
  %1741 = vdwg.mxu0
  %v1742 = vadd.f32 %v1666, %v1738
  %v1743 = vadd.f32 %v1667, %v1740
  %v1744 = vtanh.pop %v1742
  %v1745 = vtanh.pop %v1743
  %v1746 = vmul.f32 %v1744, 0.5
  %v1747 = vmul.f32 %v1745, 0.5
  %v1748 = vadd.f32 %v1746, 0.5
  %v1749 = vadd.f32 %v1747, 0.5
  %v1750 = vmul.f32 %v1748, %v1658
  %1752 = vrot.lane.b32.xlu0 %v1745, 64
  %v1753 = vpop.permute.xlu0 %1752
  %v1755 = vmul.f32 %v1748, %v1753
  %1757 = vrot.lane.b32.xlu0 %v1755, 64
  %v1758 = vpop.permute.xlu0 %1757
  %v1760 = vadd.f32 %v1750, %v1758
  %v1761 = vtanh.pop %v1760
  %1763 = vrot.lane.b32.xlu0 %v1761, 64
  %v1764 = vpop.permute.xlu0 %1763
  %v1766 = vmul.f32 %v1749, %v1764
  %s1767 = scalar_lea.vmem %s0, 272
  %v1768 = vld [vmem:[%s1767] sm:$0xff]
  %v1769 = vld [vmem:[%s1767 + $0x8] sm:$0xff]
  %v1771 = vsel %vm35, %v1766, 0
  %1773 = vmatprep.subr.mxu0 0.0
  %1774 = vmatpush1.msra.mxu0 0.0
  %1775 = vmatprep.subr.mxu0 0.0
  %1776 = vmatpush1.msra.mxu0 0.0
  %1777 = vmatprep.subr.mxu0 0.0
  %1778 = vmatpush1.msra.mxu0 0.0
  %1779 = vmatprep.subr.mxu0 0.0
  %1780 = vmatpush1.msra.mxu0 0.0
  %1781 = vmatprep.subr.mxu0 0.0
  %1782 = vmatpush1.msra.mxu0 0.0
  %1783 = vmatprep.subr.mxu0 0.0
  %1784 = vmatpush1.msra.mxu0 0.0
  %1785 = vmatprep.subr.mxu0 0.0
  %1786 = vmatpush1.msra.mxu0 0.0
  %1787 = vmatprep.subr.mxu0 0.0
  %1788 = vmatpush1.msra.mxu0 0.0
  %1789 = vmatprep.subr.mxu0 %v32
  %1790 = vmatpush1.msra.mxu0 %v31
  %1791 = vmatprep.subr.mxu0 %v30
  %1792 = vmatpush1.msra.mxu0 %v29
  %1793 = vmatprep.subr.mxu0 %v28
  %1794 = vmatpush1.msra.mxu0 %v27
  %1795 = vmatprep.subr.mxu0 %v26
  %1796 = vmatpush1.msra.mxu0 %v25
  %1797 = vmatprep.subr.mxu0 %v24
  %1798 = vmatpush1.msra.mxu0 %v23
  %1799 = vmatprep.subr.mxu0 %v22
  %1800 = vmatpush1.msra.mxu0 %v21
  %1801 = vmatprep.subr.mxu0 %v20
  %1802 = vmatpush1.msra.mxu0 %v19
  %1803 = vmatprep.subr.mxu0 %v18
  %1804 = vmatpush1.msra.mxu0 %v17
  %1805 = vmatprep.subr.mxu0 0.0
  %1806 = vmatpush2.msra.mxu0 0.0
  %1807 = vmatprep.subr.mxu0 0.0
  %1808 = vmatpush2.msra.mxu0 0.0
  %1809 = vmatprep.subr.mxu0 0.0
  %1810 = vmatpush2.msra.mxu0 0.0
  %1811 = vmatprep.subr.mxu0 0.0
  %1812 = vmatpush2.msra.mxu0 0.0
  %1813 = vmatprep.subr.mxu0 0.0
  %1814 = vmatpush2.msra.mxu0 0.0
  %1815 = vmatprep.subr.mxu0 0.0
  %1816 = vmatpush2.msra.mxu0 0.0
  %1817 = vmatprep.subr.mxu0 0.0
  %1818 = vmatpush2.msra.mxu0 0.0
  %1819 = vmatprep.subr.mxu0 0.0
  %1820 = vmatpush2.msra.mxu0 0.0
  %1821 = vmatprep.subr.mxu0 0.0
  %1822 = vmatpush2.msra.mxu0 0.0
  %1823 = vmatprep.subr.mxu0 0.0
  %1824 = vmatpush2.msra.mxu0 0.0
  %1825 = vmatprep.subr.mxu0 0.0
  %1826 = vmatpush2.msra.mxu0 0.0
  %1827 = vmatprep.subr.mxu0 0.0
  %1828 = vmatpush2.msra.mxu0 0.0
  %1829 = vmatprep.subr.mxu0 0.0
  %1830 = vmatpush2.msra.mxu0 0.0
  %1831 = vmatprep.subr.mxu0 0.0
  %1832 = vmatpush2.msra.mxu0 0.0
  %1833 = vmatprep.subr.mxu0 0.0
  %1834 = vmatpush2.msra.mxu0 0.0
  %1835 = vmatprep.subr.mxu0 0.0
  %1836 = vmatpush2.msra.mxu0 0.0
  %1837 = vmatprep.mubr.f32.mxu0 0.0
  %1838 = vmatmul.mubr.f32.gmra.mxu0 %v1771
  %v1839 = vpop.f32.mrf.mxu0
  %v1840 = vadd.f32 0.0, %v1839
  %v1841 = vpop.f32.mrf.mxu0
  %v1842 = vadd.f32 0.0, %v1841
  %1843 = vdwg.mxu0
  %v1844 = vadd.f32 %v1768, %v1840
  %v1845 = vadd.f32 %v1769, %v1842
  %v1846 = vtanh.pop %v1844
  %v1847 = vtanh.pop %v1845
  %v1848 = vmul.f32 %v1846, 0.5
  %v1849 = vmul.f32 %v1847, 0.5
  %v1850 = vadd.f32 %v1848, 0.5
  %v1851 = vadd.f32 %v1849, 0.5
  %v1852 = vmul.f32 %v1850, %v1760
  %1854 = vrot.lane.b32.xlu0 %v1847, 64
  %v1855 = vpop.permute.xlu0 %1854
  %v1857 = vmul.f32 %v1850, %v1855
  %1859 = vrot.lane.b32.xlu0 %v1857, 64
  %v1860 = vpop.permute.xlu0 %1859
  %v1862 = vadd.f32 %v1852, %v1860
  %v1863 = vtanh.pop %v1862
  %1865 = vrot.lane.b32.xlu0 %v1863, 64
  %v1866 = vpop.permute.xlu0 %1865
  %v1868 = vmul.f32 %v1851, %v1866
  %s1869 = scalar_lea.vmem %s0, 288
  %v1870 = vld [vmem:[%s1869] sm:$0xff]
  %v1871 = vld [vmem:[%s1869 + $0x8] sm:$0xff]
  %v1873 = vsel %vm35, %v1868, 0
  %1875 = vmatprep.subr.mxu0 0.0
  %1876 = vmatpush1.msra.mxu0 0.0
  %1877 = vmatprep.subr.mxu0 0.0
  %1878 = vmatpush1.msra.mxu0 0.0
  %1879 = vmatprep.subr.mxu0 0.0
  %1880 = vmatpush1.msra.mxu0 0.0
  %1881 = vmatprep.subr.mxu0 0.0
  %1882 = vmatpush1.msra.mxu0 0.0
  %1883 = vmatprep.subr.mxu0 0.0
  %1884 = vmatpush1.msra.mxu0 0.0
  %1885 = vmatprep.subr.mxu0 0.0
  %1886 = vmatpush1.msra.mxu0 0.0
  %1887 = vmatprep.subr.mxu0 0.0
  %1888 = vmatpush1.msra.mxu0 0.0
  %1889 = vmatprep.subr.mxu0 0.0
  %1890 = vmatpush1.msra.mxu0 0.0
  %1891 = vmatprep.subr.mxu0 %v32
  %1892 = vmatpush1.msra.mxu0 %v31
  %1893 = vmatprep.subr.mxu0 %v30
  %1894 = vmatpush1.msra.mxu0 %v29
  %1895 = vmatprep.subr.mxu0 %v28
  %1896 = vmatpush1.msra.mxu0 %v27
  %1897 = vmatprep.subr.mxu0 %v26
  %1898 = vmatpush1.msra.mxu0 %v25
  %1899 = vmatprep.subr.mxu0 %v24
  %1900 = vmatpush1.msra.mxu0 %v23
  %1901 = vmatprep.subr.mxu0 %v22
  %1902 = vmatpush1.msra.mxu0 %v21
  %1903 = vmatprep.subr.mxu0 %v20
  %1904 = vmatpush1.msra.mxu0 %v19
  %1905 = vmatprep.subr.mxu0 %v18
  %1906 = vmatpush1.msra.mxu0 %v17
  %1907 = vmatprep.subr.mxu0 0.0
  %1908 = vmatpush2.msra.mxu0 0.0
  %1909 = vmatprep.subr.mxu0 0.0
  %1910 = vmatpush2.msra.mxu0 0.0
  %1911 = vmatprep.subr.mxu0 0.0
  %1912 = vmatpush2.msra.mxu0 0.0
  %1913 = vmatprep.subr.mxu0 0.0
  %1914 = vmatpush2.msra.mxu0 0.0
  %1915 = vmatprep.subr.mxu0 0.0
  %1916 = vmatpush2.msra.mxu0 0.0
  %1917 = vmatprep.subr.mxu0 0.0
  %1918 = vmatpush2.msra.mxu0 0.0
  %1919 = vmatprep.subr.mxu0 0.0
  %1920 = vmatpush2.msra.mxu0 0.0
  %1921 = vmatprep.subr.mxu0 0.0
  %1922 = vmatpush2.msra.mxu0 0.0
  %1923 = vmatprep.subr.mxu0 0.0
  %1924 = vmatpush2.msra.mxu0 0.0
  %1925 = vmatprep.subr.mxu0 0.0
  %1926 = vmatpush2.msra.mxu0 0.0
  %1927 = vmatprep.subr.mxu0 0.0
  %1928 = vmatpush2.msra.mxu0 0.0
  %1929 = vmatprep.subr.mxu0 0.0
  %1930 = vmatpush2.msra.mxu0 0.0
  %1931 = vmatprep.subr.mxu0 0.0
  %1932 = vmatpush2.msra.mxu0 0.0
  %1933 = vmatprep.subr.mxu0 0.0
  %1934 = vmatpush2.msra.mxu0 0.0
  %1935 = vmatprep.subr.mxu0 0.0
  %1936 = vmatpush2.msra.mxu0 0.0
  %1937 = vmatprep.subr.mxu0 0.0
  %1938 = vmatpush2.msra.mxu0 0.0
  %1939 = vmatprep.mubr.f32.mxu0 0.0
  %1940 = vmatmul.mubr.f32.gmra.mxu0 %v1873
  %v1941 = vpop.f32.mrf.mxu0
  %v1942 = vadd.f32 0.0, %v1941
  %v1943 = vpop.f32.mrf.mxu0
  %v1944 = vadd.f32 0.0, %v1943
  %1945 = vdwg.mxu0
  %v1946 = vadd.f32 %v1870, %v1942
  %v1947 = vadd.f32 %v1871, %v1944
  %v1948 = vtanh.pop %v1946
  %v1949 = vtanh.pop %v1947
  %v1950 = vmul.f32 %v1948, 0.5
  %v1951 = vmul.f32 %v1949, 0.5
  %v1952 = vadd.f32 %v1950, 0.5
  %v1953 = vadd.f32 %v1951, 0.5
  %v1954 = vmul.f32 %v1952, %v1862
  %1956 = vrot.lane.b32.xlu0 %v1949, 64
  %v1957 = vpop.permute.xlu0 %1956
  %v1959 = vmul.f32 %v1952, %v1957
  %1961 = vrot.lane.b32.xlu0 %v1959, 64
  %v1962 = vpop.permute.xlu0 %1961
  %v1964 = vadd.f32 %v1954, %v1962
  %v1965 = vtanh.pop %v1964
  %1967 = vrot.lane.b32.xlu0 %v1965, 64
  %v1968 = vpop.permute.xlu0 %1967
  %v1970 = vmul.f32 %v1953, %v1968
  %s1971 = scalar_lea.vmem %s0, 304
  %v1972 = vld [vmem:[%s1971] sm:$0xff]
  %v1973 = vld [vmem:[%s1971 + $0x8] sm:$0xff]
  %v1975 = vsel %vm35, %v1970, 0
  %1977 = vmatprep.subr.mxu0 0.0
  %1978 = vmatpush1.msra.mxu0 0.0
  %1979 = vmatprep.subr.mxu0 0.0
  %1980 = vmatpush1.msra.mxu0 0.0
  %1981 = vmatprep.subr.mxu0 0.0
  %1982 = vmatpush1.msra.mxu0 0.0
  %1983 = vmatprep.subr.mxu0 0.0
  %1984 = vmatpush1.msra.mxu0 0.0
  %1985 = vmatprep.subr.mxu0 0.0
  %1986 = vmatpush1.msra.mxu0 0.0
  %1987 = vmatprep.subr.mxu0 0.0
  %1988 = vmatpush1.msra.mxu0 0.0
  %1989 = vmatprep.subr.mxu0 0.0
  %1990 = vmatpush1.msra.mxu0 0.0
  %1991 = vmatprep.subr.mxu0 0.0
  %1992 = vmatpush1.msra.mxu0 0.0
  %1993 = vmatprep.subr.mxu0 %v32
  %1994 = vmatpush1.msra.mxu0 %v31
  %1995 = vmatprep.subr.mxu0 %v30
  %1996 = vmatpush1.msra.mxu0 %v29
  %1997 = vmatprep.subr.mxu0 %v28
  %1998 = vmatpush1.msra.mxu0 %v27
  %1999 = vmatprep.subr.mxu0 %v26
  %2000 = vmatpush1.msra.mxu0 %v25
  %2001 = vmatprep.subr.mxu0 %v24
  %2002 = vmatpush1.msra.mxu0 %v23
  %2003 = vmatprep.subr.mxu0 %v22
  %2004 = vmatpush1.msra.mxu0 %v21
  %2005 = vmatprep.subr.mxu0 %v20
  %2006 = vmatpush1.msra.mxu0 %v19
  %2007 = vmatprep.subr.mxu0 %v18
  %2008 = vmatpush1.msra.mxu0 %v17
  %2009 = vmatprep.subr.mxu0 0.0
  %2010 = vmatpush2.msra.mxu0 0.0
  %2011 = vmatprep.subr.mxu0 0.0
  %2012 = vmatpush2.msra.mxu0 0.0
  %2013 = vmatprep.subr.mxu0 0.0
  %2014 = vmatpush2.msra.mxu0 0.0
  %2015 = vmatprep.subr.mxu0 0.0
  %2016 = vmatpush2.msra.mxu0 0.0
  %2017 = vmatprep.subr.mxu0 0.0
  %2018 = vmatpush2.msra.mxu0 0.0
  %2019 = vmatprep.subr.mxu0 0.0
  %2020 = vmatpush2.msra.mxu0 0.0
  %2021 = vmatprep.subr.mxu0 0.0
  %2022 = vmatpush2.msra.mxu0 0.0
  %2023 = vmatprep.subr.mxu0 0.0
  %2024 = vmatpush2.msra.mxu0 0.0
  %2025 = vmatprep.subr.mxu0 0.0
  %2026 = vmatpush2.msra.mxu0 0.0
  %2027 = vmatprep.subr.mxu0 0.0
  %2028 = vmatpush2.msra.mxu0 0.0
  %2029 = vmatprep.subr.mxu0 0.0
  %2030 = vmatpush2.msra.mxu0 0.0
  %2031 = vmatprep.subr.mxu0 0.0
  %2032 = vmatpush2.msra.mxu0 0.0
  %2033 = vmatprep.subr.mxu0 0.0
  %2034 = vmatpush2.msra.mxu0 0.0
  %2035 = vmatprep.subr.mxu0 0.0
  %2036 = vmatpush2.msra.mxu0 0.0
  %2037 = vmatprep.subr.mxu0 0.0
  %2038 = vmatpush2.msra.mxu0 0.0
  %2039 = vmatprep.subr.mxu0 0.0
  %2040 = vmatpush2.msra.mxu0 0.0
  %2041 = vmatprep.mubr.f32.mxu0 0.0
  %2042 = vmatmul.mubr.f32.gmra.mxu0 %v1975
  %v2043 = vpop.f32.mrf.mxu0
  %v2044 = vadd.f32 0.0, %v2043
  %v2045 = vpop.f32.mrf.mxu0
  %v2046 = vadd.f32 0.0, %v2045
  %2047 = vdwg.mxu0
  %v2048 = vadd.f32 %v1972, %v2044
  %v2049 = vadd.f32 %v1973, %v2046
  %v2050 = vtanh.pop %v2048
  %v2051 = vtanh.pop %v2049
  %v2052 = vmul.f32 %v2050, 0.5
  %v2053 = vmul.f32 %v2051, 0.5
  %v2054 = vadd.f32 %v2052, 0.5
  %v2055 = vadd.f32 %v2053, 0.5
  %v2056 = vmul.f32 %v2054, %v1964
  %2058 = vrot.lane.b32.xlu0 %v2051, 64
  %v2059 = vpop.permute.xlu0 %2058
  %v2061 = vmul.f32 %v2054, %v2059
  %2063 = vrot.lane.b32.xlu0 %v2061, 64
  %v2064 = vpop.permute.xlu0 %2063
  %v2066 = vadd.f32 %v2056, %v2064
  %v2067 = vtanh.pop %v2066
  %2069 = vrot.lane.b32.xlu0 %v2067, 64
  %v2070 = vpop.permute.xlu0 %2069
  %v2072 = vmul.f32 %v2055, %v2070
  %s2073 = scalar_lea.vmem %s0, 320
  %v2074 = vld [vmem:[%s2073] sm:$0xff]
  %v2075 = vld [vmem:[%s2073 + $0x8] sm:$0xff]
  %v2077 = vsel %vm35, %v2072, 0
  %2079 = vmatprep.subr.mxu0 0.0
  %2080 = vmatpush1.msra.mxu0 0.0
  %2081 = vmatprep.subr.mxu0 0.0
  %2082 = vmatpush1.msra.mxu0 0.0
  %2083 = vmatprep.subr.mxu0 0.0
  %2084 = vmatpush1.msra.mxu0 0.0
  %2085 = vmatprep.subr.mxu0 0.0
  %2086 = vmatpush1.msra.mxu0 0.0
  %2087 = vmatprep.subr.mxu0 0.0
  %2088 = vmatpush1.msra.mxu0 0.0
  %2089 = vmatprep.subr.mxu0 0.0
  %2090 = vmatpush1.msra.mxu0 0.0
  %2091 = vmatprep.subr.mxu0 0.0
  %2092 = vmatpush1.msra.mxu0 0.0
  %2093 = vmatprep.subr.mxu0 0.0
  %2094 = vmatpush1.msra.mxu0 0.0
  %2095 = vmatprep.subr.mxu0 %v32
  %2096 = vmatpush1.msra.mxu0 %v31
  %2097 = vmatprep.subr.mxu0 %v30
  %2098 = vmatpush1.msra.mxu0 %v29
  %2099 = vmatprep.subr.mxu0 %v28
  %2100 = vmatpush1.msra.mxu0 %v27
  %2101 = vmatprep.subr.mxu0 %v26
  %2102 = vmatpush1.msra.mxu0 %v25
  %2103 = vmatprep.subr.mxu0 %v24
  %2104 = vmatpush1.msra.mxu0 %v23
  %2105 = vmatprep.subr.mxu0 %v22
  %2106 = vmatpush1.msra.mxu0 %v21
  %2107 = vmatprep.subr.mxu0 %v20
  %2108 = vmatpush1.msra.mxu0 %v19
  %2109 = vmatprep.subr.mxu0 %v18
  %2110 = vmatpush1.msra.mxu0 %v17
  %2111 = vmatprep.subr.mxu0 0.0
  %2112 = vmatpush2.msra.mxu0 0.0
  %2113 = vmatprep.subr.mxu0 0.0
  %2114 = vmatpush2.msra.mxu0 0.0
  %2115 = vmatprep.subr.mxu0 0.0
  %2116 = vmatpush2.msra.mxu0 0.0
  %2117 = vmatprep.subr.mxu0 0.0
  %2118 = vmatpush2.msra.mxu0 0.0
  %2119 = vmatprep.subr.mxu0 0.0
  %2120 = vmatpush2.msra.mxu0 0.0
  %2121 = vmatprep.subr.mxu0 0.0
  %2122 = vmatpush2.msra.mxu0 0.0
  %2123 = vmatprep.subr.mxu0 0.0
  %2124 = vmatpush2.msra.mxu0 0.0
  %2125 = vmatprep.subr.mxu0 0.0
  %2126 = vmatpush2.msra.mxu0 0.0
  %2127 = vmatprep.subr.mxu0 0.0
  %2128 = vmatpush2.msra.mxu0 0.0
  %2129 = vmatprep.subr.mxu0 0.0
  %2130 = vmatpush2.msra.mxu0 0.0
  %2131 = vmatprep.subr.mxu0 0.0
  %2132 = vmatpush2.msra.mxu0 0.0
  %2133 = vmatprep.subr.mxu0 0.0
  %2134 = vmatpush2.msra.mxu0 0.0
  %2135 = vmatprep.subr.mxu0 0.0
  %2136 = vmatpush2.msra.mxu0 0.0
  %2137 = vmatprep.subr.mxu0 0.0
  %2138 = vmatpush2.msra.mxu0 0.0
  %2139 = vmatprep.subr.mxu0 0.0
  %2140 = vmatpush2.msra.mxu0 0.0
  %2141 = vmatprep.subr.mxu0 0.0
  %2142 = vmatpush2.msra.mxu0 0.0
  %2143 = vmatprep.mubr.f32.mxu0 0.0
  %2144 = vmatmul.mubr.f32.gmra.mxu0 %v2077
  %v2145 = vpop.f32.mrf.mxu0
  %v2146 = vadd.f32 0.0, %v2145
  %v2147 = vpop.f32.mrf.mxu0
  %v2148 = vadd.f32 0.0, %v2147
  %2149 = vdwg.mxu0
  %v2150 = vadd.f32 %v2074, %v2146
  %v2151 = vadd.f32 %v2075, %v2148
  %v2152 = vtanh.pop %v2150
  %v2153 = vtanh.pop %v2151
  %v2154 = vmul.f32 %v2152, 0.5
  %v2155 = vmul.f32 %v2153, 0.5
  %v2156 = vadd.f32 %v2154, 0.5
  %v2157 = vadd.f32 %v2155, 0.5
  %v2158 = vmul.f32 %v2156, %v2066
  %2160 = vrot.lane.b32.xlu0 %v2153, 64
  %v2161 = vpop.permute.xlu0 %2160
  %v2163 = vmul.f32 %v2156, %v2161
  %2165 = vrot.lane.b32.xlu0 %v2163, 64
  %v2166 = vpop.permute.xlu0 %2165
  %v2168 = vadd.f32 %v2158, %v2166
  %v2169 = vtanh.pop %v2168
  %2171 = vrot.lane.b32.xlu0 %v2169, 64
  %v2172 = vpop.permute.xlu0 %2171
  %v2174 = vmul.f32 %v2157, %v2172
  %s2175 = scalar_lea.vmem %s0, 336
  %v2176 = vld [vmem:[%s2175] sm:$0xff]
  %v2177 = vld [vmem:[%s2175 + $0x8] sm:$0xff]
  %v2179 = vsel %vm35, %v2174, 0
  %2181 = vmatprep.subr.mxu0 0.0
  %2182 = vmatpush1.msra.mxu0 0.0
  %2183 = vmatprep.subr.mxu0 0.0
  %2184 = vmatpush1.msra.mxu0 0.0
  %2185 = vmatprep.subr.mxu0 0.0
  %2186 = vmatpush1.msra.mxu0 0.0
  %2187 = vmatprep.subr.mxu0 0.0
  %2188 = vmatpush1.msra.mxu0 0.0
  %2189 = vmatprep.subr.mxu0 0.0
  %2190 = vmatpush1.msra.mxu0 0.0
  %2191 = vmatprep.subr.mxu0 0.0
  %2192 = vmatpush1.msra.mxu0 0.0
  %2193 = vmatprep.subr.mxu0 0.0
  %2194 = vmatpush1.msra.mxu0 0.0
  %2195 = vmatprep.subr.mxu0 0.0
  %2196 = vmatpush1.msra.mxu0 0.0
  %2197 = vmatprep.subr.mxu0 %v32
  %2198 = vmatpush1.msra.mxu0 %v31
  %2199 = vmatprep.subr.mxu0 %v30
  %2200 = vmatpush1.msra.mxu0 %v29
  %2201 = vmatprep.subr.mxu0 %v28
  %2202 = vmatpush1.msra.mxu0 %v27
  %2203 = vmatprep.subr.mxu0 %v26
  %2204 = vmatpush1.msra.mxu0 %v25
  %2205 = vmatprep.subr.mxu0 %v24
  %2206 = vmatpush1.msra.mxu0 %v23
  %2207 = vmatprep.subr.mxu0 %v22
  %2208 = vmatpush1.msra.mxu0 %v21
  %2209 = vmatprep.subr.mxu0 %v20
  %2210 = vmatpush1.msra.mxu0 %v19
  %2211 = vmatprep.subr.mxu0 %v18
  %2212 = vmatpush1.msra.mxu0 %v17
  %2213 = vmatprep.subr.mxu0 0.0
  %2214 = vmatpush2.msra.mxu0 0.0
  %2215 = vmatprep.subr.mxu0 0.0
  %2216 = vmatpush2.msra.mxu0 0.0
  %2217 = vmatprep.subr.mxu0 0.0
  %2218 = vmatpush2.msra.mxu0 0.0
  %2219 = vmatprep.subr.mxu0 0.0
  %2220 = vmatpush2.msra.mxu0 0.0
  %2221 = vmatprep.subr.mxu0 0.0
  %2222 = vmatpush2.msra.mxu0 0.0
  %2223 = vmatprep.subr.mxu0 0.0
  %2224 = vmatpush2.msra.mxu0 0.0
  %2225 = vmatprep.subr.mxu0 0.0
  %2226 = vmatpush2.msra.mxu0 0.0
  %2227 = vmatprep.subr.mxu0 0.0
  %2228 = vmatpush2.msra.mxu0 0.0
  %2229 = vmatprep.subr.mxu0 0.0
  %2230 = vmatpush2.msra.mxu0 0.0
  %2231 = vmatprep.subr.mxu0 0.0
  %2232 = vmatpush2.msra.mxu0 0.0
  %2233 = vmatprep.subr.mxu0 0.0
  %2234 = vmatpush2.msra.mxu0 0.0
  %2235 = vmatprep.subr.mxu0 0.0
  %2236 = vmatpush2.msra.mxu0 0.0
  %2237 = vmatprep.subr.mxu0 0.0
  %2238 = vmatpush2.msra.mxu0 0.0
  %2239 = vmatprep.subr.mxu0 0.0
  %2240 = vmatpush2.msra.mxu0 0.0
  %2241 = vmatprep.subr.mxu0 0.0
  %2242 = vmatpush2.msra.mxu0 0.0
  %2243 = vmatprep.subr.mxu0 0.0
  %2244 = vmatpush2.msra.mxu0 0.0
  %2245 = vmatprep.mubr.f32.mxu0 0.0
  %2246 = vmatmul.mubr.f32.gmra.mxu0 %v2179
  %v2247 = vpop.f32.mrf.mxu0
  %v2248 = vadd.f32 0.0, %v2247
  %v2249 = vpop.f32.mrf.mxu0
  %v2250 = vadd.f32 0.0, %v2249
  %2251 = vdwg.mxu0
  %v2252 = vadd.f32 %v2176, %v2248
  %v2253 = vadd.f32 %v2177, %v2250
  %v2254 = vtanh.pop %v2252
  %v2255 = vtanh.pop %v2253
  %v2256 = vmul.f32 %v2254, 0.5
  %v2257 = vmul.f32 %v2255, 0.5
  %v2258 = vadd.f32 %v2256, 0.5
  %v2259 = vadd.f32 %v2257, 0.5
  %v2260 = vmul.f32 %v2258, %v2168
  %2262 = vrot.lane.b32.xlu0 %v2255, 64
  %v2263 = vpop.permute.xlu0 %2262
  %v2265 = vmul.f32 %v2258, %v2263
  %2267 = vrot.lane.b32.xlu0 %v2265, 64
  %v2268 = vpop.permute.xlu0 %2267
  %v2270 = vadd.f32 %v2260, %v2268
  %v2271 = vtanh.pop %v2270
  %2273 = vrot.lane.b32.xlu0 %v2271, 64
  %v2274 = vpop.permute.xlu0 %2273
  %v2276 = vmul.f32 %v2259, %v2274
  %s2277 = scalar_lea.vmem %s0, 352
  %v2278 = vld [vmem:[%s2277] sm:$0xff]
  %v2279 = vld [vmem:[%s2277 + $0x8] sm:$0xff]
  %v2281 = vsel %vm35, %v2276, 0
  %2283 = vmatprep.subr.mxu0 0.0
  %2284 = vmatpush1.msra.mxu0 0.0
  %2285 = vmatprep.subr.mxu0 0.0
  %2286 = vmatpush1.msra.mxu0 0.0
  %2287 = vmatprep.subr.mxu0 0.0
  %2288 = vmatpush1.msra.mxu0 0.0
  %2289 = vmatprep.subr.mxu0 0.0
  %2290 = vmatpush1.msra.mxu0 0.0
  %2291 = vmatprep.subr.mxu0 0.0
  %2292 = vmatpush1.msra.mxu0 0.0
  %2293 = vmatprep.subr.mxu0 0.0
  %2294 = vmatpush1.msra.mxu0 0.0
  %2295 = vmatprep.subr.mxu0 0.0
  %2296 = vmatpush1.msra.mxu0 0.0
  %2297 = vmatprep.subr.mxu0 0.0
  %2298 = vmatpush1.msra.mxu0 0.0
  %2299 = vmatprep.subr.mxu0 %v32
  %2300 = vmatpush1.msra.mxu0 %v31
  %2301 = vmatprep.subr.mxu0 %v30
  %2302 = vmatpush1.msra.mxu0 %v29
  %2303 = vmatprep.subr.mxu0 %v28
  %2304 = vmatpush1.msra.mxu0 %v27
  %2305 = vmatprep.subr.mxu0 %v26
  %2306 = vmatpush1.msra.mxu0 %v25
  %2307 = vmatprep.subr.mxu0 %v24
  %2308 = vmatpush1.msra.mxu0 %v23
  %2309 = vmatprep.subr.mxu0 %v22
  %2310 = vmatpush1.msra.mxu0 %v21
  %2311 = vmatprep.subr.mxu0 %v20
  %2312 = vmatpush1.msra.mxu0 %v19
  %2313 = vmatprep.subr.mxu0 %v18
  %2314 = vmatpush1.msra.mxu0 %v17
  %2315 = vmatprep.subr.mxu0 0.0
  %2316 = vmatpush2.msra.mxu0 0.0
  %2317 = vmatprep.subr.mxu0 0.0
  %2318 = vmatpush2.msra.mxu0 0.0
  %2319 = vmatprep.subr.mxu0 0.0
  %2320 = vmatpush2.msra.mxu0 0.0
  %2321 = vmatprep.subr.mxu0 0.0
  %2322 = vmatpush2.msra.mxu0 0.0
  %2323 = vmatprep.subr.mxu0 0.0
  %2324 = vmatpush2.msra.mxu0 0.0
  %2325 = vmatprep.subr.mxu0 0.0
  %2326 = vmatpush2.msra.mxu0 0.0
  %2327 = vmatprep.subr.mxu0 0.0
  %2328 = vmatpush2.msra.mxu0 0.0
  %2329 = vmatprep.subr.mxu0 0.0
  %2330 = vmatpush2.msra.mxu0 0.0
  %2331 = vmatprep.subr.mxu0 0.0
  %2332 = vmatpush2.msra.mxu0 0.0
  %2333 = vmatprep.subr.mxu0 0.0
  %2334 = vmatpush2.msra.mxu0 0.0
  %2335 = vmatprep.subr.mxu0 0.0
  %2336 = vmatpush2.msra.mxu0 0.0
  %2337 = vmatprep.subr.mxu0 0.0
  %2338 = vmatpush2.msra.mxu0 0.0
  %2339 = vmatprep.subr.mxu0 0.0
  %2340 = vmatpush2.msra.mxu0 0.0
  %2341 = vmatprep.subr.mxu0 0.0
  %2342 = vmatpush2.msra.mxu0 0.0
  %2343 = vmatprep.subr.mxu0 0.0
  %2344 = vmatpush2.msra.mxu0 0.0
  %2345 = vmatprep.subr.mxu0 0.0
  %2346 = vmatpush2.msra.mxu0 0.0
  %2347 = vmatprep.mubr.f32.mxu0 0.0
  %2348 = vmatmul.mubr.f32.gmra.mxu0 %v2281
  %v2349 = vpop.f32.mrf.mxu0
  %v2350 = vadd.f32 0.0, %v2349
  %v2351 = vpop.f32.mrf.mxu0
  %v2352 = vadd.f32 0.0, %v2351
  %2353 = vdwg.mxu0
  %v2354 = vadd.f32 %v2278, %v2350
  %v2355 = vadd.f32 %v2279, %v2352
  %v2356 = vtanh.pop %v2354
  %v2357 = vtanh.pop %v2355
  %v2358 = vmul.f32 %v2356, 0.5
  %v2359 = vmul.f32 %v2357, 0.5
  %v2360 = vadd.f32 %v2358, 0.5
  %v2361 = vadd.f32 %v2359, 0.5
  %v2362 = vmul.f32 %v2360, %v2270
  %2364 = vrot.lane.b32.xlu0 %v2357, 64
  %v2365 = vpop.permute.xlu0 %2364
  %v2367 = vmul.f32 %v2360, %v2365
  %2369 = vrot.lane.b32.xlu0 %v2367, 64
  %v2370 = vpop.permute.xlu0 %2369
  %v2372 = vadd.f32 %v2362, %v2370
  %v2373 = vtanh.pop %v2372
  %2375 = vrot.lane.b32.xlu0 %v2373, 64
  %v2376 = vpop.permute.xlu0 %2375
  %v2378 = vmul.f32 %v2361, %v2376
  %s2379 = scalar_lea.vmem %s0, 368
  %v2380 = vld [vmem:[%s2379] sm:$0xff]
  %v2381 = vld [vmem:[%s2379 + $0x8] sm:$0xff]
  %v2383 = vsel %vm35, %v2378, 0
  %2385 = vmatprep.subr.mxu0 0.0
  %2386 = vmatpush1.msra.mxu0 0.0
  %2387 = vmatprep.subr.mxu0 0.0
  %2388 = vmatpush1.msra.mxu0 0.0
  %2389 = vmatprep.subr.mxu0 0.0
  %2390 = vmatpush1.msra.mxu0 0.0
  %2391 = vmatprep.subr.mxu0 0.0
  %2392 = vmatpush1.msra.mxu0 0.0
  %2393 = vmatprep.subr.mxu0 0.0
  %2394 = vmatpush1.msra.mxu0 0.0
  %2395 = vmatprep.subr.mxu0 0.0
  %2396 = vmatpush1.msra.mxu0 0.0
  %2397 = vmatprep.subr.mxu0 0.0
  %2398 = vmatpush1.msra.mxu0 0.0
  %2399 = vmatprep.subr.mxu0 0.0
  %2400 = vmatpush1.msra.mxu0 0.0
  %2401 = vmatprep.subr.mxu0 %v32
  %2402 = vmatpush1.msra.mxu0 %v31
  %2403 = vmatprep.subr.mxu0 %v30
  %2404 = vmatpush1.msra.mxu0 %v29
  %2405 = vmatprep.subr.mxu0 %v28
  %2406 = vmatpush1.msra.mxu0 %v27
  %2407 = vmatprep.subr.mxu0 %v26
  %2408 = vmatpush1.msra.mxu0 %v25
  %2409 = vmatprep.subr.mxu0 %v24
  %2410 = vmatpush1.msra.mxu0 %v23
  %2411 = vmatprep.subr.mxu0 %v22
  %2412 = vmatpush1.msra.mxu0 %v21
  %2413 = vmatprep.subr.mxu0 %v20
  %2414 = vmatpush1.msra.mxu0 %v19
  %2415 = vmatprep.subr.mxu0 %v18
  %2416 = vmatpush1.msra.mxu0 %v17
  %2417 = vmatprep.subr.mxu0 0.0
  %2418 = vmatpush2.msra.mxu0 0.0
  %2419 = vmatprep.subr.mxu0 0.0
  %2420 = vmatpush2.msra.mxu0 0.0
  %2421 = vmatprep.subr.mxu0 0.0
  %2422 = vmatpush2.msra.mxu0 0.0
  %2423 = vmatprep.subr.mxu0 0.0
  %2424 = vmatpush2.msra.mxu0 0.0
  %2425 = vmatprep.subr.mxu0 0.0
  %2426 = vmatpush2.msra.mxu0 0.0
  %2427 = vmatprep.subr.mxu0 0.0
  %2428 = vmatpush2.msra.mxu0 0.0
  %2429 = vmatprep.subr.mxu0 0.0
  %2430 = vmatpush2.msra.mxu0 0.0
  %2431 = vmatprep.subr.mxu0 0.0
  %2432 = vmatpush2.msra.mxu0 0.0
  %2433 = vmatprep.subr.mxu0 0.0
  %2434 = vmatpush2.msra.mxu0 0.0
  %2435 = vmatprep.subr.mxu0 0.0
  %2436 = vmatpush2.msra.mxu0 0.0
  %2437 = vmatprep.subr.mxu0 0.0
  %2438 = vmatpush2.msra.mxu0 0.0
  %2439 = vmatprep.subr.mxu0 0.0
  %2440 = vmatpush2.msra.mxu0 0.0
  %2441 = vmatprep.subr.mxu0 0.0
  %2442 = vmatpush2.msra.mxu0 0.0
  %2443 = vmatprep.subr.mxu0 0.0
  %2444 = vmatpush2.msra.mxu0 0.0
  %2445 = vmatprep.subr.mxu0 0.0
  %2446 = vmatpush2.msra.mxu0 0.0
  %2447 = vmatprep.subr.mxu0 0.0
  %2448 = vmatpush2.msra.mxu0 0.0
  %2449 = vmatprep.mubr.f32.mxu0 0.0
  %2450 = vmatmul.mubr.f32.gmra.mxu0 %v2383
  %v2451 = vpop.f32.mrf.mxu0
  %v2452 = vadd.f32 0.0, %v2451
  %v2453 = vpop.f32.mrf.mxu0
  %v2454 = vadd.f32 0.0, %v2453
  %2455 = vdwg.mxu0
  %v2456 = vadd.f32 %v2380, %v2452
  %v2457 = vadd.f32 %v2381, %v2454
  %v2458 = vtanh.pop %v2456
  %v2459 = vtanh.pop %v2457
  %v2460 = vmul.f32 %v2458, 0.5
  %v2461 = vmul.f32 %v2459, 0.5
  %v2462 = vadd.f32 %v2460, 0.5
  %v2463 = vadd.f32 %v2461, 0.5
  %v2464 = vmul.f32 %v2462, %v2372
  %2466 = vrot.lane.b32.xlu0 %v2459, 64
  %v2467 = vpop.permute.xlu0 %2466
  %v2469 = vmul.f32 %v2462, %v2467
  %2471 = vrot.lane.b32.xlu0 %v2469, 64
  %v2472 = vpop.permute.xlu0 %2471
  %v2474 = vadd.f32 %v2464, %v2472
  %v2475 = vtanh.pop %v2474
  %2477 = vrot.lane.b32.xlu0 %v2475, 64
  %v2478 = vpop.permute.xlu0 %2477
  %v2480 = vmul.f32 %v2463, %v2478
  %s2481 = scalar_lea.vmem %s0, 384
  %v2482 = vld [vmem:[%s2481] sm:$0xff]
  %v2483 = vld [vmem:[%s2481 + $0x8] sm:$0xff]
  %v2485 = vsel %vm35, %v2480, 0
  %2487 = vmatprep.subr.mxu0 0.0
  %2488 = vmatpush1.msra.mxu0 0.0
  %2489 = vmatprep.subr.mxu0 0.0
  %2490 = vmatpush1.msra.mxu0 0.0
  %2491 = vmatprep.subr.mxu0 0.0
  %2492 = vmatpush1.msra.mxu0 0.0
  %2493 = vmatprep.subr.mxu0 0.0
  %2494 = vmatpush1.msra.mxu0 0.0
  %2495 = vmatprep.subr.mxu0 0.0
  %2496 = vmatpush1.msra.mxu0 0.0
  %2497 = vmatprep.subr.mxu0 0.0
  %2498 = vmatpush1.msra.mxu0 0.0
  %2499 = vmatprep.subr.mxu0 0.0
  %2500 = vmatpush1.msra.mxu0 0.0
  %2501 = vmatprep.subr.mxu0 0.0
  %2502 = vmatpush1.msra.mxu0 0.0
  %2503 = vmatprep.subr.mxu0 %v32
  %2504 = vmatpush1.msra.mxu0 %v31
  %2505 = vmatprep.subr.mxu0 %v30
  %2506 = vmatpush1.msra.mxu0 %v29
  %2507 = vmatprep.subr.mxu0 %v28
  %2508 = vmatpush1.msra.mxu0 %v27
  %2509 = vmatprep.subr.mxu0 %v26
  %2510 = vmatpush1.msra.mxu0 %v25
  %2511 = vmatprep.subr.mxu0 %v24
  %2512 = vmatpush1.msra.mxu0 %v23
  %2513 = vmatprep.subr.mxu0 %v22
  %2514 = vmatpush1.msra.mxu0 %v21
  %2515 = vmatprep.subr.mxu0 %v20
  %2516 = vmatpush1.msra.mxu0 %v19
  %2517 = vmatprep.subr.mxu0 %v18
  %2518 = vmatpush1.msra.mxu0 %v17
  %2519 = vmatprep.subr.mxu0 0.0
  %2520 = vmatpush2.msra.mxu0 0.0
  %2521 = vmatprep.subr.mxu0 0.0
  %2522 = vmatpush2.msra.mxu0 0.0
  %2523 = vmatprep.subr.mxu0 0.0
  %2524 = vmatpush2.msra.mxu0 0.0
  %2525 = vmatprep.subr.mxu0 0.0
  %2526 = vmatpush2.msra.mxu0 0.0
  %2527 = vmatprep.subr.mxu0 0.0
  %2528 = vmatpush2.msra.mxu0 0.0
  %2529 = vmatprep.subr.mxu0 0.0
  %2530 = vmatpush2.msra.mxu0 0.0
  %2531 = vmatprep.subr.mxu0 0.0
  %2532 = vmatpush2.msra.mxu0 0.0
  %2533 = vmatprep.subr.mxu0 0.0
  %2534 = vmatpush2.msra.mxu0 0.0
  %2535 = vmatprep.subr.mxu0 0.0
  %2536 = vmatpush2.msra.mxu0 0.0
  %2537 = vmatprep.subr.mxu0 0.0
  %2538 = vmatpush2.msra.mxu0 0.0
  %2539 = vmatprep.subr.mxu0 0.0
  %2540 = vmatpush2.msra.mxu0 0.0
  %2541 = vmatprep.subr.mxu0 0.0
  %2542 = vmatpush2.msra.mxu0 0.0
  %2543 = vmatprep.subr.mxu0 0.0
  %2544 = vmatpush2.msra.mxu0 0.0
  %2545 = vmatprep.subr.mxu0 0.0
  %2546 = vmatpush2.msra.mxu0 0.0
  %2547 = vmatprep.subr.mxu0 0.0
  %2548 = vmatpush2.msra.mxu0 0.0
  %2549 = vmatprep.subr.mxu0 0.0
  %2550 = vmatpush2.msra.mxu0 0.0
  %2551 = vmatprep.mubr.f32.mxu0 0.0
  %2552 = vmatmul.mubr.f32.gmra.mxu0 %v2485
  %v2553 = vpop.f32.mrf.mxu0
  %v2554 = vadd.f32 0.0, %v2553
  %v2555 = vpop.f32.mrf.mxu0
  %v2556 = vadd.f32 0.0, %v2555
  %2557 = vdwg.mxu0
  %v2558 = vadd.f32 %v2482, %v2554
  %v2559 = vadd.f32 %v2483, %v2556
  %v2560 = vtanh.pop %v2558
  %v2561 = vtanh.pop %v2559
  %v2562 = vmul.f32 %v2560, 0.5
  %v2563 = vmul.f32 %v2561, 0.5
  %v2564 = vadd.f32 %v2562, 0.5
  %v2565 = vadd.f32 %v2563, 0.5
  %v2566 = vmul.f32 %v2564, %v2474
  %2568 = vrot.lane.b32.xlu0 %v2561, 64
  %v2569 = vpop.permute.xlu0 %2568
  %v2571 = vmul.f32 %v2564, %v2569
  %2573 = vrot.lane.b32.xlu0 %v2571, 64
  %v2574 = vpop.permute.xlu0 %2573
  %v2576 = vadd.f32 %v2566, %v2574
  %v2577 = vtanh.pop %v2576
  %2579 = vrot.lane.b32.xlu0 %v2577, 64
  %v2580 = vpop.permute.xlu0 %2579
  %v2582 = vmul.f32 %v2565, %v2580
  %s2583 = scalar_lea.vmem %s0, 400
  %v2584 = vld [vmem:[%s2583] sm:$0xff]
  %v2585 = vld [vmem:[%s2583 + $0x8] sm:$0xff]
  %v2587 = vsel %vm35, %v2582, 0
  %2589 = vmatprep.subr.mxu0 0.0
  %2590 = vmatpush1.msra.mxu0 0.0
  %2591 = vmatprep.subr.mxu0 0.0
  %2592 = vmatpush1.msra.mxu0 0.0
  %2593 = vmatprep.subr.mxu0 0.0
  %2594 = vmatpush1.msra.mxu0 0.0
  %2595 = vmatprep.subr.mxu0 0.0
  %2596 = vmatpush1.msra.mxu0 0.0
  %2597 = vmatprep.subr.mxu0 0.0
  %2598 = vmatpush1.msra.mxu0 0.0
  %2599 = vmatprep.subr.mxu0 0.0
  %2600 = vmatpush1.msra.mxu0 0.0
  %2601 = vmatprep.subr.mxu0 0.0
  %2602 = vmatpush1.msra.mxu0 0.0
  %2603 = vmatprep.subr.mxu0 0.0
  %2604 = vmatpush1.msra.mxu0 0.0
  %2605 = vmatprep.subr.mxu0 %v32
  %2606 = vmatpush1.msra.mxu0 %v31
  %2607 = vmatprep.subr.mxu0 %v30
  %2608 = vmatpush1.msra.mxu0 %v29
  %2609 = vmatprep.subr.mxu0 %v28
  %2610 = vmatpush1.msra.mxu0 %v27
  %2611 = vmatprep.subr.mxu0 %v26
  %2612 = vmatpush1.msra.mxu0 %v25
  %2613 = vmatprep.subr.mxu0 %v24
  %2614 = vmatpush1.msra.mxu0 %v23
  %2615 = vmatprep.subr.mxu0 %v22
  %2616 = vmatpush1.msra.mxu0 %v21
  %2617 = vmatprep.subr.mxu0 %v20
  %2618 = vmatpush1.msra.mxu0 %v19
  %2619 = vmatprep.subr.mxu0 %v18
  %2620 = vmatpush1.msra.mxu0 %v17
  %2621 = vmatprep.subr.mxu0 0.0
  %2622 = vmatpush2.msra.mxu0 0.0
  %2623 = vmatprep.subr.mxu0 0.0
  %2624 = vmatpush2.msra.mxu0 0.0
  %2625 = vmatprep.subr.mxu0 0.0
  %2626 = vmatpush2.msra.mxu0 0.0
  %2627 = vmatprep.subr.mxu0 0.0
  %2628 = vmatpush2.msra.mxu0 0.0
  %2629 = vmatprep.subr.mxu0 0.0
  %2630 = vmatpush2.msra.mxu0 0.0
  %2631 = vmatprep.subr.mxu0 0.0
  %2632 = vmatpush2.msra.mxu0 0.0
  %2633 = vmatprep.subr.mxu0 0.0
  %2634 = vmatpush2.msra.mxu0 0.0
  %2635 = vmatprep.subr.mxu0 0.0
  %2636 = vmatpush2.msra.mxu0 0.0
  %2637 = vmatprep.subr.mxu0 0.0
  %2638 = vmatpush2.msra.mxu0 0.0
  %2639 = vmatprep.subr.mxu0 0.0
  %2640 = vmatpush2.msra.mxu0 0.0
  %2641 = vmatprep.subr.mxu0 0.0
  %2642 = vmatpush2.msra.mxu0 0.0
  %2643 = vmatprep.subr.mxu0 0.0
  %2644 = vmatpush2.msra.mxu0 0.0
  %2645 = vmatprep.subr.mxu0 0.0
  %2646 = vmatpush2.msra.mxu0 0.0
  %2647 = vmatprep.subr.mxu0 0.0
  %2648 = vmatpush2.msra.mxu0 0.0
  %2649 = vmatprep.subr.mxu0 0.0
  %2650 = vmatpush2.msra.mxu0 0.0
  %2651 = vmatprep.subr.mxu0 0.0
  %2652 = vmatpush2.msra.mxu0 0.0
  %2653 = vmatprep.mubr.f32.mxu0 0.0
  %2654 = vmatmul.mubr.f32.gmra.mxu0 %v2587
  %v2655 = vpop.f32.mrf.mxu0
  %v2656 = vadd.f32 0.0, %v2655
  %v2657 = vpop.f32.mrf.mxu0
  %v2658 = vadd.f32 0.0, %v2657
  %2659 = vdwg.mxu0
  %v2660 = vadd.f32 %v2584, %v2656
  %v2661 = vadd.f32 %v2585, %v2658
  %v2662 = vtanh.pop %v2660
  %v2663 = vtanh.pop %v2661
  %v2664 = vmul.f32 %v2662, 0.5
  %v2665 = vmul.f32 %v2663, 0.5
  %v2666 = vadd.f32 %v2664, 0.5
  %v2667 = vadd.f32 %v2665, 0.5
  %v2668 = vmul.f32 %v2666, %v2576
  %2670 = vrot.lane.b32.xlu0 %v2663, 64
  %v2671 = vpop.permute.xlu0 %2670
  %v2673 = vmul.f32 %v2666, %v2671
  %2675 = vrot.lane.b32.xlu0 %v2673, 64
  %v2676 = vpop.permute.xlu0 %2675
  %v2678 = vadd.f32 %v2668, %v2676
  %v2679 = vtanh.pop %v2678
  %2681 = vrot.lane.b32.xlu0 %v2679, 64
  %v2682 = vpop.permute.xlu0 %2681
  %v2684 = vmul.f32 %v2667, %v2682
  %s2685 = scalar_lea.vmem %s0, 416
  %v2686 = vld [vmem:[%s2685] sm:$0xff]
  %v2687 = vld [vmem:[%s2685 + $0x8] sm:$0xff]
  %v2689 = vsel %vm35, %v2684, 0
  %2691 = vmatprep.subr.mxu0 0.0
  %2692 = vmatpush1.msra.mxu0 0.0
  %2693 = vmatprep.subr.mxu0 0.0
  %2694 = vmatpush1.msra.mxu0 0.0
  %2695 = vmatprep.subr.mxu0 0.0
  %2696 = vmatpush1.msra.mxu0 0.0
  %2697 = vmatprep.subr.mxu0 0.0
  %2698 = vmatpush1.msra.mxu0 0.0
  %2699 = vmatprep.subr.mxu0 0.0
  %2700 = vmatpush1.msra.mxu0 0.0
  %2701 = vmatprep.subr.mxu0 0.0
  %2702 = vmatpush1.msra.mxu0 0.0
  %2703 = vmatprep.subr.mxu0 0.0
  %2704 = vmatpush1.msra.mxu0 0.0
  %2705 = vmatprep.subr.mxu0 0.0
  %2706 = vmatpush1.msra.mxu0 0.0
  %2707 = vmatprep.subr.mxu0 %v32
  %2708 = vmatpush1.msra.mxu0 %v31
  %2709 = vmatprep.subr.mxu0 %v30
  %2710 = vmatpush1.msra.mxu0 %v29
  %2711 = vmatprep.subr.mxu0 %v28
  %2712 = vmatpush1.msra.mxu0 %v27
  %2713 = vmatprep.subr.mxu0 %v26
  %2714 = vmatpush1.msra.mxu0 %v25
  %2715 = vmatprep.subr.mxu0 %v24
  %2716 = vmatpush1.msra.mxu0 %v23
  %2717 = vmatprep.subr.mxu0 %v22
  %2718 = vmatpush1.msra.mxu0 %v21
  %2719 = vmatprep.subr.mxu0 %v20
  %2720 = vmatpush1.msra.mxu0 %v19
  %2721 = vmatprep.subr.mxu0 %v18
  %2722 = vmatpush1.msra.mxu0 %v17
  %2723 = vmatprep.subr.mxu0 0.0
  %2724 = vmatpush2.msra.mxu0 0.0
  %2725 = vmatprep.subr.mxu0 0.0
  %2726 = vmatpush2.msra.mxu0 0.0
  %2727 = vmatprep.subr.mxu0 0.0
  %2728 = vmatpush2.msra.mxu0 0.0
  %2729 = vmatprep.subr.mxu0 0.0
  %2730 = vmatpush2.msra.mxu0 0.0
  %2731 = vmatprep.subr.mxu0 0.0
  %2732 = vmatpush2.msra.mxu0 0.0
  %2733 = vmatprep.subr.mxu0 0.0
  %2734 = vmatpush2.msra.mxu0 0.0
  %2735 = vmatprep.subr.mxu0 0.0
  %2736 = vmatpush2.msra.mxu0 0.0
  %2737 = vmatprep.subr.mxu0 0.0
  %2738 = vmatpush2.msra.mxu0 0.0
  %2739 = vmatprep.subr.mxu0 0.0
  %2740 = vmatpush2.msra.mxu0 0.0
  %2741 = vmatprep.subr.mxu0 0.0
  %2742 = vmatpush2.msra.mxu0 0.0
  %2743 = vmatprep.subr.mxu0 0.0
  %2744 = vmatpush2.msra.mxu0 0.0
  %2745 = vmatprep.subr.mxu0 0.0
  %2746 = vmatpush2.msra.mxu0 0.0
  %2747 = vmatprep.subr.mxu0 0.0
  %2748 = vmatpush2.msra.mxu0 0.0
  %2749 = vmatprep.subr.mxu0 0.0
  %2750 = vmatpush2.msra.mxu0 0.0
  %2751 = vmatprep.subr.mxu0 0.0
  %2752 = vmatpush2.msra.mxu0 0.0
  %2753 = vmatprep.subr.mxu0 0.0
  %2754 = vmatpush2.msra.mxu0 0.0
  %2755 = vmatprep.mubr.f32.mxu0 0.0
  %2756 = vmatmul.mubr.f32.gmra.mxu0 %v2689
  %v2757 = vpop.f32.mrf.mxu0
  %v2758 = vadd.f32 0.0, %v2757
  %v2759 = vpop.f32.mrf.mxu0
  %v2760 = vadd.f32 0.0, %v2759
  %2761 = vdwg.mxu0
  %v2762 = vadd.f32 %v2686, %v2758
  %v2763 = vadd.f32 %v2687, %v2760
  %v2764 = vtanh.pop %v2762
  %v2765 = vtanh.pop %v2763
  %v2766 = vmul.f32 %v2764, 0.5
  %v2767 = vmul.f32 %v2765, 0.5
  %v2768 = vadd.f32 %v2766, 0.5
  %v2769 = vadd.f32 %v2767, 0.5
  %v2770 = vmul.f32 %v2768, %v2678
  %2772 = vrot.lane.b32.xlu0 %v2765, 64
  %v2773 = vpop.permute.xlu0 %2772
  %v2775 = vmul.f32 %v2768, %v2773
  %2777 = vrot.lane.b32.xlu0 %v2775, 64
  %v2778 = vpop.permute.xlu0 %2777
  %v2780 = vadd.f32 %v2770, %v2778
  %v2781 = vtanh.pop %v2780
  %2783 = vrot.lane.b32.xlu0 %v2781, 64
  %v2784 = vpop.permute.xlu0 %2783
  %v2786 = vmul.f32 %v2769, %v2784
  %s2787 = scalar_lea.vmem %s0, 432
  %v2788 = vld [vmem:[%s2787] sm:$0xff]
  %v2789 = vld [vmem:[%s2787 + $0x8] sm:$0xff]
  %v2791 = vsel %vm35, %v2786, 0
  %2793 = vmatprep.subr.mxu0 0.0
  %2794 = vmatpush1.msra.mxu0 0.0
  %2795 = vmatprep.subr.mxu0 0.0
  %2796 = vmatpush1.msra.mxu0 0.0
  %2797 = vmatprep.subr.mxu0 0.0
  %2798 = vmatpush1.msra.mxu0 0.0
  %2799 = vmatprep.subr.mxu0 0.0
  %2800 = vmatpush1.msra.mxu0 0.0
  %2801 = vmatprep.subr.mxu0 0.0
  %2802 = vmatpush1.msra.mxu0 0.0
  %2803 = vmatprep.subr.mxu0 0.0
  %2804 = vmatpush1.msra.mxu0 0.0
  %2805 = vmatprep.subr.mxu0 0.0
  %2806 = vmatpush1.msra.mxu0 0.0
  %2807 = vmatprep.subr.mxu0 0.0
  %2808 = vmatpush1.msra.mxu0 0.0
  %2809 = vmatprep.subr.mxu0 %v32
  %2810 = vmatpush1.msra.mxu0 %v31
  %2811 = vmatprep.subr.mxu0 %v30
  %2812 = vmatpush1.msra.mxu0 %v29
  %2813 = vmatprep.subr.mxu0 %v28
  %2814 = vmatpush1.msra.mxu0 %v27
  %2815 = vmatprep.subr.mxu0 %v26
  %2816 = vmatpush1.msra.mxu0 %v25
  %2817 = vmatprep.subr.mxu0 %v24
  %2818 = vmatpush1.msra.mxu0 %v23
  %2819 = vmatprep.subr.mxu0 %v22
  %2820 = vmatpush1.msra.mxu0 %v21
  %2821 = vmatprep.subr.mxu0 %v20
  %2822 = vmatpush1.msra.mxu0 %v19
  %2823 = vmatprep.subr.mxu0 %v18
  %2824 = vmatpush1.msra.mxu0 %v17
  %2825 = vmatprep.subr.mxu0 0.0
  %2826 = vmatpush2.msra.mxu0 0.0
  %2827 = vmatprep.subr.mxu0 0.0
  %2828 = vmatpush2.msra.mxu0 0.0
  %2829 = vmatprep.subr.mxu0 0.0
  %2830 = vmatpush2.msra.mxu0 0.0
  %2831 = vmatprep.subr.mxu0 0.0
  %2832 = vmatpush2.msra.mxu0 0.0
  %2833 = vmatprep.subr.mxu0 0.0
  %2834 = vmatpush2.msra.mxu0 0.0
  %2835 = vmatprep.subr.mxu0 0.0
  %2836 = vmatpush2.msra.mxu0 0.0
  %2837 = vmatprep.subr.mxu0 0.0
  %2838 = vmatpush2.msra.mxu0 0.0
  %2839 = vmatprep.subr.mxu0 0.0
  %2840 = vmatpush2.msra.mxu0 0.0
  %2841 = vmatprep.subr.mxu0 0.0
  %2842 = vmatpush2.msra.mxu0 0.0
  %2843 = vmatprep.subr.mxu0 0.0
  %2844 = vmatpush2.msra.mxu0 0.0
  %2845 = vmatprep.subr.mxu0 0.0
  %2846 = vmatpush2.msra.mxu0 0.0
  %2847 = vmatprep.subr.mxu0 0.0
  %2848 = vmatpush2.msra.mxu0 0.0
  %2849 = vmatprep.subr.mxu0 0.0
  %2850 = vmatpush2.msra.mxu0 0.0
  %2851 = vmatprep.subr.mxu0 0.0
  %2852 = vmatpush2.msra.mxu0 0.0
  %2853 = vmatprep.subr.mxu0 0.0
  %2854 = vmatpush2.msra.mxu0 0.0
  %2855 = vmatprep.subr.mxu0 0.0
  %2856 = vmatpush2.msra.mxu0 0.0
  %2857 = vmatprep.mubr.f32.mxu0 0.0
  %2858 = vmatmul.mubr.f32.gmra.mxu0 %v2791
  %v2859 = vpop.f32.mrf.mxu0
  %v2860 = vadd.f32 0.0, %v2859
  %v2861 = vpop.f32.mrf.mxu0
  %v2862 = vadd.f32 0.0, %v2861
  %2863 = vdwg.mxu0
  %v2864 = vadd.f32 %v2788, %v2860
  %v2865 = vadd.f32 %v2789, %v2862
  %v2866 = vtanh.pop %v2864
  %v2867 = vtanh.pop %v2865
  %v2868 = vmul.f32 %v2866, 0.5
  %v2869 = vmul.f32 %v2867, 0.5
  %v2870 = vadd.f32 %v2868, 0.5
  %v2871 = vadd.f32 %v2869, 0.5
  %v2872 = vmul.f32 %v2870, %v2780
  %2874 = vrot.lane.b32.xlu0 %v2867, 64
  %v2875 = vpop.permute.xlu0 %2874
  %v2877 = vmul.f32 %v2870, %v2875
  %2879 = vrot.lane.b32.xlu0 %v2877, 64
  %v2880 = vpop.permute.xlu0 %2879
  %v2882 = vadd.f32 %v2872, %v2880
  %v2883 = vtanh.pop %v2882
  %2885 = vrot.lane.b32.xlu0 %v2883, 64
  %v2886 = vpop.permute.xlu0 %2885
  %v2888 = vmul.f32 %v2871, %v2886
  %v2889 = vld [vmem:[%s2] sm:$0xff]
  %v2890 = vld [vmem:[%s2 + $0x8] sm:$0xff]
  %v2891 = vld [vmem:[%s2 + $0x10] sm:$0xff]
  %v2892 = vld [vmem:[%s2 + $0x18] sm:$0xff]
  %v2893 = vld [vmem:[%s2 + $0x20] sm:$0xff]
  %v2894 = vld [vmem:[%s2 + $0x28] sm:$0xff]
  %v2895 = vld [vmem:[%s2 + $0x30] sm:$0xff]
  %v2896 = vld [vmem:[%s2 + $0x38] sm:$0xff]
  %v2897 = vld [vmem:[%s3] sm:$0x1]
  %v2899 = vlaneseq
  %v2900 = vshrl.u32 %v2899, 7
  %v2901 = vsub.s32 0, %v2900
  %v2902 = vrot.slane %v2897, %v2901
  %v2905 = vsel %vm35, %v2888, 0
  %2907 = vmatprep.subr.mxu0 0.0
  %2908 = vmatpush1.msra.mxu0 0.0
  %2909 = vmatprep.subr.mxu0 0.0
  %2910 = vmatpush1.msra.mxu0 0.0
  %2911 = vmatprep.subr.mxu0 0.0
  %2912 = vmatpush1.msra.mxu0 0.0
  %2913 = vmatprep.subr.mxu0 0.0
  %2914 = vmatpush1.msra.mxu0 0.0
  %2915 = vmatprep.subr.mxu0 0.0
  %2916 = vmatpush1.msra.mxu0 0.0
  %2917 = vmatprep.subr.mxu0 0.0
  %2918 = vmatpush1.msra.mxu0 0.0
  %2919 = vmatprep.subr.mxu0 0.0
  %2920 = vmatpush1.msra.mxu0 0.0
  %2921 = vmatprep.subr.mxu0 0.0
  %2922 = vmatpush1.msra.mxu0 0.0
  %2923 = vmatprep.subr.mxu0 0.0
  %2924 = vmatpush1.msra.mxu0 %v2896
  %2925 = vmatprep.subr.mxu0 0.0
  %2926 = vmatpush1.msra.mxu0 %v2895
  %2927 = vmatprep.subr.mxu0 0.0
  %2928 = vmatpush1.msra.mxu0 %v2894
  %2929 = vmatprep.subr.mxu0 0.0
  %2930 = vmatpush1.msra.mxu0 %v2893
  %2931 = vmatprep.subr.mxu0 0.0
  %2932 = vmatpush1.msra.mxu0 %v2892
  %2933 = vmatprep.subr.mxu0 0.0
  %2934 = vmatpush1.msra.mxu0 %v2891
  %2935 = vmatprep.subr.mxu0 0.0
  %2936 = vmatpush1.msra.mxu0 %v2890
  %2937 = vmatprep.subr.mxu0 0.0
  %2938 = vmatpush1.msra.mxu0 %v2889
  %2939 = vmatprep.subr.mxu0 0.0
  %2940 = vmatpush2.msra.mxu0 0.0
  %2941 = vmatprep.subr.mxu0 0.0
  %2942 = vmatpush2.msra.mxu0 0.0
  %2943 = vmatprep.subr.mxu0 0.0
  %2944 = vmatpush2.msra.mxu0 0.0
  %2945 = vmatprep.subr.mxu0 0.0
  %2946 = vmatpush2.msra.mxu0 0.0
  %2947 = vmatprep.subr.mxu0 0.0
  %2948 = vmatpush2.msra.mxu0 0.0
  %2949 = vmatprep.subr.mxu0 0.0
  %2950 = vmatpush2.msra.mxu0 0.0
  %2951 = vmatprep.subr.mxu0 0.0
  %2952 = vmatpush2.msra.mxu0 0.0
  %2953 = vmatprep.subr.mxu0 0.0
  %2954 = vmatpush2.msra.mxu0 0.0
  %2955 = vmatprep.subr.mxu0 0.0
  %2956 = vmatpush2.msra.mxu0 0.0
  %2957 = vmatprep.subr.mxu0 0.0
  %2958 = vmatpush2.msra.mxu0 0.0
  %2959 = vmatprep.subr.mxu0 0.0
  %2960 = vmatpush2.msra.mxu0 0.0
  %2961 = vmatprep.subr.mxu0 0.0
  %2962 = vmatpush2.msra.mxu0 0.0
  %2963 = vmatprep.subr.mxu0 0.0
  %2964 = vmatpush2.msra.mxu0 0.0
  %2965 = vmatprep.subr.mxu0 0.0
  %2966 = vmatpush2.msra.mxu0 0.0
  %2967 = vmatprep.subr.mxu0 0.0
  %2968 = vmatpush2.msra.mxu0 0.0
  %2969 = vmatprep.subr.mxu0 0.0
  %2970 = vmatpush2.msra.mxu0 0.0
  %2971 = vmatprep.mubr.f32.mxu0 0.0
  %2972 = vmatmul.mubr.f32.gmra.mxu0 %v2905
  %v2973 = vpop.f32.mrf.mxu0
  %v2974 = vadd.f32 %v2902, %v2973
  %v2975 = vpop.f32.mrf.mxu0
  %2976 = vdwg.mxu0
  %2977 = vmax.xlane.f32.xlu0 %v2974
  %v2978 = vpop.xlane.xlu0 %2977
  %v2979 = vsub.f32 %v2974, %v2978
  %v2980 = vmul.f32 %v2979, 1.442695
  %v2981 = vpow.pop %v2980
  %2982 = vadd.xlane.f32.xlu0 %v2981
  %v2983 = vpop.xlane.xlu0 %2982
  %v2984 = vrcp.pop %v2983
  %v2985 = vmul.f32 %v2983, %v2984
  %v2986 = vsub.f32 2.0, %v2985
  %v2987 = vmul.f32 %v2984, %v2986
  %v2988 = vmul.f32 %v2981, %v2987
  %2989 = vst [vmem:[%s4] sm:$0xff] %v2988
  // Predicated region
  $region18: #{lstm_forward.1} parent=0 // pred_check
    _
  $region19: #{lstm_forward.1} parent=0 // pred_check_branch
    %2991 = sbr.rel (0) target = $region21
  $region20: #{lstm_forward.1} parent=0 // pred_region
    _
  $region21: #{lstm_forward.1} parent=0 // pred_fallthru
    _
  // Predicated region
  $region22: #{lstm_forward.1} parent=0 // pred_check
    _
  $region23: #{lstm_forward.1} parent=0 // pred_check_branch
    %2993 = sbr.rel (0) target = $region25
  $region24: #{lstm_forward.1} parent=0 // pred_region
    _
  $region25: #{lstm_forward.1} parent=0 // pred_fallthru
    _

</llo_original>
